<compile_context>
chip_gen: v7x
topology: tpu7x:2x2x1
jax: 0.10.0
libtpu: 0.0.40
codegen_flags: <defaults>
</compile_context>

<pallas_src>
import math

import jax
import jax.numpy as jnp
from jax import lax
from jax.experimental import pallas as pl
from jax.experimental.pallas import tpu as pltpu

# Model hyper-parameters (small, consistent with the module's __init__).
D_MODEL = 32
N_HEADS = 4
D_FF = 64
N_LAYERS = 2
D_HEAD = D_MODEL // N_HEADS
EPS = 1e-5          # nn.LayerNorm default
NEG_INF = -1e9      # additive mask value (matches original jnp.where(..., -1e9))


# ----------------------------- in-kernel helpers -----------------------------

def _layernorm(x, gamma, beta):
    # x: [R, D] f32, gamma/beta: [1, D] f32
    mu = jnp.mean(x, axis=-1, keepdims=True)
    var = jnp.mean((x - mu) ** 2, axis=-1, keepdims=True)
    inv = lax.rsqrt(var + EPS)
    return (x - mu) * inv * gamma + beta


def _softmax_rows(s):
    # s: [R, C] f32 (already includes the additive mask bias)
    m = jnp.max(s, axis=-1, keepdims=True)
    e = jnp.exp(s - m)
    denom = jnp.sum(e, axis=-1, keepdims=True)
    return e * pl.reciprocal(denom, approx=True)   # divide on the EUP slot


def _linear(x_f32, w_bf16, b_f32):
    # bf16 MXU operands, f32 accumulation; bias add in f32.
    return jnp.dot(x_f32.astype(jnp.bfloat16), w_bf16,
                   preferred_element_type=jnp.float32) + b_f32


def _attention(q, k, v, bias, wo_heads, bo):
    """Multi-head attention over flattened rows.

    q:        [Rq, D] f32 (already scaled by 1/sqrt(dk) via folded weights)
    k, v:     [Rk, D] f32
    bias:     [Rq, Rk] f32 additive mask (0 allowed / -1e9 masked, incl. cross-batch)
    wo_heads: [H, dk, D] bf16 output projection split per head, bo: [1, D] f32
    """
    acc = jnp.zeros((q.shape[0], D_MODEL), jnp.float32)
    for h in range(N_HEADS):               # static, N_HEADS = 4
        lo = h * D_HEAD
        qh = q[:, lo:lo + D_HEAD].astype(jnp.bfloat16)
        kh = k[:, lo:lo + D_HEAD].astype(jnp.bfloat16)
        vh = v[:, lo:lo + D_HEAD].astype(jnp.bfloat16)
        # scores: contract last dims of q and k (no materialized transpose)
        s = lax.dot_general(qh, kh, (((1,), (1,)), ((), ())),
                            preferred_element_type=jnp.float32)
        p = _softmax_rows(s + bias)
        oh = jnp.dot(p.astype(jnp.bfloat16), vh,
                     preferred_element_type=jnp.float32)         # [Rq, dk]
        # fold head h into the output projection: avoids lane-concat of heads
        acc = acc + jnp.dot(oh.astype(jnp.bfloat16), wo_heads[h],
                            preferred_element_type=jnp.float32)
    return acc + bo


# --------------------------------- the kernel ---------------------------------

def decoder_stack_kernel(enc_ref, dec_ref, bias_self_ref, bias_cross_ref,
                         # stacked per-layer params, leading dim = N_LAYERS
                         wqkv_s, bqkv_s, woh_s, bo_s,            # masked self-attn
                         wq_c, bq_c, wkv_c, bkv_c, woh_c, bo_c,  # cross-attn
                         w1, b1, w2, b2,                         # feed-forward
                         ln_g, ln_b,                             # layer norms [L,3,D]
                         out_ref):
    enc = enc_ref[...].astype(jnp.float32)      # [B*S, D]
    x = dec_ref[...].astype(jnp.float32)        # [B*T, D] residual stream
    bias_s = bias_self_ref[...]                 # [B*T, B*T]
    bias_c = bias_cross_ref[...]                # [B*T, B*S]

    for l in range(N_LAYERS):                   # static layer loop, all in VMEM
        gl = ln_g[l]                            # [3, D]
        bl = ln_b[l]

        # ---- q = norm_1(x + masked_self_attention(x)) ----
        qkv = _linear(x, wqkv_s[l], bqkv_s[l])              # [B*T, 3D]
        q = qkv[:, :D_MODEL]
        k = qkv[:, D_MODEL:2 * D_MODEL]
        v = qkv[:, 2 * D_MODEL:]
        sa = _attention(q, k, v, bias_s, woh_s[l], bo_s[l])
        x = _layernorm(x + sa, gl[0:1, :], bl[0:1, :])

        # ---- x = norm_2(q + cross_attention(q, enc, enc)) ----
        qc = _linear(x, wq_c[l], bq_c[l])                    # [B*T, D]
        kv = _linear(enc, wkv_c[l], bkv_c[l])                # [B*S, 2D]
        kc = kv[:, :D_MODEL]
        vc = kv[:, D_MODEL:]
        ca = _attention(qc, kc, vc, bias_c, woh_c[l], bo_c[l])
        x = _layernorm(x + ca, gl[1:2, :], bl[1:2, :])

        # ---- x = norm_3(x + ff(x)) ----
        h = jnp.maximum(_linear(x, w1[l], b1[l]), 0.0)
        ff = _linear(h, w2[l], b2[l])
        x = _layernorm(x + ff, gl[2:3, :], bl[2:3, :])

    out_ref[...] = x.astype(out_ref.dtype)


# --------------------------------- wrappers -----------------------------------

_PARAM_ORDER = ('wqkv_s', 'bqkv_s', 'woh_s', 'bo_s',
                'wq_c', 'bq_c', 'wkv_c', 'bkv_c', 'woh_c', 'bo_c',
                'w1', 'b1', 'w2', 'b2',
                'ln_g', 'ln_b')


def _fuse_layer_params(p):
    """Fuse QKV / KV, fold attention scale into Q, split Wo per head, cast to bf16."""
    scale = 1.0 / math.sqrt(D_HEAD)
    wqkv_s = jnp.concatenate([p['m_wq'] * scale, p['m_wk'], p['m_wv']], axis=1)
    bqkv_s = jnp.concatenate([p['m_bq'] * scale, p['m_bk'], p['m_bv']], axis=1)
    wkv_c = jnp.concatenate([p['c_wk'], p['c_wv']], axis=1)
    bkv_c = jnp.concatenate([p['c_bk'], p['c_bv']], axis=1)
    woh_s = p['m_wo'].reshape(N_HEADS, D_HEAD, D_MODEL)   # per-head output proj
    woh_c = p['c_wo'].reshape(N_HEADS, D_HEAD, D_MODEL)
    ln_g = jnp.stack([p['g1'][0], p['g2'][0], p['g3'][0]], axis=0)     # [3, D]
    ln_b = jnp.stack([p['be1'][0], p['be2'][0], p['be3'][0]], axis=0)  # [3, D]
    return dict(
        wqkv_s=wqkv_s.astype(jnp.bfloat16), bqkv_s=bqkv_s,
        woh_s=woh_s.astype(jnp.bfloat16), bo_s=p['m_bo'],
        wq_c=(p['c_wq'] * scale).astype(jnp.bfloat16), bq_c=p['c_bq'] * scale,
        wkv_c=wkv_c.astype(jnp.bfloat16), bkv_c=bkv_c,
        woh_c=woh_c.astype(jnp.bfloat16), bo_c=p['c_bo'],
        w1=p['f_w1'].astype(jnp.bfloat16), b1=p['f_b1'],
        w2=p['f_w2'].astype(jnp.bfloat16), b2=p['f_b2'],
        ln_g=ln_g, ln_b=ln_b,
    )


def _stack_params(layer_params):
    fused = [_fuse_layer_params(p) for p in layer_params]
    return [jnp.stack([f[name] for f in fused], axis=0) for name in _PARAM_ORDER]


def _build_attention_biases(src_mask, tgt_mask, B, S, T):
    """Additive biases that also block cross-batch attention (block-diagonal)."""
    eye_b = jnp.eye(B, dtype=jnp.float32)
    dm = jnp.broadcast_to(tgt_mask.astype(jnp.float32), (B, T, T))
    em = jnp.broadcast_to(src_mask.astype(jnp.float32), (B, T, S))
    allowed_s = jnp.einsum('pq,pij->piqj', eye_b, dm).reshape(B * T, B * T)
    allowed_c = jnp.einsum('pq,pij->piqj', eye_b, em).reshape(B * T, B * S)
    bias_s = jnp.where(allowed_s > 0, 0.0, NEG_INF).astype(jnp.float32)
    bias_c = jnp.where(allowed_c > 0, 0.0, NEG_INF).astype(jnp.float32)
    return bias_s, bias_c


@jax.jit
def transformer_decoder(enc_out, dec_out, src_mask, tgt_mask, layer_params):
    B, S, D = enc_out.shape
    _, T, _ = dec_out.shape
    enc_flat = enc_out.reshape(B * S, D)
    dec_flat = dec_out.reshape(B * T, D)
    bias_s, bias_c = _build_attention_biases(src_mask, tgt_mask, B, S, T)
    stacked = _stack_params(layer_params)
    args = [enc_flat, dec_flat, bias_s, bias_c] + stacked

    vmem = pl.BlockSpec(memory_space=pltpu.MemorySpace.VMEM)
    out_flat = pl.pallas_call(
        decoder_stack_kernel,
        out_shape=jax.ShapeDtypeStruct((B * T, D), dec_out.dtype),
        in_specs=[vmem] * len(args),
        out_specs=vmem,
        input_output_aliases={1: 0},   # dec_flat -> output (no extra HBM buffer)
    )(*args)
    return out_flat.reshape(B, T, D)


# ----------------------------- parameter creation -----------------------------

def _linear_init(key, fan_in, fan_out):
    bound = 1.0 / math.sqrt(fan_in)
    kw, kb = jax.random.split(key)
    w = jax.random.uniform(kw, (fan_in, fan_out), jnp.float32, -bound, bound)
    b = jax.random.uniform(kb, (1, fan_out), jnp.float32, -bound, bound)
    return w, b


def init_layer_params(key):
    ks = jax.random.split(key, 10)
    p = {}
    p['m_wq'], p['m_bq'] = _linear_init(ks[0], D_MODEL, D_MODEL)
    p['m_wk'], p['m_bk'] = _linear_init(ks[1], D_MODEL, D_MODEL)
    p['m_wv'], p['m_bv'] = _linear_init(ks[2], D_MODEL, D_MODEL)
    p['m_wo'], p['m_bo'] = _linear_init(ks[3], D_MODEL, D_MODEL)
    p['c_wq'], p['c_bq'] = _linear_init(ks[4], D_MODEL, D_MODEL)
    p['c_wk'], p['c_bk'] = _linear_init(ks[5], D_MODEL, D_MODEL)
    p['c_wv'], p['c_bv'] = _linear_init(ks[6], D_MODEL, D_MODEL)
    p['c_wo'], p['c_bo'] = _linear_init(ks[7], D_MODEL, D_MODEL)
    p['f_w1'], p['f_b1'] = _linear_init(ks[8], D_MODEL, D_FF)
    p['f_w2'], p['f_b2'] = _linear_init(ks[9], D_FF, D_MODEL)
    for i in (1, 2, 3):
        p[f'g{i}'] = jnp.ones((1, D_MODEL), jnp.float32)
        p[f'be{i}'] = jnp.zeros((1, D_MODEL), jnp.float32)
    return p


# ------------------------------------ main -------------------------------------

if __name__ == "__main__":
    B, SRC_LEN, TGT_LEN = 2, 8, 8

    key = jax.random.PRNGKey(0)
    k_enc, k_dec, k_par = jax.random.split(key, 3)

    enc_out = jax.random.normal(k_enc, (B, SRC_LEN, D_MODEL), jnp.float32)
    dec_out = jax.random.normal(k_dec, (B, TGT_LEN, D_MODEL), jnp.float32)

    # enc_mask: [B, 1, src_len] (all visible); dec_mask: [B, tgt_len, tgt_len] causal
    src_mask = jnp.ones((B, 1, SRC_LEN), jnp.float32)
    tgt_mask = jnp.broadcast_to(
        jnp.tril(jnp.ones((TGT_LEN, TGT_LEN), jnp.float32)), (B, TGT_LEN, TGT_LEN))

    layer_params = [init_layer_params(k) for k in jax.random.split(k_par, N_LAYERS)]

    out = transformer_decoder(enc_out, dec_out, src_mask, tgt_mask, layer_params)
    out = jax.block_until_ready(out)

    assert out.shape == (B, TGT_LEN, D_MODEL)
    assert bool(jnp.all(jnp.isfinite(out)))
    print("KERNEL_OK")
</pallas_src>

<mosaic_0001>
module attributes {stable_mosaic.version = 11 : i64} {
  func.func @decoder_stack_kernel(%arg0: memref<16x32xf32, #tpu.memory_space<vmem>>, %arg1: memref<16x32xf32, #tpu.memory_space<vmem>>, %arg2: memref<16x16xf32, #tpu.memory_space<vmem>>, %arg3: memref<16x16xf32, #tpu.memory_space<vmem>>, %arg4: memref<2x32x96xbf16, #tpu.memory_space<vmem>>, %arg5: memref<2x1x96xf32, #tpu.memory_space<vmem>>, %arg6: memref<2x4x8x32xbf16, #tpu.memory_space<vmem>>, %arg7: memref<2x1x32xf32, #tpu.memory_space<vmem>>, %arg8: memref<2x32x32xbf16, #tpu.memory_space<vmem>>, %arg9: memref<2x1x32xf32, #tpu.memory_space<vmem>>, %arg10: memref<2x32x64xbf16, #tpu.memory_space<vmem>>, %arg11: memref<2x1x64xf32, #tpu.memory_space<vmem>>, %arg12: memref<2x4x8x32xbf16, #tpu.memory_space<vmem>>, %arg13: memref<2x1x32xf32, #tpu.memory_space<vmem>>, %arg14: memref<2x32x64xbf16, #tpu.memory_space<vmem>>, %arg15: memref<2x1x64xf32, #tpu.memory_space<vmem>>, %arg16: memref<2x64x32xbf16, #tpu.memory_space<vmem>>, %arg17: memref<2x1x32xf32, #tpu.memory_space<vmem>>, %arg18: memref<2x3x32xf32, #tpu.memory_space<vmem>>, %arg19: memref<2x3x32xf32, #tpu.memory_space<vmem>>, %arg20: memref<16x32xf32, #tpu.memory_space<vmem>>) attributes {dimension_semantics = [], scalar_prefetch = 0 : i64, scratch_operands = 0 : i64, tpu.core_type = #tpu.core_type<tc>} {
    %c0 = arith.constant 0 : index
    %c0_0 = arith.constant 0 : index
    %0 = vector.load %arg0[%c0, %c0_0] : memref<16x32xf32, #tpu.memory_space<vmem>>, vector<16x32xf32>
    %c0_1 = arith.constant 0 : index
    %c0_2 = arith.constant 0 : index
    %1 = vector.load %arg1[%c0_1, %c0_2] : memref<16x32xf32, #tpu.memory_space<vmem>>, vector<16x32xf32>
    %c0_3 = arith.constant 0 : index
    %c0_4 = arith.constant 0 : index
    %2 = vector.load %arg2[%c0_3, %c0_4] : memref<16x16xf32, #tpu.memory_space<vmem>>, vector<16x16xf32>
    %c0_5 = arith.constant 0 : index
    %c0_6 = arith.constant 0 : index
    %3 = vector.load %arg3[%c0_5, %c0_6] : memref<16x16xf32, #tpu.memory_space<vmem>>, vector<16x16xf32>
    %c0_7 = arith.constant 0 : index
    %c0_8 = arith.constant 0 : index
    %c0_9 = arith.constant 0 : index
    %4 = vector.load %arg18[%c0_7, %c0_8, %c0_9] : memref<2x3x32xf32, #tpu.memory_space<vmem>>, vector<1x3x32xf32>
    %5 = vector.shape_cast %4 : vector<1x3x32xf32> to vector<3x32xf32>
    %c0_10 = arith.constant 0 : index
    %c0_11 = arith.constant 0 : index
    %c0_12 = arith.constant 0 : index
    %6 = vector.load %arg19[%c0_10, %c0_11, %c0_12] : memref<2x3x32xf32, #tpu.memory_space<vmem>>, vector<1x3x32xf32>
    %7 = vector.shape_cast %6 : vector<1x3x32xf32> to vector<3x32xf32>
    %c0_13 = arith.constant 0 : index
    %c0_14 = arith.constant 0 : index
    %c0_15 = arith.constant 0 : index
    %8 = vector.load %arg4[%c0_13, %c0_14, %c0_15] : memref<2x32x96xbf16, #tpu.memory_space<vmem>>, vector<1x32x96xbf16>
    %9 = vector.shape_cast %8 : vector<1x32x96xbf16> to vector<32x96xbf16>
    %c0_16 = arith.constant 0 : index
    %c0_17 = arith.constant 0 : index
    %c0_18 = arith.constant 0 : index
    %10 = vector.load %arg5[%c0_16, %c0_17, %c0_18] : memref<2x1x96xf32, #tpu.memory_space<vmem>>, vector<1x1x96xf32>
    %11 = vector.shape_cast %10 : vector<1x1x96xf32> to vector<1x96xf32>
    %12 = arith.truncf %1 : vector<16x32xf32> to vector<16x32xbf16>
    %cst = arith.constant dense<0.000000e+00> : vector<16x96xf32>
    %13 = tpu.matmul %12, %9, %cst {dimension_numbers = #tpu.dot_dimension_numbers<[1], [0], [0], [1], [0, 0, 1, 1], [], []>} : vector<16x32xbf16>, vector<32x96xbf16>, vector<16x96xf32> -> vector<16x96xf32>
    %14 = vector.broadcast %11 : vector<1x96xf32> to vector<16x96xf32>
    %15 = arith.addf %13, %14 : vector<16x96xf32>
    %16 = vector.extract_strided_slice %15 {offsets = [0, 0], sizes = [16, 32], strides = [1, 1]} : vector<16x96xf32> to vector<16x32xf32>
    %17 = vector.extract_strided_slice %15 {offsets = [0, 32], sizes = [16, 32], strides = [1, 1]} : vector<16x96xf32> to vector<16x32xf32>
    %18 = vector.extract_strided_slice %15 {offsets = [0, 64], sizes = [16, 32], strides = [1, 1]} : vector<16x96xf32> to vector<16x32xf32>
    %c0_19 = arith.constant 0 : index
    %c0_20 = arith.constant 0 : index
    %c0_21 = arith.constant 0 : index
    %c0_22 = arith.constant 0 : index
    %19 = vector.load %arg6[%c0_19, %c0_20, %c0_21, %c0_22] : memref<2x4x8x32xbf16, #tpu.memory_space<vmem>>, vector<1x4x8x32xbf16>
    %20 = vector.shape_cast %19 : vector<1x4x8x32xbf16> to vector<4x8x32xbf16>
    %c0_23 = arith.constant 0 : index
    %c0_24 = arith.constant 0 : index
    %c0_25 = arith.constant 0 : index
    %21 = vector.load %arg7[%c0_23, %c0_24, %c0_25] : memref<2x1x32xf32, #tpu.memory_space<vmem>>, vector<1x1x32xf32>
    %22 = vector.shape_cast %21 : vector<1x1x32xf32> to vector<1x32xf32>
    %cst_26 = arith.constant 0.000000e+00 : f32
    %23 = vector.broadcast %cst_26 : f32 to vector<16x32xf32>
    %24 = vector.extract_strided_slice %16 {offsets = [0, 0], sizes = [16, 8], strides = [1, 1]} : vector<16x32xf32> to vector<16x8xf32>
    %25 = arith.truncf %24 : vector<16x8xf32> to vector<16x8xbf16>
    %26 = vector.extract_strided_slice %17 {offsets = [0, 0], sizes = [16, 8], strides = [1, 1]} : vector<16x32xf32> to vector<16x8xf32>
    %27 = arith.truncf %26 : vector<16x8xf32> to vector<16x8xbf16>
    %28 = vector.extract_strided_slice %18 {offsets = [0, 0], sizes = [16, 8], strides = [1, 1]} : vector<16x32xf32> to vector<16x8xf32>
    %29 = arith.truncf %28 : vector<16x8xf32> to vector<16x8xbf16>
    %cst_27 = arith.constant dense<0.000000e+00> : vector<16x16xf32>
    %30 = tpu.matmul %25, %27, %cst_27 {dimension_numbers = #tpu.dot_dimension_numbers<[1], [1], [0], [0], [0, 0, 1, 0], [], []>} : vector<16x8xbf16>, vector<16x8xbf16>, vector<16x16xf32> -> vector<16x16xf32>
    %31 = arith.addf %30, %2 : vector<16x16xf32>
    %cst_28 = arith.constant dense<0xFF800000> : vector<16xf32>
    %32 = vector.multi_reduction <maximumf>, %31, %cst_28 [1] : vector<16x16xf32> to vector<16xf32>
    %33 = vector.shape_cast %32 : vector<16xf32> to vector<16x1xf32>
    %34 = vector.broadcast %33 : vector<16x1xf32> to vector<16x16xf32>
    %35 = arith.subf %31, %34 : vector<16x16xf32>
    %36 = math.exp %35 : vector<16x16xf32>
    %cst_29 = arith.constant dense<0.000000e+00> : vector<16xf32>
    %37 = vector.multi_reduction <add>, %36, %cst_29 [1] : vector<16x16xf32> to vector<16xf32>
    %38 = vector.shape_cast %37 : vector<16xf32> to vector<16x1xf32>
    %39 = tpu.reciprocal %38 {approx = true} : vector<16x1xf32> -> vector<16x1xf32>
    %40 = vector.broadcast %39 : vector<16x1xf32> to vector<16x16xf32>
    %41 = arith.mulf %36, %40 : vector<16x16xf32>
    %42 = arith.truncf %41 : vector<16x16xf32> to vector<16x16xbf16>
    %cst_30 = arith.constant dense<0.000000e+00> : vector<16x8xf32>
    %43 = tpu.matmul %42, %29, %cst_30 {dimension_numbers = #tpu.dot_dimension_numbers<[1], [0], [0], [1], [0, 0, 1, 1], [], []>} : vector<16x16xbf16>, vector<16x8xbf16>, vector<16x8xf32> -> vector<16x8xf32>
    %44 = arith.truncf %43 : vector<16x8xf32> to vector<16x8xbf16>
    %45 = vector.extract_strided_slice %20 {offsets = [0, 0, 0], sizes = [1, 8, 32], strides = [1, 1, 1]} : vector<4x8x32xbf16> to vector<1x8x32xbf16>
    %46 = vector.shape_cast %45 : vector<1x8x32xbf16> to vector<8x32xbf16>
    %cst_31 = arith.constant dense<0.000000e+00> : vector<16x32xf32>
    %47 = tpu.matmul %44, %46, %cst_31 {dimension_numbers = #tpu.dot_dimension_numbers<[1], [0], [0], [1], [0, 0, 1, 1], [], []>} : vector<16x8xbf16>, vector<8x32xbf16>, vector<16x32xf32> -> vector<16x32xf32>
    %48 = arith.addf %23, %47 : vector<16x32xf32>
    %49 = vector.extract_strided_slice %16 {offsets = [0, 8], sizes = [16, 8], strides = [1, 1]} : vector<16x32xf32> to vector<16x8xf32>
    %50 = arith.truncf %49 : vector<16x8xf32> to vector<16x8xbf16>
    %51 = vector.extract_strided_slice %17 {offsets = [0, 8], sizes = [16, 8], strides = [1, 1]} : vector<16x32xf32> to vector<16x8xf32>
    %52 = arith.truncf %51 : vector<16x8xf32> to vector<16x8xbf16>
    %53 = vector.extract_strided_slice %18 {offsets = [0, 8], sizes = [16, 8], strides = [1, 1]} : vector<16x32xf32> to vector<16x8xf32>
    %54 = arith.truncf %53 : vector<16x8xf32> to vector<16x8xbf16>
    %cst_32 = arith.constant dense<0.000000e+00> : vector<16x16xf32>
    %55 = tpu.matmul %50, %52, %cst_32 {dimension_numbers = #tpu.dot_dimension_numbers<[1], [1], [0], [0], [0, 0, 1, 0], [], []>} : vector<16x8xbf16>, vector<16x8xbf16>, vector<16x16xf32> -> vector<16x16xf32>
    %56 = arith.addf %55, %2 : vector<16x16xf32>
    %cst_33 = arith.constant dense<0xFF800000> : vector<16xf32>
    %57 = vector.multi_reduction <maximumf>, %56, %cst_33 [1] : vector<16x16xf32> to vector<16xf32>
    %58 = vector.shape_cast %57 : vector<16xf32> to vector<16x1xf32>
    %59 = vector.broadcast %58 : vector<16x1xf32> to vector<16x16xf32>
    %60 = arith.subf %56, %59 : vector<16x16xf32>
    %61 = math.exp %60 : vector<16x16xf32>
    %cst_34 = arith.constant dense<0.000000e+00> : vector<16xf32>
    %62 = vector.multi_reduction <add>, %61, %cst_34 [1] : vector<16x16xf32> to vector<16xf32>
    %63 = vector.shape_cast %62 : vector<16xf32> to vector<16x1xf32>
    %64 = tpu.reciprocal %63 {approx = true} : vector<16x1xf32> -> vector<16x1xf32>
    %65 = vector.broadcast %64 : vector<16x1xf32> to vector<16x16xf32>
    %66 = arith.mulf %61, %65 : vector<16x16xf32>
    %67 = arith.truncf %66 : vector<16x16xf32> to vector<16x16xbf16>
    %cst_35 = arith.constant dense<0.000000e+00> : vector<16x8xf32>
    %68 = tpu.matmul %67, %54, %cst_35 {dimension_numbers = #tpu.dot_dimension_numbers<[1], [0], [0], [1], [0, 0, 1, 1], [], []>} : vector<16x16xbf16>, vector<16x8xbf16>, vector<16x8xf32> -> vector<16x8xf32>
    %69 = arith.truncf %68 : vector<16x8xf32> to vector<16x8xbf16>
    %70 = vector.extract_strided_slice %20 {offsets = [1, 0, 0], sizes = [1, 8, 32], strides = [1, 1, 1]} : vector<4x8x32xbf16> to vector<1x8x32xbf16>
    %71 = vector.shape_cast %70 : vector<1x8x32xbf16> to vector<8x32xbf16>
    %cst_36 = arith.constant dense<0.000000e+00> : vector<16x32xf32>
    %72 = tpu.matmul %69, %71, %cst_36 {dimension_numbers = #tpu.dot_dimension_numbers<[1], [0], [0], [1], [0, 0, 1, 1], [], []>} : vector<16x8xbf16>, vector<8x32xbf16>, vector<16x32xf32> -> vector<16x32xf32>
    %73 = arith.addf %48, %72 : vector<16x32xf32>
    %74 = vector.extract_strided_slice %16 {offsets = [0, 16], sizes = [16, 8], strides = [1, 1]} : vector<16x32xf32> to vector<16x8xf32>
    %75 = arith.truncf %74 : vector<16x8xf32> to vector<16x8xbf16>
    %76 = vector.extract_strided_slice %17 {offsets = [0, 16], sizes = [16, 8], strides = [1, 1]} : vector<16x32xf32> to vector<16x8xf32>
    %77 = arith.truncf %76 : vector<16x8xf32> to vector<16x8xbf16>
    %78 = vector.extract_strided_slice %18 {offsets = [0, 16], sizes = [16, 8], strides = [1, 1]} : vector<16x32xf32> to vector<16x8xf32>
    %79 = arith.truncf %78 : vector<16x8xf32> to vector<16x8xbf16>
    %cst_37 = arith.constant dense<0.000000e+00> : vector<16x16xf32>
    %80 = tpu.matmul %75, %77, %cst_37 {dimension_numbers = #tpu.dot_dimension_numbers<[1], [1], [0], [0], [0, 0, 1, 0], [], []>} : vector<16x8xbf16>, vector<16x8xbf16>, vector<16x16xf32> -> vector<16x16xf32>
    %81 = arith.addf %80, %2 : vector<16x16xf32>
    %cst_38 = arith.constant dense<0xFF800000> : vector<16xf32>
    %82 = vector.multi_reduction <maximumf>, %81, %cst_38 [1] : vector<16x16xf32> to vector<16xf32>
    %83 = vector.shape_cast %82 : vector<16xf32> to vector<16x1xf32>
    %84 = vector.broadcast %83 : vector<16x1xf32> to vector<16x16xf32>
    %85 = arith.subf %81, %84 : vector<16x16xf32>
    %86 = math.exp %85 : vector<16x16xf32>
    %cst_39 = arith.constant dense<0.000000e+00> : vector<16xf32>
    %87 = vector.multi_reduction <add>, %86, %cst_39 [1] : vector<16x16xf32> to vector<16xf32>
    %88 = vector.shape_cast %87 : vector<16xf32> to vector<16x1xf32>
    %89 = tpu.reciprocal %88 {approx = true} : vector<16x1xf32> -> vector<16x1xf32>
    %90 = vector.broadcast %89 : vector<16x1xf32> to vector<16x16xf32>
    %91 = arith.mulf %86, %90 : vector<16x16xf32>
    %92 = arith.truncf %91 : vector<16x16xf32> to vector<16x16xbf16>
    %cst_40 = arith.constant dense<0.000000e+00> : vector<16x8xf32>
    %93 = tpu.matmul %92, %79, %cst_40 {dimension_numbers = #tpu.dot_dimension_numbers<[1], [0], [0], [1], [0, 0, 1, 1], [], []>} : vector<16x16xbf16>, vector<16x8xbf16>, vector<16x8xf32> -> vector<16x8xf32>
    %94 = arith.truncf %93 : vector<16x8xf32> to vector<16x8xbf16>
    %95 = vector.extract_strided_slice %20 {offsets = [2, 0, 0], sizes = [1, 8, 32], strides = [1, 1, 1]} : vector<4x8x32xbf16> to vector<1x8x32xbf16>
    %96 = vector.shape_cast %95 : vector<1x8x32xbf16> to vector<8x32xbf16>
    %cst_41 = arith.constant dense<0.000000e+00> : vector<16x32xf32>
    %97 = tpu.matmul %94, %96, %cst_41 {dimension_numbers = #tpu.dot_dimension_numbers<[1], [0], [0], [1], [0, 0, 1, 1], [], []>} : vector<16x8xbf16>, vector<8x32xbf16>, vector<16x32xf32> -> vector<16x32xf32>
    %98 = arith.addf %73, %97 : vector<16x32xf32>
    %99 = vector.extract_strided_slice %16 {offsets = [0, 24], sizes = [16, 8], strides = [1, 1]} : vector<16x32xf32> to vector<16x8xf32>
    %100 = arith.truncf %99 : vector<16x8xf32> to vector<16x8xbf16>
    %101 = vector.extract_strided_slice %17 {offsets = [0, 24], sizes = [16, 8], strides = [1, 1]} : vector<16x32xf32> to vector<16x8xf32>
    %102 = arith.truncf %101 : vector<16x8xf32> to vector<16x8xbf16>
    %103 = vector.extract_strided_slice %18 {offsets = [0, 24], sizes = [16, 8], strides = [1, 1]} : vector<16x32xf32> to vector<16x8xf32>
    %104 = arith.truncf %103 : vector<16x8xf32> to vector<16x8xbf16>
    %cst_42 = arith.constant dense<0.000000e+00> : vector<16x16xf32>
    %105 = tpu.matmul %100, %102, %cst_42 {dimension_numbers = #tpu.dot_dimension_numbers<[1], [1], [0], [0], [0, 0, 1, 0], [], []>} : vector<16x8xbf16>, vector<16x8xbf16>, vector<16x16xf32> -> vector<16x16xf32>
    %106 = arith.addf %105, %2 : vector<16x16xf32>
    %cst_43 = arith.constant dense<0xFF800000> : vector<16xf32>
    %107 = vector.multi_reduction <maximumf>, %106, %cst_43 [1] : vector<16x16xf32> to vector<16xf32>
    %108 = vector.shape_cast %107 : vector<16xf32> to vector<16x1xf32>
    %109 = vector.broadcast %108 : vector<16x1xf32> to vector<16x16xf32>
    %110 = arith.subf %106, %109 : vector<16x16xf32>
    %111 = math.exp %110 : vector<16x16xf32>
    %cst_44 = arith.constant dense<0.000000e+00> : vector<16xf32>
    %112 = vector.multi_reduction <add>, %111, %cst_44 [1] : vector<16x16xf32> to vector<16xf32>
    %113 = vector.shape_cast %112 : vector<16xf32> to vector<16x1xf32>
    %114 = tpu.reciprocal %113 {approx = true} : vector<16x1xf32> -> vector<16x1xf32>
    %115 = vector.broadcast %114 : vector<16x1xf32> to vector<16x16xf32>
    %116 = arith.mulf %111, %115 : vector<16x16xf32>
    %117 = arith.truncf %116 : vector<16x16xf32> to vector<16x16xbf16>
    %cst_45 = arith.constant dense<0.000000e+00> : vector<16x8xf32>
    %118 = tpu.matmul %117, %104, %cst_45 {dimension_numbers = #tpu.dot_dimension_numbers<[1], [0], [0], [1], [0, 0, 1, 1], [], []>} : vector<16x16xbf16>, vector<16x8xbf16>, vector<16x8xf32> -> vector<16x8xf32>
    %119 = arith.truncf %118 : vector<16x8xf32> to vector<16x8xbf16>
    %120 = vector.extract_strided_slice %20 {offsets = [3, 0, 0], sizes = [1, 8, 32], strides = [1, 1, 1]} : vector<4x8x32xbf16> to vector<1x8x32xbf16>
    %121 = vector.shape_cast %120 : vector<1x8x32xbf16> to vector<8x32xbf16>
    %cst_46 = arith.constant dense<0.000000e+00> : vector<16x32xf32>
    %122 = tpu.matmul %119, %121, %cst_46 {dimension_numbers = #tpu.dot_dimension_numbers<[1], [0], [0], [1], [0, 0, 1, 1], [], []>} : vector<16x8xbf16>, vector<8x32xbf16>, vector<16x32xf32> -> vector<16x32xf32>
    %123 = arith.addf %98, %122 : vector<16x32xf32>
    %124 = vector.broadcast %22 : vector<1x32xf32> to vector<16x32xf32>
    %125 = arith.addf %123, %124 : vector<16x32xf32>
    %126 = arith.addf %1, %125 : vector<16x32xf32>
    %127 = vector.extract_strided_slice %5 {offsets = [0, 0], sizes = [1, 32], strides = [1, 1]} : vector<3x32xf32> to vector<1x32xf32>
    %128 = vector.extract_strided_slice %7 {offsets = [0, 0], sizes = [1, 32], strides = [1, 1]} : vector<3x32xf32> to vector<1x32xf32>
    %cst_47 = arith.constant dense<0.000000e+00> : vector<16xf32>
    %129 = vector.multi_reduction <add>, %126, %cst_47 [1] : vector<16x32xf32> to vector<16xf32>
    %130 = vector.shape_cast %129 : vector<16xf32> to vector<16x1xf32>
    %cst_48 = arith.constant 3.200000e+01 : f32
    %131 = vector.broadcast %cst_48 : f32 to vector<16x1xf32>
    %132 = arith.divf %130, %131 : vector<16x1xf32>
    %133 = vector.broadcast %132 : vector<16x1xf32> to vector<16x32xf32>
    %134 = arith.subf %126, %133 : vector<16x32xf32>
    %135 = arith.mulf %134, %134 : vector<16x32xf32>
    %cst_49 = arith.constant dense<0.000000e+00> : vector<16xf32>
    %136 = vector.multi_reduction <add>, %135, %cst_49 [1] : vector<16x32xf32> to vector<16xf32>
    %137 = vector.shape_cast %136 : vector<16xf32> to vector<16x1xf32>
    %cst_50 = arith.constant 3.200000e+01 : f32
    %138 = vector.broadcast %cst_50 : f32 to vector<16x1xf32>
    %139 = arith.divf %137, %138 : vector<16x1xf32>
    %cst_51 = arith.constant 9.99999974E-6 : f32
    %140 = vector.broadcast %cst_51 : f32 to vector<16x1xf32>
    %141 = arith.addf %139, %140 : vector<16x1xf32>
    %142 = math.rsqrt %141 : vector<16x1xf32>
    %143 = vector.broadcast %132 : vector<16x1xf32> to vector<16x32xf32>
    %144 = arith.subf %126, %143 : vector<16x32xf32>
    %145 = vector.broadcast %142 : vector<16x1xf32> to vector<16x32xf32>
    %146 = arith.mulf %144, %145 : vector<16x32xf32>
    %147 = vector.broadcast %127 : vector<1x32xf32> to vector<16x32xf32>
    %148 = arith.mulf %146, %147 : vector<16x32xf32>
    %149 = vector.broadcast %128 : vector<1x32xf32> to vector<16x32xf32>
    %150 = arith.addf %148, %149 : vector<16x32xf32>
    %c0_52 = arith.constant 0 : index
    %c0_53 = arith.constant 0 : index
    %c0_54 = arith.constant 0 : index
    %151 = vector.load %arg8[%c0_52, %c0_53, %c0_54] : memref<2x32x32xbf16, #tpu.memory_space<vmem>>, vector<1x32x32xbf16>
    %152 = vector.shape_cast %151 : vector<1x32x32xbf16> to vector<32x32xbf16>
    %c0_55 = arith.constant 0 : index
    %c0_56 = arith.constant 0 : index
    %c0_57 = arith.constant 0 : index
    %153 = vector.load %arg9[%c0_55, %c0_56, %c0_57] : memref<2x1x32xf32, #tpu.memory_space<vmem>>, vector<1x1x32xf32>
    %154 = vector.shape_cast %153 : vector<1x1x32xf32> to vector<1x32xf32>
    %155 = arith.truncf %150 : vector<16x32xf32> to vector<16x32xbf16>
    %cst_58 = arith.constant dense<0.000000e+00> : vector<16x32xf32>
    %156 = tpu.matmul %155, %152, %cst_58 {dimension_numbers = #tpu.dot_dimension_numbers<[1], [0], [0], [1], [0, 0, 1, 1], [], []>} : vector<16x32xbf16>, vector<32x32xbf16>, vector<16x32xf32> -> vector<16x32xf32>
    %157 = vector.broadcast %154 : vector<1x32xf32> to vector<16x32xf32>
    %158 = arith.addf %156, %157 : vector<16x32xf32>
    %c0_59 = arith.constant 0 : index
    %c0_60 = arith.constant 0 : index
    %c0_61 = arith.constant 0 : index
    %159 = vector.load %arg10[%c0_59, %c0_60, %c0_61] : memref<2x32x64xbf16, #tpu.memory_space<vmem>>, vector<1x32x64xbf16>
    %160 = vector.shape_cast %159 : vector<1x32x64xbf16> to vector<32x64xbf16>
    %c0_62 = arith.constant 0 : index
    %c0_63 = arith.constant 0 : index
    %c0_64 = arith.constant 0 : index
    %161 = vector.load %arg11[%c0_62, %c0_63, %c0_64] : memref<2x1x64xf32, #tpu.memory_space<vmem>>, vector<1x1x64xf32>
    %162 = vector.shape_cast %161 : vector<1x1x64xf32> to vector<1x64xf32>
    %163 = arith.truncf %0 : vector<16x32xf32> to vector<16x32xbf16>
    %cst_65 = arith.constant dense<0.000000e+00> : vector<16x64xf32>
    %164 = tpu.matmul %163, %160, %cst_65 {dimension_numbers = #tpu.dot_dimension_numbers<[1], [0], [0], [1], [0, 0, 1, 1], [], []>} : vector<16x32xbf16>, vector<32x64xbf16>, vector<16x64xf32> -> vector<16x64xf32>
    %165 = vector.broadcast %162 : vector<1x64xf32> to vector<16x64xf32>
    %166 = arith.addf %164, %165 : vector<16x64xf32>
    %167 = vector.extract_strided_slice %166 {offsets = [0, 0], sizes = [16, 32], strides = [1, 1]} : vector<16x64xf32> to vector<16x32xf32>
    %168 = vector.extract_strided_slice %166 {offsets = [0, 32], sizes = [16, 32], strides = [1, 1]} : vector<16x64xf32> to vector<16x32xf32>
    %c0_66 = arith.constant 0 : index
    %c0_67 = arith.constant 0 : index
    %c0_68 = arith.constant 0 : index
    %c0_69 = arith.constant 0 : index
    %169 = vector.load %arg12[%c0_66, %c0_67, %c0_68, %c0_69] : memref<2x4x8x32xbf16, #tpu.memory_space<vmem>>, vector<1x4x8x32xbf16>
    %170 = vector.shape_cast %169 : vector<1x4x8x32xbf16> to vector<4x8x32xbf16>
    %c0_70 = arith.constant 0 : index
    %c0_71 = arith.constant 0 : index
    %c0_72 = arith.constant 0 : index
    %171 = vector.load %arg13[%c0_70, %c0_71, %c0_72] : memref<2x1x32xf32, #tpu.memory_space<vmem>>, vector<1x1x32xf32>
    %172 = vector.shape_cast %171 : vector<1x1x32xf32> to vector<1x32xf32>
    %cst_73 = arith.constant 0.000000e+00 : f32
    %173 = vector.broadcast %cst_73 : f32 to vector<16x32xf32>
    %174 = vector.extract_strided_slice %158 {offsets = [0, 0], sizes = [16, 8], strides = [1, 1]} : vector<16x32xf32> to vector<16x8xf32>
    %175 = arith.truncf %174 : vector<16x8xf32> to vector<16x8xbf16>
    %176 = vector.extract_strided_slice %167 {offsets = [0, 0], sizes = [16, 8], strides = [1, 1]} : vector<16x32xf32> to vector<16x8xf32>
    %177 = arith.truncf %176 : vector<16x8xf32> to vector<16x8xbf16>
    %178 = vector.extract_strided_slice %168 {offsets = [0, 0], sizes = [16, 8], strides = [1, 1]} : vector<16x32xf32> to vector<16x8xf32>
    %179 = arith.truncf %178 : vector<16x8xf32> to vector<16x8xbf16>
    %cst_74 = arith.constant dense<0.000000e+00> : vector<16x16xf32>
    %180 = tpu.matmul %175, %177, %cst_74 {dimension_numbers = #tpu.dot_dimension_numbers<[1], [1], [0], [0], [0, 0, 1, 0], [], []>} : vector<16x8xbf16>, vector<16x8xbf16>, vector<16x16xf32> -> vector<16x16xf32>
    %181 = arith.addf %180, %3 : vector<16x16xf32>
    %cst_75 = arith.constant dense<0xFF800000> : vector<16xf32>
    %182 = vector.multi_reduction <maximumf>, %181, %cst_75 [1] : vector<16x16xf32> to vector<16xf32>
    %183 = vector.shape_cast %182 : vector<16xf32> to vector<16x1xf32>
    %184 = vector.broadcast %183 : vector<16x1xf32> to vector<16x16xf32>
    %185 = arith.subf %181, %184 : vector<16x16xf32>
    %186 = math.exp %185 : vector<16x16xf32>
    %cst_76 = arith.constant dense<0.000000e+00> : vector<16xf32>
    %187 = vector.multi_reduction <add>, %186, %cst_76 [1] : vector<16x16xf32> to vector<16xf32>
    %188 = vector.shape_cast %187 : vector<16xf32> to vector<16x1xf32>
    %189 = tpu.reciprocal %188 {approx = true} : vector<16x1xf32> -> vector<16x1xf32>
    %190 = vector.broadcast %189 : vector<16x1xf32> to vector<16x16xf32>
    %191 = arith.mulf %186, %190 : vector<16x16xf32>
    %192 = arith.truncf %191 : vector<16x16xf32> to vector<16x16xbf16>
    %cst_77 = arith.constant dense<0.000000e+00> : vector<16x8xf32>
    %193 = tpu.matmul %192, %179, %cst_77 {dimension_numbers = #tpu.dot_dimension_numbers<[1], [0], [0], [1], [0, 0, 1, 1], [], []>} : vector<16x16xbf16>, vector<16x8xbf16>, vector<16x8xf32> -> vector<16x8xf32>
    %194 = arith.truncf %193 : vector<16x8xf32> to vector<16x8xbf16>
    %195 = vector.extract_strided_slice %170 {offsets = [0, 0, 0], sizes = [1, 8, 32], strides = [1, 1, 1]} : vector<4x8x32xbf16> to vector<1x8x32xbf16>
    %196 = vector.shape_cast %195 : vector<1x8x32xbf16> to vector<8x32xbf16>
    %cst_78 = arith.constant dense<0.000000e+00> : vector<16x32xf32>
    %197 = tpu.matmul %194, %196, %cst_78 {dimension_numbers = #tpu.dot_dimension_numbers<[1], [0], [0], [1], [0, 0, 1, 1], [], []>} : vector<16x8xbf16>, vector<8x32xbf16>, vector<16x32xf32> -> vector<16x32xf32>
    %198 = arith.addf %173, %197 : vector<16x32xf32>
    %199 = vector.extract_strided_slice %158 {offsets = [0, 8], sizes = [16, 8], strides = [1, 1]} : vector<16x32xf32> to vector<16x8xf32>
    %200 = arith.truncf %199 : vector<16x8xf32> to vector<16x8xbf16>
    %201 = vector.extract_strided_slice %167 {offsets = [0, 8], sizes = [16, 8], strides = [1, 1]} : vector<16x32xf32> to vector<16x8xf32>
    %202 = arith.truncf %201 : vector<16x8xf32> to vector<16x8xbf16>
    %203 = vector.extract_strided_slice %168 {offsets = [0, 8], sizes = [16, 8], strides = [1, 1]} : vector<16x32xf32> to vector<16x8xf32>
    %204 = arith.truncf %203 : vector<16x8xf32> to vector<16x8xbf16>
    %cst_79 = arith.constant dense<0.000000e+00> : vector<16x16xf32>
    %205 = tpu.matmul %200, %202, %cst_79 {dimension_numbers = #tpu.dot_dimension_numbers<[1], [1], [0], [0], [0, 0, 1, 0], [], []>} : vector<16x8xbf16>, vector<16x8xbf16>, vector<16x16xf32> -> vector<16x16xf32>
    %206 = arith.addf %205, %3 : vector<16x16xf32>
    %cst_80 = arith.constant dense<0xFF800000> : vector<16xf32>
    %207 = vector.multi_reduction <maximumf>, %206, %cst_80 [1] : vector<16x16xf32> to vector<16xf32>
    %208 = vector.shape_cast %207 : vector<16xf32> to vector<16x1xf32>
    %209 = vector.broadcast %208 : vector<16x1xf32> to vector<16x16xf32>
    %210 = arith.subf %206, %209 : vector<16x16xf32>
    %211 = math.exp %210 : vector<16x16xf32>
    %cst_81 = arith.constant dense<0.000000e+00> : vector<16xf32>
    %212 = vector.multi_reduction <add>, %211, %cst_81 [1] : vector<16x16xf32> to vector<16xf32>
    %213 = vector.shape_cast %212 : vector<16xf32> to vector<16x1xf32>
    %214 = tpu.reciprocal %213 {approx = true} : vector<16x1xf32> -> vector<16x1xf32>
    %215 = vector.broadcast %214 : vector<16x1xf32> to vector<16x16xf32>
    %216 = arith.mulf %211, %215 : vector<16x16xf32>
    %217 = arith.truncf %216 : vector<16x16xf32> to vector<16x16xbf16>
    %cst_82 = arith.constant dense<0.000000e+00> : vector<16x8xf32>
    %218 = tpu.matmul %217, %204, %cst_82 {dimension_numbers = #tpu.dot_dimension_numbers<[1], [0], [0], [1], [0, 0, 1, 1], [], []>} : vector<16x16xbf16>, vector<16x8xbf16>, vector<16x8xf32> -> vector<16x8xf32>
    %219 = arith.truncf %218 : vector<16x8xf32> to vector<16x8xbf16>
    %220 = vector.extract_strided_slice %170 {offsets = [1, 0, 0], sizes = [1, 8, 32], strides = [1, 1, 1]} : vector<4x8x32xbf16> to vector<1x8x32xbf16>
    %221 = vector.shape_cast %220 : vector<1x8x32xbf16> to vector<8x32xbf16>
    %cst_83 = arith.constant dense<0.000000e+00> : vector<16x32xf32>
    %222 = tpu.matmul %219, %221, %cst_83 {dimension_numbers = #tpu.dot_dimension_numbers<[1], [0], [0], [1], [0, 0, 1, 1], [], []>} : vector<16x8xbf16>, vector<8x32xbf16>, vector<16x32xf32> -> vector<16x32xf32>
    %223 = arith.addf %198, %222 : vector<16x32xf32>
    %224 = vector.extract_strided_slice %158 {offsets = [0, 16], sizes = [16, 8], strides = [1, 1]} : vector<16x32xf32> to vector<16x8xf32>
    %225 = arith.truncf %224 : vector<16x8xf32> to vector<16x8xbf16>
    %226 = vector.extract_strided_slice %167 {offsets = [0, 16], sizes = [16, 8], strides = [1, 1]} : vector<16x32xf32> to vector<16x8xf32>
    %227 = arith.truncf %226 : vector<16x8xf32> to vector<16x8xbf16>
    %228 = vector.extract_strided_slice %168 {offsets = [0, 16], sizes = [16, 8], strides = [1, 1]} : vector<16x32xf32> to vector<16x8xf32>
    %229 = arith.truncf %228 : vector<16x8xf32> to vector<16x8xbf16>
    %cst_84 = arith.constant dense<0.000000e+00> : vector<16x16xf32>
    %230 = tpu.matmul %225, %227, %cst_84 {dimension_numbers = #tpu.dot_dimension_numbers<[1], [1], [0], [0], [0, 0, 1, 0], [], []>} : vector<16x8xbf16>, vector<16x8xbf16>, vector<16x16xf32> -> vector<16x16xf32>
    %231 = arith.addf %230, %3 : vector<16x16xf32>
    %cst_85 = arith.constant dense<0xFF800000> : vector<16xf32>
    %232 = vector.multi_reduction <maximumf>, %231, %cst_85 [1] : vector<16x16xf32> to vector<16xf32>
    %233 = vector.shape_cast %232 : vector<16xf32> to vector<16x1xf32>
    %234 = vector.broadcast %233 : vector<16x1xf32> to vector<16x16xf32>
    %235 = arith.subf %231, %234 : vector<16x16xf32>
    %236 = math.exp %235 : vector<16x16xf32>
    %cst_86 = arith.constant dense<0.000000e+00> : vector<16xf32>
    %237 = vector.multi_reduction <add>, %236, %cst_86 [1] : vector<16x16xf32> to vector<16xf32>
    %238 = vector.shape_cast %237 : vector<16xf32> to vector<16x1xf32>
    %239 = tpu.reciprocal %238 {approx = true} : vector<16x1xf32> -> vector<16x1xf32>
    %240 = vector.broadcast %239 : vector<16x1xf32> to vector<16x16xf32>
    %241 = arith.mulf %236, %240 : vector<16x16xf32>
    %242 = arith.truncf %241 : vector<16x16xf32> to vector<16x16xbf16>
    %cst_87 = arith.constant dense<0.000000e+00> : vector<16x8xf32>
    %243 = tpu.matmul %242, %229, %cst_87 {dimension_numbers = #tpu.dot_dimension_numbers<[1], [0], [0], [1], [0, 0, 1, 1], [], []>} : vector<16x16xbf16>, vector<16x8xbf16>, vector<16x8xf32> -> vector<16x8xf32>
    %244 = arith.truncf %243 : vector<16x8xf32> to vector<16x8xbf16>
    %245 = vector.extract_strided_slice %170 {offsets = [2, 0, 0], sizes = [1, 8, 32], strides = [1, 1, 1]} : vector<4x8x32xbf16> to vector<1x8x32xbf16>
    %246 = vector.shape_cast %245 : vector<1x8x32xbf16> to vector<8x32xbf16>
    %cst_88 = arith.constant dense<0.000000e+00> : vector<16x32xf32>
    %247 = tpu.matmul %244, %246, %cst_88 {dimension_numbers = #tpu.dot_dimension_numbers<[1], [0], [0], [1], [0, 0, 1, 1], [], []>} : vector<16x8xbf16>, vector<8x32xbf16>, vector<16x32xf32> -> vector<16x32xf32>
    %248 = arith.addf %223, %247 : vector<16x32xf32>
    %249 = vector.extract_strided_slice %158 {offsets = [0, 24], sizes = [16, 8], strides = [1, 1]} : vector<16x32xf32> to vector<16x8xf32>
    %250 = arith.truncf %249 : vector<16x8xf32> to vector<16x8xbf16>
    %251 = vector.extract_strided_slice %167 {offsets = [0, 24], sizes = [16, 8], strides = [1, 1]} : vector<16x32xf32> to vector<16x8xf32>
    %252 = arith.truncf %251 : vector<16x8xf32> to vector<16x8xbf16>
    %253 = vector.extract_strided_slice %168 {offsets = [0, 24], sizes = [16, 8], strides = [1, 1]} : vector<16x32xf32> to vector<16x8xf32>
    %254 = arith.truncf %253 : vector<16x8xf32> to vector<16x8xbf16>
    %cst_89 = arith.constant dense<0.000000e+00> : vector<16x16xf32>
    %255 = tpu.matmul %250, %252, %cst_89 {dimension_numbers = #tpu.dot_dimension_numbers<[1], [1], [0], [0], [0, 0, 1, 0], [], []>} : vector<16x8xbf16>, vector<16x8xbf16>, vector<16x16xf32> -> vector<16x16xf32>
    %256 = arith.addf %255, %3 : vector<16x16xf32>
    %cst_90 = arith.constant dense<0xFF800000> : vector<16xf32>
    %257 = vector.multi_reduction <maximumf>, %256, %cst_90 [1] : vector<16x16xf32> to vector<16xf32>
    %258 = vector.shape_cast %257 : vector<16xf32> to vector<16x1xf32>
    %259 = vector.broadcast %258 : vector<16x1xf32> to vector<16x16xf32>
    %260 = arith.subf %256, %259 : vector<16x16xf32>
    %261 = math.exp %260 : vector<16x16xf32>
    %cst_91 = arith.constant dense<0.000000e+00> : vector<16xf32>
    %262 = vector.multi_reduction <add>, %261, %cst_91 [1] : vector<16x16xf32> to vector<16xf32>
    %263 = vector.shape_cast %262 : vector<16xf32> to vector<16x1xf32>
    %264 = tpu.reciprocal %263 {approx = true} : vector<16x1xf32> -> vector<16x1xf32>
    %265 = vector.broadcast %264 : vector<16x1xf32> to vector<16x16xf32>
    %266 = arith.mulf %261, %265 : vector<16x16xf32>
    %267 = arith.truncf %266 : vector<16x16xf32> to vector<16x16xbf16>
    %cst_92 = arith.constant dense<0.000000e+00> : vector<16x8xf32>
    %268 = tpu.matmul %267, %254, %cst_92 {dimension_numbers = #tpu.dot_dimension_numbers<[1], [0], [0], [1], [0, 0, 1, 1], [], []>} : vector<16x16xbf16>, vector<16x8xbf16>, vector<16x8xf32> -> vector<16x8xf32>
    %269 = arith.truncf %268 : vector<16x8xf32> to vector<16x8xbf16>
    %270 = vector.extract_strided_slice %170 {offsets = [3, 0, 0], sizes = [1, 8, 32], strides = [1, 1, 1]} : vector<4x8x32xbf16> to vector<1x8x32xbf16>
    %271 = vector.shape_cast %270 : vector<1x8x32xbf16> to vector<8x32xbf16>
    %cst_93 = arith.constant dense<0.000000e+00> : vector<16x32xf32>
    %272 = tpu.matmul %269, %271, %cst_93 {dimension_numbers = #tpu.dot_dimension_numbers<[1], [0], [0], [1], [0, 0, 1, 1], [], []>} : vector<16x8xbf16>, vector<8x32xbf16>, vector<16x32xf32> -> vector<16x32xf32>
    %273 = arith.addf %248, %272 : vector<16x32xf32>
    %274 = vector.broadcast %172 : vector<1x32xf32> to vector<16x32xf32>
    %275 = arith.addf %273, %274 : vector<16x32xf32>
    %276 = arith.addf %150, %275 : vector<16x32xf32>
    %277 = vector.extract_strided_slice %5 {offsets = [1, 0], sizes = [1, 32], strides = [1, 1]} : vector<3x32xf32> to vector<1x32xf32>
    %278 = vector.extract_strided_slice %7 {offsets = [1, 0], sizes = [1, 32], strides = [1, 1]} : vector<3x32xf32> to vector<1x32xf32>
    %cst_94 = arith.constant dense<0.000000e+00> : vector<16xf32>
    %279 = vector.multi_reduction <add>, %276, %cst_94 [1] : vector<16x32xf32> to vector<16xf32>
    %280 = vector.shape_cast %279 : vector<16xf32> to vector<16x1xf32>
    %cst_95 = arith.constant 3.200000e+01 : f32
    %281 = vector.broadcast %cst_95 : f32 to vector<16x1xf32>
    %282 = arith.divf %280, %281 : vector<16x1xf32>
    %283 = vector.broadcast %282 : vector<16x1xf32> to vector<16x32xf32>
    %284 = arith.subf %276, %283 : vector<16x32xf32>
    %285 = arith.mulf %284, %284 : vector<16x32xf32>
    %cst_96 = arith.constant dense<0.000000e+00> : vector<16xf32>
    %286 = vector.multi_reduction <add>, %285, %cst_96 [1] : vector<16x32xf32> to vector<16xf32>
    %287 = vector.shape_cast %286 : vector<16xf32> to vector<16x1xf32>
    %cst_97 = arith.constant 3.200000e+01 : f32
    %288 = vector.broadcast %cst_97 : f32 to vector<16x1xf32>
    %289 = arith.divf %287, %288 : vector<16x1xf32>
    %cst_98 = arith.constant 9.99999974E-6 : f32
    %290 = vector.broadcast %cst_98 : f32 to vector<16x1xf32>
    %291 = arith.addf %289, %290 : vector<16x1xf32>
    %292 = math.rsqrt %291 : vector<16x1xf32>
    %293 = vector.broadcast %282 : vector<16x1xf32> to vector<16x32xf32>
    %294 = arith.subf %276, %293 : vector<16x32xf32>
    %295 = vector.broadcast %292 : vector<16x1xf32> to vector<16x32xf32>
    %296 = arith.mulf %294, %295 : vector<16x32xf32>
    %297 = vector.broadcast %277 : vector<1x32xf32> to vector<16x32xf32>
    %298 = arith.mulf %296, %297 : vector<16x32xf32>
    %299 = vector.broadcast %278 : vector<1x32xf32> to vector<16x32xf32>
    %300 = arith.addf %298, %299 : vector<16x32xf32>
    %c0_99 = arith.constant 0 : index
    %c0_100 = arith.constant 0 : index
    %c0_101 = arith.constant 0 : index
    %301 = vector.load %arg14[%c0_99, %c0_100, %c0_101] : memref<2x32x64xbf16, #tpu.memory_space<vmem>>, vector<1x32x64xbf16>
    %302 = vector.shape_cast %301 : vector<1x32x64xbf16> to vector<32x64xbf16>
    %c0_102 = arith.constant 0 : index
    %c0_103 = arith.constant 0 : index
    %c0_104 = arith.constant 0 : index
    %303 = vector.load %arg15[%c0_102, %c0_103, %c0_104] : memref<2x1x64xf32, #tpu.memory_space<vmem>>, vector<1x1x64xf32>
    %304 = vector.shape_cast %303 : vector<1x1x64xf32> to vector<1x64xf32>
    %305 = arith.truncf %300 : vector<16x32xf32> to vector<16x32xbf16>
    %cst_105 = arith.constant dense<0.000000e+00> : vector<16x64xf32>
    %306 = tpu.matmul %305, %302, %cst_105 {dimension_numbers = #tpu.dot_dimension_numbers<[1], [0], [0], [1], [0, 0, 1, 1], [], []>} : vector<16x32xbf16>, vector<32x64xbf16>, vector<16x64xf32> -> vector<16x64xf32>
    %307 = vector.broadcast %304 : vector<1x64xf32> to vector<16x64xf32>
    %308 = arith.addf %306, %307 : vector<16x64xf32>
    %cst_106 = arith.constant 0.000000e+00 : f32
    %309 = vector.broadcast %cst_106 : f32 to vector<16x64xf32>
    %310 = arith.maximumf %308, %309 : vector<16x64xf32>
    %c0_107 = arith.constant 0 : index
    %c0_108 = arith.constant 0 : index
    %c0_109 = arith.constant 0 : index
    %311 = vector.load %arg16[%c0_107, %c0_108, %c0_109] : memref<2x64x32xbf16, #tpu.memory_space<vmem>>, vector<1x64x32xbf16>
    %312 = vector.shape_cast %311 : vector<1x64x32xbf16> to vector<64x32xbf16>
    %c0_110 = arith.constant 0 : index
    %c0_111 = arith.constant 0 : index
    %c0_112 = arith.constant 0 : index
    %313 = vector.load %arg17[%c0_110, %c0_111, %c0_112] : memref<2x1x32xf32, #tpu.memory_space<vmem>>, vector<1x1x32xf32>
    %314 = vector.shape_cast %313 : vector<1x1x32xf32> to vector<1x32xf32>
    %315 = arith.truncf %310 : vector<16x64xf32> to vector<16x64xbf16>
    %cst_113 = arith.constant dense<0.000000e+00> : vector<16x32xf32>
    %316 = tpu.matmul %315, %312, %cst_113 {dimension_numbers = #tpu.dot_dimension_numbers<[1], [0], [0], [1], [0, 0, 1, 1], [], []>} : vector<16x64xbf16>, vector<64x32xbf16>, vector<16x32xf32> -> vector<16x32xf32>
    %317 = vector.broadcast %314 : vector<1x32xf32> to vector<16x32xf32>
    %318 = arith.addf %316, %317 : vector<16x32xf32>
    %319 = arith.addf %300, %318 : vector<16x32xf32>
    %320 = vector.extract_strided_slice %5 {offsets = [2, 0], sizes = [1, 32], strides = [1, 1]} : vector<3x32xf32> to vector<1x32xf32>
    %321 = vector.extract_strided_slice %7 {offsets = [2, 0], sizes = [1, 32], strides = [1, 1]} : vector<3x32xf32> to vector<1x32xf32>
    %cst_114 = arith.constant dense<0.000000e+00> : vector<16xf32>
    %322 = vector.multi_reduction <add>, %319, %cst_114 [1] : vector<16x32xf32> to vector<16xf32>
    %323 = vector.shape_cast %322 : vector<16xf32> to vector<16x1xf32>
    %cst_115 = arith.constant 3.200000e+01 : f32
    %324 = vector.broadcast %cst_115 : f32 to vector<16x1xf32>
    %325 = arith.divf %323, %324 : vector<16x1xf32>
    %326 = vector.broadcast %325 : vector<16x1xf32> to vector<16x32xf32>
    %327 = arith.subf %319, %326 : vector<16x32xf32>
    %328 = arith.mulf %327, %327 : vector<16x32xf32>
    %cst_116 = arith.constant dense<0.000000e+00> : vector<16xf32>
    %329 = vector.multi_reduction <add>, %328, %cst_116 [1] : vector<16x32xf32> to vector<16xf32>
    %330 = vector.shape_cast %329 : vector<16xf32> to vector<16x1xf32>
    %cst_117 = arith.constant 3.200000e+01 : f32
    %331 = vector.broadcast %cst_117 : f32 to vector<16x1xf32>
    %332 = arith.divf %330, %331 : vector<16x1xf32>
    %cst_118 = arith.constant 9.99999974E-6 : f32
    %333 = vector.broadcast %cst_118 : f32 to vector<16x1xf32>
    %334 = arith.addf %332, %333 : vector<16x1xf32>
    %335 = math.rsqrt %334 : vector<16x1xf32>
    %336 = vector.broadcast %325 : vector<16x1xf32> to vector<16x32xf32>
    %337 = arith.subf %319, %336 : vector<16x32xf32>
    %338 = vector.broadcast %335 : vector<16x1xf32> to vector<16x32xf32>
    %339 = arith.mulf %337, %338 : vector<16x32xf32>
    %340 = vector.broadcast %320 : vector<1x32xf32> to vector<16x32xf32>
    %341 = arith.mulf %339, %340 : vector<16x32xf32>
    %342 = vector.broadcast %321 : vector<1x32xf32> to vector<16x32xf32>
    %343 = arith.addf %341, %342 : vector<16x32xf32>
    %c1 = arith.constant 1 : index
    %c0_119 = arith.constant 0 : index
    %c0_120 = arith.constant 0 : index
    %344 = vector.load %arg18[%c1, %c0_119, %c0_120] : memref<2x3x32xf32, #tpu.memory_space<vmem>>, vector<1x3x32xf32>
    %345 = vector.shape_cast %344 : vector<1x3x32xf32> to vector<3x32xf32>
    %c1_121 = arith.constant 1 : index
    %c0_122 = arith.constant 0 : index
    %c0_123 = arith.constant 0 : index
    %346 = vector.load %arg19[%c1_121, %c0_122, %c0_123] : memref<2x3x32xf32, #tpu.memory_space<vmem>>, vector<1x3x32xf32>
    %347 = vector.shape_cast %346 : vector<1x3x32xf32> to vector<3x32xf32>
    %c1_124 = arith.constant 1 : index
    %c0_125 = arith.constant 0 : index
    %c0_126 = arith.constant 0 : index
    %348 = vector.load %arg4[%c1_124, %c0_125, %c0_126] : memref<2x32x96xbf16, #tpu.memory_space<vmem>>, vector<1x32x96xbf16>
    %349 = vector.shape_cast %348 : vector<1x32x96xbf16> to vector<32x96xbf16>
    %c1_127 = arith.constant 1 : index
    %c0_128 = arith.constant 0 : index
    %c0_129 = arith.constant 0 : index
    %350 = vector.load %arg5[%c1_127, %c0_128, %c0_129] : memref<2x1x96xf32, #tpu.memory_space<vmem>>, vector<1x1x96xf32>
    %351 = vector.shape_cast %350 : vector<1x1x96xf32> to vector<1x96xf32>
    %352 = arith.truncf %343 : vector<16x32xf32> to vector<16x32xbf16>
    %cst_130 = arith.constant dense<0.000000e+00> : vector<16x96xf32>
    %353 = tpu.matmul %352, %349, %cst_130 {dimension_numbers = #tpu.dot_dimension_numbers<[1], [0], [0], [1], [0, 0, 1, 1], [], []>} : vector<16x32xbf16>, vector<32x96xbf16>, vector<16x96xf32> -> vector<16x96xf32>
    %354 = vector.broadcast %351 : vector<1x96xf32> to vector<16x96xf32>
    %355 = arith.addf %353, %354 : vector<16x96xf32>
    %356 = vector.extract_strided_slice %355 {offsets = [0, 0], sizes = [16, 32], strides = [1, 1]} : vector<16x96xf32> to vector<16x32xf32>
    %357 = vector.extract_strided_slice %355 {offsets = [0, 32], sizes = [16, 32], strides = [1, 1]} : vector<16x96xf32> to vector<16x32xf32>
    %358 = vector.extract_strided_slice %355 {offsets = [0, 64], sizes = [16, 32], strides = [1, 1]} : vector<16x96xf32> to vector<16x32xf32>
    %c1_131 = arith.constant 1 : index
    %c0_132 = arith.constant 0 : index
    %c0_133 = arith.constant 0 : index
    %c0_134 = arith.constant 0 : index
    %359 = vector.load %arg6[%c1_131, %c0_132, %c0_133, %c0_134] : memref<2x4x8x32xbf16, #tpu.memory_space<vmem>>, vector<1x4x8x32xbf16>
    %360 = vector.shape_cast %359 : vector<1x4x8x32xbf16> to vector<4x8x32xbf16>
    %c1_135 = arith.constant 1 : index
    %c0_136 = arith.constant 0 : index
    %c0_137 = arith.constant 0 : index
    %361 = vector.load %arg7[%c1_135, %c0_136, %c0_137] : memref<2x1x32xf32, #tpu.memory_space<vmem>>, vector<1x1x32xf32>
    %362 = vector.shape_cast %361 : vector<1x1x32xf32> to vector<1x32xf32>
    %cst_138 = arith.constant 0.000000e+00 : f32
    %363 = vector.broadcast %cst_138 : f32 to vector<16x32xf32>
    %364 = vector.extract_strided_slice %356 {offsets = [0, 0], sizes = [16, 8], strides = [1, 1]} : vector<16x32xf32> to vector<16x8xf32>
    %365 = arith.truncf %364 : vector<16x8xf32> to vector<16x8xbf16>
    %366 = vector.extract_strided_slice %357 {offsets = [0, 0], sizes = [16, 8], strides = [1, 1]} : vector<16x32xf32> to vector<16x8xf32>
    %367 = arith.truncf %366 : vector<16x8xf32> to vector<16x8xbf16>
    %368 = vector.extract_strided_slice %358 {offsets = [0, 0], sizes = [16, 8], strides = [1, 1]} : vector<16x32xf32> to vector<16x8xf32>
    %369 = arith.truncf %368 : vector<16x8xf32> to vector<16x8xbf16>
    %cst_139 = arith.constant dense<0.000000e+00> : vector<16x16xf32>
    %370 = tpu.matmul %365, %367, %cst_139 {dimension_numbers = #tpu.dot_dimension_numbers<[1], [1], [0], [0], [0, 0, 1, 0], [], []>} : vector<16x8xbf16>, vector<16x8xbf16>, vector<16x16xf32> -> vector<16x16xf32>
    %371 = arith.addf %370, %2 : vector<16x16xf32>
    %cst_140 = arith.constant dense<0xFF800000> : vector<16xf32>
    %372 = vector.multi_reduction <maximumf>, %371, %cst_140 [1] : vector<16x16xf32> to vector<16xf32>
    %373 = vector.shape_cast %372 : vector<16xf32> to vector<16x1xf32>
    %374 = vector.broadcast %373 : vector<16x1xf32> to vector<16x16xf32>
    %375 = arith.subf %371, %374 : vector<16x16xf32>
    %376 = math.exp %375 : vector<16x16xf32>
    %cst_141 = arith.constant dense<0.000000e+00> : vector<16xf32>
    %377 = vector.multi_reduction <add>, %376, %cst_141 [1] : vector<16x16xf32> to vector<16xf32>
    %378 = vector.shape_cast %377 : vector<16xf32> to vector<16x1xf32>
    %379 = tpu.reciprocal %378 {approx = true} : vector<16x1xf32> -> vector<16x1xf32>
    %380 = vector.broadcast %379 : vector<16x1xf32> to vector<16x16xf32>
    %381 = arith.mulf %376, %380 : vector<16x16xf32>
    %382 = arith.truncf %381 : vector<16x16xf32> to vector<16x16xbf16>
    %cst_142 = arith.constant dense<0.000000e+00> : vector<16x8xf32>
    %383 = tpu.matmul %382, %369, %cst_142 {dimension_numbers = #tpu.dot_dimension_numbers<[1], [0], [0], [1], [0, 0, 1, 1], [], []>} : vector<16x16xbf16>, vector<16x8xbf16>, vector<16x8xf32> -> vector<16x8xf32>
    %384 = arith.truncf %383 : vector<16x8xf32> to vector<16x8xbf16>
    %385 = vector.extract_strided_slice %360 {offsets = [0, 0, 0], sizes = [1, 8, 32], strides = [1, 1, 1]} : vector<4x8x32xbf16> to vector<1x8x32xbf16>
    %386 = vector.shape_cast %385 : vector<1x8x32xbf16> to vector<8x32xbf16>
    %cst_143 = arith.constant dense<0.000000e+00> : vector<16x32xf32>
    %387 = tpu.matmul %384, %386, %cst_143 {dimension_numbers = #tpu.dot_dimension_numbers<[1], [0], [0], [1], [0, 0, 1, 1], [], []>} : vector<16x8xbf16>, vector<8x32xbf16>, vector<16x32xf32> -> vector<16x32xf32>
    %388 = arith.addf %363, %387 : vector<16x32xf32>
    %389 = vector.extract_strided_slice %356 {offsets = [0, 8], sizes = [16, 8], strides = [1, 1]} : vector<16x32xf32> to vector<16x8xf32>
    %390 = arith.truncf %389 : vector<16x8xf32> to vector<16x8xbf16>
    %391 = vector.extract_strided_slice %357 {offsets = [0, 8], sizes = [16, 8], strides = [1, 1]} : vector<16x32xf32> to vector<16x8xf32>
    %392 = arith.truncf %391 : vector<16x8xf32> to vector<16x8xbf16>
    %393 = vector.extract_strided_slice %358 {offsets = [0, 8], sizes = [16, 8], strides = [1, 1]} : vector<16x32xf32> to vector<16x8xf32>
    %394 = arith.truncf %393 : vector<16x8xf32> to vector<16x8xbf16>
    %cst_144 = arith.constant dense<0.000000e+00> : vector<16x16xf32>
    %395 = tpu.matmul %390, %392, %cst_144 {dimension_numbers = #tpu.dot_dimension_numbers<[1], [1], [0], [0], [0, 0, 1, 0], [], []>} : vector<16x8xbf16>, vector<16x8xbf16>, vector<16x16xf32> -> vector<16x16xf32>
    %396 = arith.addf %395, %2 : vector<16x16xf32>
    %cst_145 = arith.constant dense<0xFF800000> : vector<16xf32>
    %397 = vector.multi_reduction <maximumf>, %396, %cst_145 [1] : vector<16x16xf32> to vector<16xf32>
    %398 = vector.shape_cast %397 : vector<16xf32> to vector<16x1xf32>
    %399 = vector.broadcast %398 : vector<16x1xf32> to vector<16x16xf32>
    %400 = arith.subf %396, %399 : vector<16x16xf32>
    %401 = math.exp %400 : vector<16x16xf32>
    %cst_146 = arith.constant dense<0.000000e+00> : vector<16xf32>
    %402 = vector.multi_reduction <add>, %401, %cst_146 [1] : vector<16x16xf32> to vector<16xf32>
    %403 = vector.shape_cast %402 : vector<16xf32> to vector<16x1xf32>
    %404 = tpu.reciprocal %403 {approx = true} : vector<16x1xf32> -> vector<16x1xf32>
    %405 = vector.broadcast %404 : vector<16x1xf32> to vector<16x16xf32>
    %406 = arith.mulf %401, %405 : vector<16x16xf32>
    %407 = arith.truncf %406 : vector<16x16xf32> to vector<16x16xbf16>
    %cst_147 = arith.constant dense<0.000000e+00> : vector<16x8xf32>
    %408 = tpu.matmul %407, %394, %cst_147 {dimension_numbers = #tpu.dot_dimension_numbers<[1], [0], [0], [1], [0, 0, 1, 1], [], []>} : vector<16x16xbf16>, vector<16x8xbf16>, vector<16x8xf32> -> vector<16x8xf32>
    %409 = arith.truncf %408 : vector<16x8xf32> to vector<16x8xbf16>
    %410 = vector.extract_strided_slice %360 {offsets = [1, 0, 0], sizes = [1, 8, 32], strides = [1, 1, 1]} : vector<4x8x32xbf16> to vector<1x8x32xbf16>
    %411 = vector.shape_cast %410 : vector<1x8x32xbf16> to vector<8x32xbf16>
    %cst_148 = arith.constant dense<0.000000e+00> : vector<16x32xf32>
    %412 = tpu.matmul %409, %411, %cst_148 {dimension_numbers = #tpu.dot_dimension_numbers<[1], [0], [0], [1], [0, 0, 1, 1], [], []>} : vector<16x8xbf16>, vector<8x32xbf16>, vector<16x32xf32> -> vector<16x32xf32>
    %413 = arith.addf %388, %412 : vector<16x32xf32>
    %414 = vector.extract_strided_slice %356 {offsets = [0, 16], sizes = [16, 8], strides = [1, 1]} : vector<16x32xf32> to vector<16x8xf32>
    %415 = arith.truncf %414 : vector<16x8xf32> to vector<16x8xbf16>
    %416 = vector.extract_strided_slice %357 {offsets = [0, 16], sizes = [16, 8], strides = [1, 1]} : vector<16x32xf32> to vector<16x8xf32>
    %417 = arith.truncf %416 : vector<16x8xf32> to vector<16x8xbf16>
    %418 = vector.extract_strided_slice %358 {offsets = [0, 16], sizes = [16, 8], strides = [1, 1]} : vector<16x32xf32> to vector<16x8xf32>
    %419 = arith.truncf %418 : vector<16x8xf32> to vector<16x8xbf16>
    %cst_149 = arith.constant dense<0.000000e+00> : vector<16x16xf32>
    %420 = tpu.matmul %415, %417, %cst_149 {dimension_numbers = #tpu.dot_dimension_numbers<[1], [1], [0], [0], [0, 0, 1, 0], [], []>} : vector<16x8xbf16>, vector<16x8xbf16>, vector<16x16xf32> -> vector<16x16xf32>
    %421 = arith.addf %420, %2 : vector<16x16xf32>
    %cst_150 = arith.constant dense<0xFF800000> : vector<16xf32>
    %422 = vector.multi_reduction <maximumf>, %421, %cst_150 [1] : vector<16x16xf32> to vector<16xf32>
    %423 = vector.shape_cast %422 : vector<16xf32> to vector<16x1xf32>
    %424 = vector.broadcast %423 : vector<16x1xf32> to vector<16x16xf32>
    %425 = arith.subf %421, %424 : vector<16x16xf32>
    %426 = math.exp %425 : vector<16x16xf32>
    %cst_151 = arith.constant dense<0.000000e+00> : vector<16xf32>
    %427 = vector.multi_reduction <add>, %426, %cst_151 [1] : vector<16x16xf32> to vector<16xf32>
    %428 = vector.shape_cast %427 : vector<16xf32> to vector<16x1xf32>
    %429 = tpu.reciprocal %428 {approx = true} : vector<16x1xf32> -> vector<16x1xf32>
    %430 = vector.broadcast %429 : vector<16x1xf32> to vector<16x16xf32>
    %431 = arith.mulf %426, %430 : vector<16x16xf32>
    %432 = arith.truncf %431 : vector<16x16xf32> to vector<16x16xbf16>
    %cst_152 = arith.constant dense<0.000000e+00> : vector<16x8xf32>
    %433 = tpu.matmul %432, %419, %cst_152 {dimension_numbers = #tpu.dot_dimension_numbers<[1], [0], [0], [1], [0, 0, 1, 1], [], []>} : vector<16x16xbf16>, vector<16x8xbf16>, vector<16x8xf32> -> vector<16x8xf32>
    %434 = arith.truncf %433 : vector<16x8xf32> to vector<16x8xbf16>
    %435 = vector.extract_strided_slice %360 {offsets = [2, 0, 0], sizes = [1, 8, 32], strides = [1, 1, 1]} : vector<4x8x32xbf16> to vector<1x8x32xbf16>
    %436 = vector.shape_cast %435 : vector<1x8x32xbf16> to vector<8x32xbf16>
    %cst_153 = arith.constant dense<0.000000e+00> : vector<16x32xf32>
    %437 = tpu.matmul %434, %436, %cst_153 {dimension_numbers = #tpu.dot_dimension_numbers<[1], [0], [0], [1], [0, 0, 1, 1], [], []>} : vector<16x8xbf16>, vector<8x32xbf16>, vector<16x32xf32> -> vector<16x32xf32>
    %438 = arith.addf %413, %437 : vector<16x32xf32>
    %439 = vector.extract_strided_slice %356 {offsets = [0, 24], sizes = [16, 8], strides = [1, 1]} : vector<16x32xf32> to vector<16x8xf32>
    %440 = arith.truncf %439 : vector<16x8xf32> to vector<16x8xbf16>
    %441 = vector.extract_strided_slice %357 {offsets = [0, 24], sizes = [16, 8], strides = [1, 1]} : vector<16x32xf32> to vector<16x8xf32>
    %442 = arith.truncf %441 : vector<16x8xf32> to vector<16x8xbf16>
    %443 = vector.extract_strided_slice %358 {offsets = [0, 24], sizes = [16, 8], strides = [1, 1]} : vector<16x32xf32> to vector<16x8xf32>
    %444 = arith.truncf %443 : vector<16x8xf32> to vector<16x8xbf16>
    %cst_154 = arith.constant dense<0.000000e+00> : vector<16x16xf32>
    %445 = tpu.matmul %440, %442, %cst_154 {dimension_numbers = #tpu.dot_dimension_numbers<[1], [1], [0], [0], [0, 0, 1, 0], [], []>} : vector<16x8xbf16>, vector<16x8xbf16>, vector<16x16xf32> -> vector<16x16xf32>
    %446 = arith.addf %445, %2 : vector<16x16xf32>
    %cst_155 = arith.constant dense<0xFF800000> : vector<16xf32>
    %447 = vector.multi_reduction <maximumf>, %446, %cst_155 [1] : vector<16x16xf32> to vector<16xf32>
    %448 = vector.shape_cast %447 : vector<16xf32> to vector<16x1xf32>
    %449 = vector.broadcast %448 : vector<16x1xf32> to vector<16x16xf32>
    %450 = arith.subf %446, %449 : vector<16x16xf32>
    %451 = math.exp %450 : vector<16x16xf32>
    %cst_156 = arith.constant dense<0.000000e+00> : vector<16xf32>
    %452 = vector.multi_reduction <add>, %451, %cst_156 [1] : vector<16x16xf32> to vector<16xf32>
    %453 = vector.shape_cast %452 : vector<16xf32> to vector<16x1xf32>
    %454 = tpu.reciprocal %453 {approx = true} : vector<16x1xf32> -> vector<16x1xf32>
    %455 = vector.broadcast %454 : vector<16x1xf32> to vector<16x16xf32>
    %456 = arith.mulf %451, %455 : vector<16x16xf32>
    %457 = arith.truncf %456 : vector<16x16xf32> to vector<16x16xbf16>
    %cst_157 = arith.constant dense<0.000000e+00> : vector<16x8xf32>
    %458 = tpu.matmul %457, %444, %cst_157 {dimension_numbers = #tpu.dot_dimension_numbers<[1], [0], [0], [1], [0, 0, 1, 1], [], []>} : vector<16x16xbf16>, vector<16x8xbf16>, vector<16x8xf32> -> vector<16x8xf32>
    %459 = arith.truncf %458 : vector<16x8xf32> to vector<16x8xbf16>
    %460 = vector.extract_strided_slice %360 {offsets = [3, 0, 0], sizes = [1, 8, 32], strides = [1, 1, 1]} : vector<4x8x32xbf16> to vector<1x8x32xbf16>
    %461 = vector.shape_cast %460 : vector<1x8x32xbf16> to vector<8x32xbf16>
    %cst_158 = arith.constant dense<0.000000e+00> : vector<16x32xf32>
    %462 = tpu.matmul %459, %461, %cst_158 {dimension_numbers = #tpu.dot_dimension_numbers<[1], [0], [0], [1], [0, 0, 1, 1], [], []>} : vector<16x8xbf16>, vector<8x32xbf16>, vector<16x32xf32> -> vector<16x32xf32>
    %463 = arith.addf %438, %462 : vector<16x32xf32>
    %464 = vector.broadcast %362 : vector<1x32xf32> to vector<16x32xf32>
    %465 = arith.addf %463, %464 : vector<16x32xf32>
    %466 = arith.addf %343, %465 : vector<16x32xf32>
    %467 = vector.extract_strided_slice %345 {offsets = [0, 0], sizes = [1, 32], strides = [1, 1]} : vector<3x32xf32> to vector<1x32xf32>
    %468 = vector.extract_strided_slice %347 {offsets = [0, 0], sizes = [1, 32], strides = [1, 1]} : vector<3x32xf32> to vector<1x32xf32>
    %cst_159 = arith.constant dense<0.000000e+00> : vector<16xf32>
    %469 = vector.multi_reduction <add>, %466, %cst_159 [1] : vector<16x32xf32> to vector<16xf32>
    %470 = vector.shape_cast %469 : vector<16xf32> to vector<16x1xf32>
    %cst_160 = arith.constant 3.200000e+01 : f32
    %471 = vector.broadcast %cst_160 : f32 to vector<16x1xf32>
    %472 = arith.divf %470, %471 : vector<16x1xf32>
    %473 = vector.broadcast %472 : vector<16x1xf32> to vector<16x32xf32>
    %474 = arith.subf %466, %473 : vector<16x32xf32>
    %475 = arith.mulf %474, %474 : vector<16x32xf32>
    %cst_161 = arith.constant dense<0.000000e+00> : vector<16xf32>
    %476 = vector.multi_reduction <add>, %475, %cst_161 [1] : vector<16x32xf32> to vector<16xf32>
    %477 = vector.shape_cast %476 : vector<16xf32> to vector<16x1xf32>
    %cst_162 = arith.constant 3.200000e+01 : f32
    %478 = vector.broadcast %cst_162 : f32 to vector<16x1xf32>
    %479 = arith.divf %477, %478 : vector<16x1xf32>
    %cst_163 = arith.constant 9.99999974E-6 : f32
    %480 = vector.broadcast %cst_163 : f32 to vector<16x1xf32>
    %481 = arith.addf %479, %480 : vector<16x1xf32>
    %482 = math.rsqrt %481 : vector<16x1xf32>
    %483 = vector.broadcast %472 : vector<16x1xf32> to vector<16x32xf32>
    %484 = arith.subf %466, %483 : vector<16x32xf32>
    %485 = vector.broadcast %482 : vector<16x1xf32> to vector<16x32xf32>
    %486 = arith.mulf %484, %485 : vector<16x32xf32>
    %487 = vector.broadcast %467 : vector<1x32xf32> to vector<16x32xf32>
    %488 = arith.mulf %486, %487 : vector<16x32xf32>
    %489 = vector.broadcast %468 : vector<1x32xf32> to vector<16x32xf32>
    %490 = arith.addf %488, %489 : vector<16x32xf32>
    %c1_164 = arith.constant 1 : index
    %c0_165 = arith.constant 0 : index
    %c0_166 = arith.constant 0 : index
    %491 = vector.load %arg8[%c1_164, %c0_165, %c0_166] : memref<2x32x32xbf16, #tpu.memory_space<vmem>>, vector<1x32x32xbf16>
    %492 = vector.shape_cast %491 : vector<1x32x32xbf16> to vector<32x32xbf16>
    %c1_167 = arith.constant 1 : index
    %c0_168 = arith.constant 0 : index
    %c0_169 = arith.constant 0 : index
    %493 = vector.load %arg9[%c1_167, %c0_168, %c0_169] : memref<2x1x32xf32, #tpu.memory_space<vmem>>, vector<1x1x32xf32>
    %494 = vector.shape_cast %493 : vector<1x1x32xf32> to vector<1x32xf32>
    %495 = arith.truncf %490 : vector<16x32xf32> to vector<16x32xbf16>
    %cst_170 = arith.constant dense<0.000000e+00> : vector<16x32xf32>
    %496 = tpu.matmul %495, %492, %cst_170 {dimension_numbers = #tpu.dot_dimension_numbers<[1], [0], [0], [1], [0, 0, 1, 1], [], []>} : vector<16x32xbf16>, vector<32x32xbf16>, vector<16x32xf32> -> vector<16x32xf32>
    %497 = vector.broadcast %494 : vector<1x32xf32> to vector<16x32xf32>
    %498 = arith.addf %496, %497 : vector<16x32xf32>
    %c1_171 = arith.constant 1 : index
    %c0_172 = arith.constant 0 : index
    %c0_173 = arith.constant 0 : index
    %499 = vector.load %arg10[%c1_171, %c0_172, %c0_173] : memref<2x32x64xbf16, #tpu.memory_space<vmem>>, vector<1x32x64xbf16>
    %500 = vector.shape_cast %499 : vector<1x32x64xbf16> to vector<32x64xbf16>
    %c1_174 = arith.constant 1 : index
    %c0_175 = arith.constant 0 : index
    %c0_176 = arith.constant 0 : index
    %501 = vector.load %arg11[%c1_174, %c0_175, %c0_176] : memref<2x1x64xf32, #tpu.memory_space<vmem>>, vector<1x1x64xf32>
    %502 = vector.shape_cast %501 : vector<1x1x64xf32> to vector<1x64xf32>
    %503 = arith.truncf %0 : vector<16x32xf32> to vector<16x32xbf16>
    %cst_177 = arith.constant dense<0.000000e+00> : vector<16x64xf32>
    %504 = tpu.matmul %503, %500, %cst_177 {dimension_numbers = #tpu.dot_dimension_numbers<[1], [0], [0], [1], [0, 0, 1, 1], [], []>} : vector<16x32xbf16>, vector<32x64xbf16>, vector<16x64xf32> -> vector<16x64xf32>
    %505 = vector.broadcast %502 : vector<1x64xf32> to vector<16x64xf32>
    %506 = arith.addf %504, %505 : vector<16x64xf32>
    %507 = vector.extract_strided_slice %506 {offsets = [0, 0], sizes = [16, 32], strides = [1, 1]} : vector<16x64xf32> to vector<16x32xf32>
    %508 = vector.extract_strided_slice %506 {offsets = [0, 32], sizes = [16, 32], strides = [1, 1]} : vector<16x64xf32> to vector<16x32xf32>
    %c1_178 = arith.constant 1 : index
    %c0_179 = arith.constant 0 : index
    %c0_180 = arith.constant 0 : index
    %c0_181 = arith.constant 0 : index
    %509 = vector.load %arg12[%c1_178, %c0_179, %c0_180, %c0_181] : memref<2x4x8x32xbf16, #tpu.memory_space<vmem>>, vector<1x4x8x32xbf16>
    %510 = vector.shape_cast %509 : vector<1x4x8x32xbf16> to vector<4x8x32xbf16>
    %c1_182 = arith.constant 1 : index
    %c0_183 = arith.constant 0 : index
    %c0_184 = arith.constant 0 : index
    %511 = vector.load %arg13[%c1_182, %c0_183, %c0_184] : memref<2x1x32xf32, #tpu.memory_space<vmem>>, vector<1x1x32xf32>
    %512 = vector.shape_cast %511 : vector<1x1x32xf32> to vector<1x32xf32>
    %cst_185 = arith.constant 0.000000e+00 : f32
    %513 = vector.broadcast %cst_185 : f32 to vector<16x32xf32>
    %514 = vector.extract_strided_slice %498 {offsets = [0, 0], sizes = [16, 8], strides = [1, 1]} : vector<16x32xf32> to vector<16x8xf32>
    %515 = arith.truncf %514 : vector<16x8xf32> to vector<16x8xbf16>
    %516 = vector.extract_strided_slice %507 {offsets = [0, 0], sizes = [16, 8], strides = [1, 1]} : vector<16x32xf32> to vector<16x8xf32>
    %517 = arith.truncf %516 : vector<16x8xf32> to vector<16x8xbf16>
    %518 = vector.extract_strided_slice %508 {offsets = [0, 0], sizes = [16, 8], strides = [1, 1]} : vector<16x32xf32> to vector<16x8xf32>
    %519 = arith.truncf %518 : vector<16x8xf32> to vector<16x8xbf16>
    %cst_186 = arith.constant dense<0.000000e+00> : vector<16x16xf32>
    %520 = tpu.matmul %515, %517, %cst_186 {dimension_numbers = #tpu.dot_dimension_numbers<[1], [1], [0], [0], [0, 0, 1, 0], [], []>} : vector<16x8xbf16>, vector<16x8xbf16>, vector<16x16xf32> -> vector<16x16xf32>
    %521 = arith.addf %520, %3 : vector<16x16xf32>
    %cst_187 = arith.constant dense<0xFF800000> : vector<16xf32>
    %522 = vector.multi_reduction <maximumf>, %521, %cst_187 [1] : vector<16x16xf32> to vector<16xf32>
    %523 = vector.shape_cast %522 : vector<16xf32> to vector<16x1xf32>
    %524 = vector.broadcast %523 : vector<16x1xf32> to vector<16x16xf32>
    %525 = arith.subf %521, %524 : vector<16x16xf32>
    %526 = math.exp %525 : vector<16x16xf32>
    %cst_188 = arith.constant dense<0.000000e+00> : vector<16xf32>
    %527 = vector.multi_reduction <add>, %526, %cst_188 [1] : vector<16x16xf32> to vector<16xf32>
    %528 = vector.shape_cast %527 : vector<16xf32> to vector<16x1xf32>
    %529 = tpu.reciprocal %528 {approx = true} : vector<16x1xf32> -> vector<16x1xf32>
    %530 = vector.broadcast %529 : vector<16x1xf32> to vector<16x16xf32>
    %531 = arith.mulf %526, %530 : vector<16x16xf32>
    %532 = arith.truncf %531 : vector<16x16xf32> to vector<16x16xbf16>
    %cst_189 = arith.constant dense<0.000000e+00> : vector<16x8xf32>
    %533 = tpu.matmul %532, %519, %cst_189 {dimension_numbers = #tpu.dot_dimension_numbers<[1], [0], [0], [1], [0, 0, 1, 1], [], []>} : vector<16x16xbf16>, vector<16x8xbf16>, vector<16x8xf32> -> vector<16x8xf32>
    %534 = arith.truncf %533 : vector<16x8xf32> to vector<16x8xbf16>
    %535 = vector.extract_strided_slice %510 {offsets = [0, 0, 0], sizes = [1, 8, 32], strides = [1, 1, 1]} : vector<4x8x32xbf16> to vector<1x8x32xbf16>
    %536 = vector.shape_cast %535 : vector<1x8x32xbf16> to vector<8x32xbf16>
    %cst_190 = arith.constant dense<0.000000e+00> : vector<16x32xf32>
    %537 = tpu.matmul %534, %536, %cst_190 {dimension_numbers = #tpu.dot_dimension_numbers<[1], [0], [0], [1], [0, 0, 1, 1], [], []>} : vector<16x8xbf16>, vector<8x32xbf16>, vector<16x32xf32> -> vector<16x32xf32>
    %538 = arith.addf %513, %537 : vector<16x32xf32>
    %539 = vector.extract_strided_slice %498 {offsets = [0, 8], sizes = [16, 8], strides = [1, 1]} : vector<16x32xf32> to vector<16x8xf32>
    %540 = arith.truncf %539 : vector<16x8xf32> to vector<16x8xbf16>
    %541 = vector.extract_strided_slice %507 {offsets = [0, 8], sizes = [16, 8], strides = [1, 1]} : vector<16x32xf32> to vector<16x8xf32>
    %542 = arith.truncf %541 : vector<16x8xf32> to vector<16x8xbf16>
    %543 = vector.extract_strided_slice %508 {offsets = [0, 8], sizes = [16, 8], strides = [1, 1]} : vector<16x32xf32> to vector<16x8xf32>
    %544 = arith.truncf %543 : vector<16x8xf32> to vector<16x8xbf16>
    %cst_191 = arith.constant dense<0.000000e+00> : vector<16x16xf32>
    %545 = tpu.matmul %540, %542, %cst_191 {dimension_numbers = #tpu.dot_dimension_numbers<[1], [1], [0], [0], [0, 0, 1, 0], [], []>} : vector<16x8xbf16>, vector<16x8xbf16>, vector<16x16xf32> -> vector<16x16xf32>
    %546 = arith.addf %545, %3 : vector<16x16xf32>
    %cst_192 = arith.constant dense<0xFF800000> : vector<16xf32>
    %547 = vector.multi_reduction <maximumf>, %546, %cst_192 [1] : vector<16x16xf32> to vector<16xf32>
    %548 = vector.shape_cast %547 : vector<16xf32> to vector<16x1xf32>
    %549 = vector.broadcast %548 : vector<16x1xf32> to vector<16x16xf32>
    %550 = arith.subf %546, %549 : vector<16x16xf32>
    %551 = math.exp %550 : vector<16x16xf32>
    %cst_193 = arith.constant dense<0.000000e+00> : vector<16xf32>
    %552 = vector.multi_reduction <add>, %551, %cst_193 [1] : vector<16x16xf32> to vector<16xf32>
    %553 = vector.shape_cast %552 : vector<16xf32> to vector<16x1xf32>
    %554 = tpu.reciprocal %553 {approx = true} : vector<16x1xf32> -> vector<16x1xf32>
    %555 = vector.broadcast %554 : vector<16x1xf32> to vector<16x16xf32>
    %556 = arith.mulf %551, %555 : vector<16x16xf32>
    %557 = arith.truncf %556 : vector<16x16xf32> to vector<16x16xbf16>
    %cst_194 = arith.constant dense<0.000000e+00> : vector<16x8xf32>
    %558 = tpu.matmul %557, %544, %cst_194 {dimension_numbers = #tpu.dot_dimension_numbers<[1], [0], [0], [1], [0, 0, 1, 1], [], []>} : vector<16x16xbf16>, vector<16x8xbf16>, vector<16x8xf32> -> vector<16x8xf32>
    %559 = arith.truncf %558 : vector<16x8xf32> to vector<16x8xbf16>
    %560 = vector.extract_strided_slice %510 {offsets = [1, 0, 0], sizes = [1, 8, 32], strides = [1, 1, 1]} : vector<4x8x32xbf16> to vector<1x8x32xbf16>
    %561 = vector.shape_cast %560 : vector<1x8x32xbf16> to vector<8x32xbf16>
    %cst_195 = arith.constant dense<0.000000e+00> : vector<16x32xf32>
    %562 = tpu.matmul %559, %561, %cst_195 {dimension_numbers = #tpu.dot_dimension_numbers<[1], [0], [0], [1], [0, 0, 1, 1], [], []>} : vector<16x8xbf16>, vector<8x32xbf16>, vector<16x32xf32> -> vector<16x32xf32>
    %563 = arith.addf %538, %562 : vector<16x32xf32>
    %564 = vector.extract_strided_slice %498 {offsets = [0, 16], sizes = [16, 8], strides = [1, 1]} : vector<16x32xf32> to vector<16x8xf32>
    %565 = arith.truncf %564 : vector<16x8xf32> to vector<16x8xbf16>
    %566 = vector.extract_strided_slice %507 {offsets = [0, 16], sizes = [16, 8], strides = [1, 1]} : vector<16x32xf32> to vector<16x8xf32>
    %567 = arith.truncf %566 : vector<16x8xf32> to vector<16x8xbf16>
    %568 = vector.extract_strided_slice %508 {offsets = [0, 16], sizes = [16, 8], strides = [1, 1]} : vector<16x32xf32> to vector<16x8xf32>
    %569 = arith.truncf %568 : vector<16x8xf32> to vector<16x8xbf16>
    %cst_196 = arith.constant dense<0.000000e+00> : vector<16x16xf32>
    %570 = tpu.matmul %565, %567, %cst_196 {dimension_numbers = #tpu.dot_dimension_numbers<[1], [1], [0], [0], [0, 0, 1, 0], [], []>} : vector<16x8xbf16>, vector<16x8xbf16>, vector<16x16xf32> -> vector<16x16xf32>
    %571 = arith.addf %570, %3 : vector<16x16xf32>
    %cst_197 = arith.constant dense<0xFF800000> : vector<16xf32>
    %572 = vector.multi_reduction <maximumf>, %571, %cst_197 [1] : vector<16x16xf32> to vector<16xf32>
    %573 = vector.shape_cast %572 : vector<16xf32> to vector<16x1xf32>
    %574 = vector.broadcast %573 : vector<16x1xf32> to vector<16x16xf32>
    %575 = arith.subf %571, %574 : vector<16x16xf32>
    %576 = math.exp %575 : vector<16x16xf32>
    %cst_198 = arith.constant dense<0.000000e+00> : vector<16xf32>
    %577 = vector.multi_reduction <add>, %576, %cst_198 [1] : vector<16x16xf32> to vector<16xf32>
    %578 = vector.shape_cast %577 : vector<16xf32> to vector<16x1xf32>
    %579 = tpu.reciprocal %578 {approx = true} : vector<16x1xf32> -> vector<16x1xf32>
    %580 = vector.broadcast %579 : vector<16x1xf32> to vector<16x16xf32>
    %581 = arith.mulf %576, %580 : vector<16x16xf32>
    %582 = arith.truncf %581 : vector<16x16xf32> to vector<16x16xbf16>
    %cst_199 = arith.constant dense<0.000000e+00> : vector<16x8xf32>
    %583 = tpu.matmul %582, %569, %cst_199 {dimension_numbers = #tpu.dot_dimension_numbers<[1], [0], [0], [1], [0, 0, 1, 1], [], []>} : vector<16x16xbf16>, vector<16x8xbf16>, vector<16x8xf32> -> vector<16x8xf32>
    %584 = arith.truncf %583 : vector<16x8xf32> to vector<16x8xbf16>
    %585 = vector.extract_strided_slice %510 {offsets = [2, 0, 0], sizes = [1, 8, 32], strides = [1, 1, 1]} : vector<4x8x32xbf16> to vector<1x8x32xbf16>
    %586 = vector.shape_cast %585 : vector<1x8x32xbf16> to vector<8x32xbf16>
    %cst_200 = arith.constant dense<0.000000e+00> : vector<16x32xf32>
    %587 = tpu.matmul %584, %586, %cst_200 {dimension_numbers = #tpu.dot_dimension_numbers<[1], [0], [0], [1], [0, 0, 1, 1], [], []>} : vector<16x8xbf16>, vector<8x32xbf16>, vector<16x32xf32> -> vector<16x32xf32>
    %588 = arith.addf %563, %587 : vector<16x32xf32>
    %589 = vector.extract_strided_slice %498 {offsets = [0, 24], sizes = [16, 8], strides = [1, 1]} : vector<16x32xf32> to vector<16x8xf32>
    %590 = arith.truncf %589 : vector<16x8xf32> to vector<16x8xbf16>
    %591 = vector.extract_strided_slice %507 {offsets = [0, 24], sizes = [16, 8], strides = [1, 1]} : vector<16x32xf32> to vector<16x8xf32>
    %592 = arith.truncf %591 : vector<16x8xf32> to vector<16x8xbf16>
    %593 = vector.extract_strided_slice %508 {offsets = [0, 24], sizes = [16, 8], strides = [1, 1]} : vector<16x32xf32> to vector<16x8xf32>
    %594 = arith.truncf %593 : vector<16x8xf32> to vector<16x8xbf16>
    %cst_201 = arith.constant dense<0.000000e+00> : vector<16x16xf32>
    %595 = tpu.matmul %590, %592, %cst_201 {dimension_numbers = #tpu.dot_dimension_numbers<[1], [1], [0], [0], [0, 0, 1, 0], [], []>} : vector<16x8xbf16>, vector<16x8xbf16>, vector<16x16xf32> -> vector<16x16xf32>
    %596 = arith.addf %595, %3 : vector<16x16xf32>
    %cst_202 = arith.constant dense<0xFF800000> : vector<16xf32>
    %597 = vector.multi_reduction <maximumf>, %596, %cst_202 [1] : vector<16x16xf32> to vector<16xf32>
    %598 = vector.shape_cast %597 : vector<16xf32> to vector<16x1xf32>
    %599 = vector.broadcast %598 : vector<16x1xf32> to vector<16x16xf32>
    %600 = arith.subf %596, %599 : vector<16x16xf32>
    %601 = math.exp %600 : vector<16x16xf32>
    %cst_203 = arith.constant dense<0.000000e+00> : vector<16xf32>
    %602 = vector.multi_reduction <add>, %601, %cst_203 [1] : vector<16x16xf32> to vector<16xf32>
    %603 = vector.shape_cast %602 : vector<16xf32> to vector<16x1xf32>
    %604 = tpu.reciprocal %603 {approx = true} : vector<16x1xf32> -> vector<16x1xf32>
    %605 = vector.broadcast %604 : vector<16x1xf32> to vector<16x16xf32>
    %606 = arith.mulf %601, %605 : vector<16x16xf32>
    %607 = arith.truncf %606 : vector<16x16xf32> to vector<16x16xbf16>
    %cst_204 = arith.constant dense<0.000000e+00> : vector<16x8xf32>
    %608 = tpu.matmul %607, %594, %cst_204 {dimension_numbers = #tpu.dot_dimension_numbers<[1], [0], [0], [1], [0, 0, 1, 1], [], []>} : vector<16x16xbf16>, vector<16x8xbf16>, vector<16x8xf32> -> vector<16x8xf32>
    %609 = arith.truncf %608 : vector<16x8xf32> to vector<16x8xbf16>
    %610 = vector.extract_strided_slice %510 {offsets = [3, 0, 0], sizes = [1, 8, 32], strides = [1, 1, 1]} : vector<4x8x32xbf16> to vector<1x8x32xbf16>
    %611 = vector.shape_cast %610 : vector<1x8x32xbf16> to vector<8x32xbf16>
    %cst_205 = arith.constant dense<0.000000e+00> : vector<16x32xf32>
    %612 = tpu.matmul %609, %611, %cst_205 {dimension_numbers = #tpu.dot_dimension_numbers<[1], [0], [0], [1], [0, 0, 1, 1], [], []>} : vector<16x8xbf16>, vector<8x32xbf16>, vector<16x32xf32> -> vector<16x32xf32>
    %613 = arith.addf %588, %612 : vector<16x32xf32>
    %614 = vector.broadcast %512 : vector<1x32xf32> to vector<16x32xf32>
    %615 = arith.addf %613, %614 : vector<16x32xf32>
    %616 = arith.addf %490, %615 : vector<16x32xf32>
    %617 = vector.extract_strided_slice %345 {offsets = [1, 0], sizes = [1, 32], strides = [1, 1]} : vector<3x32xf32> to vector<1x32xf32>
    %618 = vector.extract_strided_slice %347 {offsets = [1, 0], sizes = [1, 32], strides = [1, 1]} : vector<3x32xf32> to vector<1x32xf32>
    %cst_206 = arith.constant dense<0.000000e+00> : vector<16xf32>
    %619 = vector.multi_reduction <add>, %616, %cst_206 [1] : vector<16x32xf32> to vector<16xf32>
    %620 = vector.shape_cast %619 : vector<16xf32> to vector<16x1xf32>
    %cst_207 = arith.constant 3.200000e+01 : f32
    %621 = vector.broadcast %cst_207 : f32 to vector<16x1xf32>
    %622 = arith.divf %620, %621 : vector<16x1xf32>
    %623 = vector.broadcast %622 : vector<16x1xf32> to vector<16x32xf32>
    %624 = arith.subf %616, %623 : vector<16x32xf32>
    %625 = arith.mulf %624, %624 : vector<16x32xf32>
    %cst_208 = arith.constant dense<0.000000e+00> : vector<16xf32>
    %626 = vector.multi_reduction <add>, %625, %cst_208 [1] : vector<16x32xf32> to vector<16xf32>
    %627 = vector.shape_cast %626 : vector<16xf32> to vector<16x1xf32>
    %cst_209 = arith.constant 3.200000e+01 : f32
    %628 = vector.broadcast %cst_209 : f32 to vector<16x1xf32>
    %629 = arith.divf %627, %628 : vector<16x1xf32>
    %cst_210 = arith.constant 9.99999974E-6 : f32
    %630 = vector.broadcast %cst_210 : f32 to vector<16x1xf32>
    %631 = arith.addf %629, %630 : vector<16x1xf32>
    %632 = math.rsqrt %631 : vector<16x1xf32>
    %633 = vector.broadcast %622 : vector<16x1xf32> to vector<16x32xf32>
    %634 = arith.subf %616, %633 : vector<16x32xf32>
    %635 = vector.broadcast %632 : vector<16x1xf32> to vector<16x32xf32>
    %636 = arith.mulf %634, %635 : vector<16x32xf32>
    %637 = vector.broadcast %617 : vector<1x32xf32> to vector<16x32xf32>
    %638 = arith.mulf %636, %637 : vector<16x32xf32>
    %639 = vector.broadcast %618 : vector<1x32xf32> to vector<16x32xf32>
    %640 = arith.addf %638, %639 : vector<16x32xf32>
    %c1_211 = arith.constant 1 : index
    %c0_212 = arith.constant 0 : index
    %c0_213 = arith.constant 0 : index
    %641 = vector.load %arg14[%c1_211, %c0_212, %c0_213] : memref<2x32x64xbf16, #tpu.memory_space<vmem>>, vector<1x32x64xbf16>
    %642 = vector.shape_cast %641 : vector<1x32x64xbf16> to vector<32x64xbf16>
    %c1_214 = arith.constant 1 : index
    %c0_215 = arith.constant 0 : index
    %c0_216 = arith.constant 0 : index
    %643 = vector.load %arg15[%c1_214, %c0_215, %c0_216] : memref<2x1x64xf32, #tpu.memory_space<vmem>>, vector<1x1x64xf32>
    %644 = vector.shape_cast %643 : vector<1x1x64xf32> to vector<1x64xf32>
    %645 = arith.truncf %640 : vector<16x32xf32> to vector<16x32xbf16>
    %cst_217 = arith.constant dense<0.000000e+00> : vector<16x64xf32>
    %646 = tpu.matmul %645, %642, %cst_217 {dimension_numbers = #tpu.dot_dimension_numbers<[1], [0], [0], [1], [0, 0, 1, 1], [], []>} : vector<16x32xbf16>, vector<32x64xbf16>, vector<16x64xf32> -> vector<16x64xf32>
    %647 = vector.broadcast %644 : vector<1x64xf32> to vector<16x64xf32>
    %648 = arith.addf %646, %647 : vector<16x64xf32>
    %cst_218 = arith.constant 0.000000e+00 : f32
    %649 = vector.broadcast %cst_218 : f32 to vector<16x64xf32>
    %650 = arith.maximumf %648, %649 : vector<16x64xf32>
    %c1_219 = arith.constant 1 : index
    %c0_220 = arith.constant 0 : index
    %c0_221 = arith.constant 0 : index
    %651 = vector.load %arg16[%c1_219, %c0_220, %c0_221] : memref<2x64x32xbf16, #tpu.memory_space<vmem>>, vector<1x64x32xbf16>
    %652 = vector.shape_cast %651 : vector<1x64x32xbf16> to vector<64x32xbf16>
    %c1_222 = arith.constant 1 : index
    %c0_223 = arith.constant 0 : index
    %c0_224 = arith.constant 0 : index
    %653 = vector.load %arg17[%c1_222, %c0_223, %c0_224] : memref<2x1x32xf32, #tpu.memory_space<vmem>>, vector<1x1x32xf32>
    %654 = vector.shape_cast %653 : vector<1x1x32xf32> to vector<1x32xf32>
    %655 = arith.truncf %650 : vector<16x64xf32> to vector<16x64xbf16>
    %cst_225 = arith.constant dense<0.000000e+00> : vector<16x32xf32>
    %656 = tpu.matmul %655, %652, %cst_225 {dimension_numbers = #tpu.dot_dimension_numbers<[1], [0], [0], [1], [0, 0, 1, 1], [], []>} : vector<16x64xbf16>, vector<64x32xbf16>, vector<16x32xf32> -> vector<16x32xf32>
    %657 = vector.broadcast %654 : vector<1x32xf32> to vector<16x32xf32>
    %658 = arith.addf %656, %657 : vector<16x32xf32>
    %659 = arith.addf %640, %658 : vector<16x32xf32>
    %660 = vector.extract_strided_slice %345 {offsets = [2, 0], sizes = [1, 32], strides = [1, 1]} : vector<3x32xf32> to vector<1x32xf32>
    %661 = vector.extract_strided_slice %347 {offsets = [2, 0], sizes = [1, 32], strides = [1, 1]} : vector<3x32xf32> to vector<1x32xf32>
    %cst_226 = arith.constant dense<0.000000e+00> : vector<16xf32>
    %662 = vector.multi_reduction <add>, %659, %cst_226 [1] : vector<16x32xf32> to vector<16xf32>
    %663 = vector.shape_cast %662 : vector<16xf32> to vector<16x1xf32>
    %cst_227 = arith.constant 3.200000e+01 : f32
    %664 = vector.broadcast %cst_227 : f32 to vector<16x1xf32>
    %665 = arith.divf %663, %664 : vector<16x1xf32>
    %666 = vector.broadcast %665 : vector<16x1xf32> to vector<16x32xf32>
    %667 = arith.subf %659, %666 : vector<16x32xf32>
    %668 = arith.mulf %667, %667 : vector<16x32xf32>
    %cst_228 = arith.constant dense<0.000000e+00> : vector<16xf32>
    %669 = vector.multi_reduction <add>, %668, %cst_228 [1] : vector<16x32xf32> to vector<16xf32>
    %670 = vector.shape_cast %669 : vector<16xf32> to vector<16x1xf32>
    %cst_229 = arith.constant 3.200000e+01 : f32
    %671 = vector.broadcast %cst_229 : f32 to vector<16x1xf32>
    %672 = arith.divf %670, %671 : vector<16x1xf32>
    %cst_230 = arith.constant 9.99999974E-6 : f32
    %673 = vector.broadcast %cst_230 : f32 to vector<16x1xf32>
    %674 = arith.addf %672, %673 : vector<16x1xf32>
    %675 = math.rsqrt %674 : vector<16x1xf32>
    %676 = vector.broadcast %665 : vector<16x1xf32> to vector<16x32xf32>
    %677 = arith.subf %659, %676 : vector<16x32xf32>
    %678 = vector.broadcast %675 : vector<16x1xf32> to vector<16x32xf32>
    %679 = arith.mulf %677, %678 : vector<16x32xf32>
    %680 = vector.broadcast %660 : vector<1x32xf32> to vector<16x32xf32>
    %681 = arith.mulf %679, %680 : vector<16x32xf32>
    %682 = vector.broadcast %661 : vector<1x32xf32> to vector<16x32xf32>
    %683 = arith.addf %681, %682 : vector<16x32xf32>
    %c0_231 = arith.constant 0 : index
    %c0_232 = arith.constant 0 : index
    %684 = vector.load %arg20[%c0_231, %c0_232] : memref<16x32xf32, #tpu.memory_space<vmem>>, vector<16x32xf32>
    tpu.vector_store %arg20[%c0_231, %c0_232], %683 {strides = array<i32>} : memref<16x32xf32, #tpu.memory_space<vmem>>, vector<16x32xf32>,
    return
  }
}

</mosaic_0001>

<llo_original>
// kernel: transformer_decoder.1
$region0: #{transformer_decoder.1}
  #allocation0 [shape = 'u32[]', space=smem, size = 0x4, offset = 0x4, fixed_abs, tag = 'smem constant byte address 0x4 - core index']
  #allocation1 [shape = 'u32[144,128]{1,0:T(1,128)}', space=vmem, size = 0x12000, scoped, tag = 'internal scratch']
  %s0 = inlined_call_operand.vmem [shape: f32[16,32], index: 0, kind: input, shape index: {}]
  %s1 = inlined_call_operand.vmem [shape: f32[16,32], index: 1, kind: input, shape index: {}, may-alias: {1,20}]
  %s2 = inlined_call_operand.vmem [shape: f32[16,16], index: 2, kind: input, shape index: {}]
  %s3 = inlined_call_operand.vmem [shape: f32[16,16], index: 3, kind: input, shape index: {}]
  %s4 = inlined_call_operand.vmem [shape: bf16[2,32,96], index: 4, kind: input, shape index: {}]
  %s5 = inlined_call_operand.vmem [shape: f32[2,1,96], index: 5, kind: input, shape index: {}]
  %s6 = inlined_call_operand.vmem [shape: bf16[2,4,8,32], index: 6, kind: input, shape index: {}]
  %s7 = inlined_call_operand.vmem [shape: f32[2,1,32], index: 7, kind: input, shape index: {}]
  %s8 = inlined_call_operand.vmem [shape: bf16[2,32,32], index: 8, kind: input, shape index: {}]
  %s9 = inlined_call_operand.vmem [shape: f32[2,1,32], index: 9, kind: input, shape index: {}]
  %s10 = inlined_call_operand.vmem [shape: bf16[2,32,64], index: 10, kind: input, shape index: {}]
  %s11 = inlined_call_operand.vmem [shape: f32[2,1,64], index: 11, kind: input, shape index: {}]
  %s12 = inlined_call_operand.vmem [shape: bf16[2,4,8,32], index: 12, kind: input, shape index: {}]
  %s13 = inlined_call_operand.vmem [shape: f32[2,1,32], index: 13, kind: input, shape index: {}]
  %s14 = inlined_call_operand.vmem [shape: bf16[2,32,64], index: 14, kind: input, shape index: {}]
  %s15 = inlined_call_operand.vmem [shape: f32[2,1,64], index: 15, kind: input, shape index: {}]
  %s16 = inlined_call_operand.vmem [shape: bf16[2,64,32], index: 16, kind: input, shape index: {}]
  %s17 = inlined_call_operand.vmem [shape: f32[2,1,32], index: 17, kind: input, shape index: {}]
  %s18 = inlined_call_operand.vmem [shape: f32[2,3,32], index: 18, kind: input, shape index: {}]
  %s19 = inlined_call_operand.vmem [shape: f32[2,3,32], index: 19, kind: input, shape index: {}]
  %s20 = inlined_call_operand.vmem [shape: f32[16,32], index: 20, kind: output, shape index: {}, may-alias: {1,20}]
  %s21 = sld [smem:[#allocation0]]
  $region90: #{transformer_decoder.1} parent=0
    _
  %s23 = ssub.s32 1, %s21
  %s24 = scalar_select 0, %s23, %s21
  // Predicated region
  $region2: #{transformer_decoder.1} parent=0 // pred_check
    _
  $region3: #{transformer_decoder.1} parent=0 // pred_check_branch
    %26 = sbr.rel (0) target = $region5
  $region4: #{transformer_decoder.1} parent=0 // pred_region
    _
  $region5: #{transformer_decoder.1} parent=0 // pred_fallthru
    _
  // Predicated region
  $region6: #{transformer_decoder.1} parent=0 // pred_check
    _
  $region7: #{transformer_decoder.1} parent=0 // pred_check_branch
    %28 = sbr.rel (0) target = $region9
  $region8: #{transformer_decoder.1} parent=0 // pred_region
    _
  $region9: #{transformer_decoder.1} parent=0 // pred_fallthru
    _
  // Predicated region
  $region10: #{transformer_decoder.1} parent=0 // pred_check
    _
  $region11: #{transformer_decoder.1} parent=0 // pred_check_branch
    %30 = sbr.rel (0) target = $region13
  $region12: #{transformer_decoder.1} parent=0 // pred_region
    _
  $region13: #{transformer_decoder.1} parent=0 // pred_fallthru
    _
  // Predicated region
  $region14: #{transformer_decoder.1} parent=0 // pred_check
    _
  $region15: #{transformer_decoder.1} parent=0 // pred_check_branch
    %32 = sbr.rel (0) target = $region17
  $region16: #{transformer_decoder.1} parent=0 // pred_region
    _
  $region17: #{transformer_decoder.1} parent=0 // pred_fallthru
    _
  // Predicated region
  $region18: #{transformer_decoder.1} parent=0 // pred_check
    _
  $region19: #{transformer_decoder.1} parent=0 // pred_check_branch
    %34 = sbr.rel (0) target = $region21
  $region20: #{transformer_decoder.1} parent=0 // pred_region
    _
  $region21: #{transformer_decoder.1} parent=0 // pred_fallthru
    _
  // Predicated region
  $region22: #{transformer_decoder.1} parent=0 // pred_check
    _
  $region23: #{transformer_decoder.1} parent=0 // pred_check_branch
    %36 = sbr.rel (0) target = $region25
  $region24: #{transformer_decoder.1} parent=0 // pred_region
    _
  $region25: #{transformer_decoder.1} parent=0 // pred_fallthru
    _
  // Predicated region
  $region26: #{transformer_decoder.1} parent=0 // pred_check
    _
  $region27: #{transformer_decoder.1} parent=0 // pred_check_branch
    %38 = sbr.rel (0) target = $region29
  $region28: #{transformer_decoder.1} parent=0 // pred_region
    _
  $region29: #{transformer_decoder.1} parent=0 // pred_fallthru
    _
  // Predicated region
  $region30: #{transformer_decoder.1} parent=0 // pred_check
    _
  $region31: #{transformer_decoder.1} parent=0 // pred_check_branch
    %40 = sbr.rel (0) target = $region33
  $region32: #{transformer_decoder.1} parent=0 // pred_region
    _
  $region33: #{transformer_decoder.1} parent=0 // pred_fallthru
    _
  // Predicated region
  $region34: #{transformer_decoder.1} parent=0 // pred_check
    _
  $region35: #{transformer_decoder.1} parent=0 // pred_check_branch
    %42 = sbr.rel (0) target = $region37
  $region36: #{transformer_decoder.1} parent=0 // pred_region
    _
  $region37: #{transformer_decoder.1} parent=0 // pred_fallthru
    _
  // Predicated region
  $region38: #{transformer_decoder.1} parent=0 // pred_check
    _
  $region39: #{transformer_decoder.1} parent=0 // pred_check_branch
    %44 = sbr.rel (0) target = $region41
  $region40: #{transformer_decoder.1} parent=0 // pred_region
    _
  $region41: #{transformer_decoder.1} parent=0 // pred_fallthru
    _
  // Predicated region
  $region42: #{transformer_decoder.1} parent=0 // pred_check
    _
  $region43: #{transformer_decoder.1} parent=0 // pred_check_branch
    %46 = sbr.rel (0) target = $region45
  $region44: #{transformer_decoder.1} parent=0 // pred_region
    _
  $region45: #{transformer_decoder.1} parent=0 // pred_fallthru
    _
  // Predicated region
  $region46: #{transformer_decoder.1} parent=0 // pred_check
    _
  $region47: #{transformer_decoder.1} parent=0 // pred_check_branch
    %48 = sbr.rel (0) target = $region49
  $region48: #{transformer_decoder.1} parent=0 // pred_region
    _
  $region49: #{transformer_decoder.1} parent=0 // pred_fallthru
    _
  // Predicated region
  $region50: #{transformer_decoder.1} parent=0 // pred_check
    _
  $region51: #{transformer_decoder.1} parent=0 // pred_check_branch
    %50 = sbr.rel (0) target = $region53
  $region52: #{transformer_decoder.1} parent=0 // pred_region
    _
  $region53: #{transformer_decoder.1} parent=0 // pred_fallthru
    _
  // Predicated region
  $region54: #{transformer_decoder.1} parent=0 // pred_check
    _
  $region55: #{transformer_decoder.1} parent=0 // pred_check_branch
    %52 = sbr.rel (0) target = $region57
  $region56: #{transformer_decoder.1} parent=0 // pred_region
    _
  $region57: #{transformer_decoder.1} parent=0 // pred_fallthru
    _
  // Predicated region
  $region58: #{transformer_decoder.1} parent=0 // pred_check
    _
  $region59: #{transformer_decoder.1} parent=0 // pred_check_branch
    %54 = sbr.rel (0) target = $region61
  $region60: #{transformer_decoder.1} parent=0 // pred_region
    _
  $region61: #{transformer_decoder.1} parent=0 // pred_fallthru
    _
  // Predicated region
  $region62: #{transformer_decoder.1} parent=0 // pred_check
    _
  $region63: #{transformer_decoder.1} parent=0 // pred_check_branch
    %56 = sbr.rel (0) target = $region65
  $region64: #{transformer_decoder.1} parent=0 // pred_region
    _
  $region65: #{transformer_decoder.1} parent=0 // pred_fallthru
    _
  // Predicated region
  $region66: #{transformer_decoder.1} parent=0 // pred_check
    _
  $region67: #{transformer_decoder.1} parent=0 // pred_check_branch
    %58 = sbr.rel (0) target = $region69
  $region68: #{transformer_decoder.1} parent=0 // pred_region
    _
  $region69: #{transformer_decoder.1} parent=0 // pred_fallthru
    _
  // Predicated region
  $region70: #{transformer_decoder.1} parent=0 // pred_check
    _
  $region71: #{transformer_decoder.1} parent=0 // pred_check_branch
    %60 = sbr.rel (0) target = $region73
  $region72: #{transformer_decoder.1} parent=0 // pred_region
    _
  $region73: #{transformer_decoder.1} parent=0 // pred_fallthru
    _
  // Predicated region
  $region74: #{transformer_decoder.1} parent=0 // pred_check
    _
  $region75: #{transformer_decoder.1} parent=0 // pred_check_branch
    %62 = sbr.rel (0) target = $region77
  $region76: #{transformer_decoder.1} parent=0 // pred_region
    _
  $region77: #{transformer_decoder.1} parent=0 // pred_fallthru
    _
  // Predicated region
  $region78: #{transformer_decoder.1} parent=0 // pred_check
    _
  $region79: #{transformer_decoder.1} parent=0 // pred_check_branch
    %64 = sbr.rel (0) target = $region81
  $region80: #{transformer_decoder.1} parent=0 // pred_region
    _
  $region81: #{transformer_decoder.1} parent=0 // pred_fallthru
    _
  %v66 = vld [vmem:[%s0] sm:$0xff]
  %v67 = vld [vmem:[%s0 + $0x8] sm:$0xff]
  %v68 = vld [vmem:[%s1] sm:$0xff]
  %v69 = vld [vmem:[%s1 + $0x8] sm:$0xff]
  %v70 = vld [vmem:[%s2] sm:$0xff]
  %v71 = vld [vmem:[%s2 + $0x8] sm:$0xff]
  %v72 = vld [vmem:[%s3] sm:$0xff]
  %v73 = vld [vmem:[%s3 + $0x8] sm:$0xff]
  %v74 = vld [vmem:[%s18] sm:$0x7]
  %v75 = vld [vmem:[%s19] sm:$0x7]
  %v76 = vld [vmem:[%s4] sm:$0xf]
  %v77 = vld [vmem:[%s4 + $0x4] sm:$0xf]
  %v78 = vld [vmem:[%s4 + $0x8] sm:$0xf]
  %v79 = vld [vmem:[%s4 + $0xc] sm:$0xf]
  %v80 = vld [vmem:[%s5] sm:$0x1]
  %v81 = vpack.c.bf16 %v69, %v68
  %v83 = vlaneseq
  %v84 = vshrl.u32 %v83, 7
  %v85 = vsub.s32 0, %v84
  %v86 = vrot.slane %v80, %v85
  %v92 = vunpack.c.l.b16 %v76
  %v93 = vunpack.c.l.b16 %v77
  %v94 = vunpack.c.l.b16 %v78
  %v95 = vunpack.c.l.b16 %v79
  %v96 = vpack.c.b16 %v93, %v92
  %v97 = vpack.c.b16 %v95, %v94
  %vm100 = vcmask 261120
  %v102 = vsel %vm100, %v81, 0
  %104 = vmatprep.subr.bf16.mxu0 0
  %105 = vmatpush1.bf16.msra.mxu0 %v96
  %106 = vmatprep.subr.bf16.mxu0 0
  %107 = vmatpush1.bf16.msra.mxu0 %v97
  %108 = vmatprep.subr.bf16.mxu0 0
  %109 = vmatpush1.bf16.msra.mxu0 0
  %110 = vmatprep.subr.bf16.mxu0 0
  %111 = vmatpush1.bf16.msra.mxu0 0
  %112 = vmatprep.subr.bf16.mxu0 0
  %113 = vmatpush1.bf16.msra.mxu0 0
  %114 = vmatprep.subr.bf16.mxu0 0
  %115 = vmatpush1.bf16.msra.mxu0 0
  %116 = vmatprep.subr.bf16.mxu0 0
  %117 = vmatpush1.bf16.msra.mxu0 0
  %118 = vmatprep.subr.bf16.mxu0 0
  %119 = vmatpush1.bf16.msra.mxu0 0
  %120 = vmatprep.subr.bf16.mxu0 0
  %121 = vmatpush1.bf16.msra.mxu0 0
  %122 = vmatprep.subr.bf16.mxu0 0
  %123 = vmatpush1.bf16.msra.mxu0 0
  %124 = vmatprep.subr.bf16.mxu0 0
  %125 = vmatpush1.bf16.msra.mxu0 0
  %126 = vmatprep.subr.bf16.mxu0 0
  %127 = vmatpush1.bf16.msra.mxu0 0
  %128 = vmatprep.subr.bf16.mxu0 0
  %129 = vmatpush1.bf16.msra.mxu0 0
  %130 = vmatprep.subr.bf16.mxu0 0
  %131 = vmatpush1.bf16.msra.mxu0 0
  %132 = vmatprep.subr.bf16.mxu0 0
  %133 = vmatpush1.bf16.msra.mxu0 0
  %134 = vmatprep.subr.bf16.mxu0 0
  %135 = vmatpush1.bf16.msra.mxu0 0
  %136 = vmatprep.mubr.bf16.mxu0 0
  %137 = vmatmul.mubr.bf16.gmra.mrb[0].mxu0 %v102
  %v138 = vpop.f32.mrb[0].mxu0
  %v139 = vadd.f32 %v86, %v138
  %v140 = vpop.f32.mrb[0].mxu0
  %v141 = vpop.f32.mrb[0].mxu0
  %v142 = vadd.f32 %v86, %v141
  %v143 = vpop.f32.mrb[0].mxu0
  %144 = vdwg.mxu0
  %v145 = vld [vmem:[%s6] sm:$0xf]
  %v146 = vld [vmem:[%s6 + $0x4] sm:$0xf]
  %v147 = vld [vmem:[%s6 + $0x8] sm:$0xf]
  %v148 = vld [vmem:[%s6 + $0xc] sm:$0xf]
  %v149 = vld [vmem:[%s7] sm:$0x1]
  %v150 = vpack.c.bf16 %v142, %v139
  %152 = vrot.lane.b32.xlu0 %v150, 96
  %v153 = vpop.permute.xlu0 %152
  %vm154 = vcmask 64512
  %v156 = vsel %vm154, %v150, 0
  %v159 = vsel %vm154, %v153, 0
  %161 = vmatprep.subr.bf16.mxu0 0
  %162 = vmatpush1.bf16.xpose.msra.mxu0 %v159
  %163 = vmatprep.subr.bf16.mxu0 0
  %164 = vmatpush1.bf16.xpose.msra.mxu0 0
  %165 = vmatprep.subr.bf16.mxu0 0
  %166 = vmatpush1.bf16.xpose.msra.mxu0 0
  %167 = vmatprep.subr.bf16.mxu0 0
  %168 = vmatpush1.bf16.xpose.msra.mxu0 0
  %169 = vmatprep.subr.bf16.mxu0 0
  %170 = vmatpush1.bf16.xpose.msra.mxu0 0
  %171 = vmatprep.subr.bf16.mxu0 0
  %172 = vmatpush1.bf16.xpose.msra.mxu0 0
  %173 = vmatprep.subr.bf16.mxu0 0
  %174 = vmatpush1.bf16.xpose.msra.mxu0 0
  %175 = vmatprep.subr.bf16.mxu0 0
  %176 = vmatpush1.bf16.xpose.msra.mxu0 0
  %177 = vmatprep.subr.bf16.mxu0 0
  %178 = vmatpush1.bf16.xpose.msra.mxu0 0
  %179 = vmatprep.subr.bf16.mxu0 0
  %180 = vmatpush1.bf16.xpose.msra.mxu0 0
  %181 = vmatprep.subr.bf16.mxu0 0
  %182 = vmatpush1.bf16.xpose.msra.mxu0 0
  %183 = vmatprep.subr.bf16.mxu0 0
  %184 = vmatpush1.bf16.xpose.msra.mxu0 0
  %185 = vmatprep.subr.bf16.mxu0 0
  %186 = vmatpush1.bf16.xpose.msra.mxu0 0
  %187 = vmatprep.subr.bf16.mxu0 0
  %188 = vmatpush1.bf16.xpose.msra.mxu0 0
  %189 = vmatprep.subr.bf16.mxu0 0
  %190 = vmatpush1.bf16.xpose.msra.mxu0 0
  %191 = vmatprep.subr.bf16.mxu0 0
  %192 = vmatpush1.bf16.xpose.msra.mxu0 0
  %193 = vmatprep.mubr.bf16.mxu0 0
  %194 = vmatmul.mubr.bf16.gmra.mrb[0].mxu0 %v156
  %v195 = vpop.f32.mrb[0].mxu0
  %v196 = vadd.f32 %v70, %v195
  %v197 = vpop.f32.mrb[0].mxu0
  %v198 = vpop.f32.mrb[0].mxu0
  %v199 = vadd.f32 %v71, %v198
  %v200 = vpop.f32.mrb[0].mxu0
  %201 = vdwg.mxu0
  %vm202 = vcmask 130048
  %v203 = vsel %vm202, %v196, -inf
  %204 = vmax.xlane.f32.xlu0 %v203
  %v205 = vpop.xlane.xlu0 %204
  %v206 = vsel %vm202, %v199, -inf
  %207 = vmax.xlane.f32.xlu0 %v206
  %v208 = vpop.xlane.xlu0 %207
  %v209 = vsub.f32 %v196, %v205
  %v210 = vsub.f32 %v199, %v208
  %v211 = vmul.f32 %v209, 1.442695
  %v212 = vpow.pop %v211
  %v213 = vmul.f32 %v210, 1.442695
  %v214 = vpow.pop %v213
  %v215 = vsel %vm202, %v212, 0.0
  %216 = vadd.xlane.f32.xlu0 %v215
  %v217 = vpop.xlane.xlu0 %216
  %v218 = vsel %vm202, %v214, 0.0
  %219 = vadd.xlane.f32.xlu0 %v218
  %v220 = vpop.xlane.xlu0 %219
  %v221 = vrcp.pop %v217
  %v222 = vrcp.pop %v220
  %v223 = vmul.f32 %v212, %v221
  %v224 = vmul.f32 %v214, %v222
  %v225 = vpack.c.bf16 %v224, %v223
  %226 = vrot.lane.b32.xlu0 %v150, 64
  %v227 = vpop.permute.xlu0 %226
  %v230 = vsel %vm202, %v225, 0
  %232 = vmatprep.subr.bf16.mxu0 0
  %233 = vmatpush1.bf16.msra.mxu0 %v227
  %234 = vmatprep.subr.bf16.mxu0 0
  %235 = vmatpush1.bf16.msra.mxu0 0
  %236 = vmatprep.subr.bf16.mxu0 0
  %237 = vmatpush1.bf16.msra.mxu0 0
  %238 = vmatprep.subr.bf16.mxu0 0
  %239 = vmatpush1.bf16.msra.mxu0 0
  %240 = vmatprep.subr.bf16.mxu0 0
  %241 = vmatpush1.bf16.msra.mxu0 0
  %242 = vmatprep.subr.bf16.mxu0 0
  %243 = vmatpush1.bf16.msra.mxu0 0
  %244 = vmatprep.subr.bf16.mxu0 0
  %245 = vmatpush1.bf16.msra.mxu0 0
  %246 = vmatprep.subr.bf16.mxu0 0
  %247 = vmatpush1.bf16.msra.mxu0 0
  %248 = vmatprep.subr.bf16.mxu0 0
  %249 = vmatpush1.bf16.msra.mxu0 0
  %250 = vmatprep.subr.bf16.mxu0 0
  %251 = vmatpush1.bf16.msra.mxu0 0
  %252 = vmatprep.subr.bf16.mxu0 0
  %253 = vmatpush1.bf16.msra.mxu0 0
  %254 = vmatprep.subr.bf16.mxu0 0
  %255 = vmatpush1.bf16.msra.mxu0 0
  %256 = vmatprep.subr.bf16.mxu0 0
  %257 = vmatpush1.bf16.msra.mxu0 0
  %258 = vmatprep.subr.bf16.mxu0 0
  %259 = vmatpush1.bf16.msra.mxu0 0
  %260 = vmatprep.subr.bf16.mxu0 0
  %261 = vmatpush1.bf16.msra.mxu0 0
  %262 = vmatprep.subr.bf16.mxu0 0
  %263 = vmatpush1.bf16.msra.mxu0 0
  %264 = vmatprep.mubr.bf16.mxu0 0
  %265 = vmatmul.mubr.bf16.gmra.mrb[0].mxu0 %v230
  %v266 = vpop.f32.mrb[0].mxu0
  %v267 = vadd.f32 0.0, %v266
  %v268 = vpop.f32.mrb[0].mxu0
  %v269 = vpop.f32.mrb[0].mxu0
  %v270 = vadd.f32 0.0, %v269
  %v271 = vpop.f32.mrb[0].mxu0
  %272 = vdwg.mxu0
  %v273 = vpack.c.bf16 %v270, %v267
  %274 = vrot.lane.b32.xlu0 %v150, 120
  %v275 = vpop.permute.xlu0 %274
  %276 = vrot.lane.b32.xlu0 %v150, 88
  %v277 = vpop.permute.xlu0 %276
  %v279 = vsel %vm154, %v275, 0
  %v282 = vsel %vm154, %v277, 0
  %284 = vmatprep.subr.bf16.mxu0 0
  %285 = vmatpush1.bf16.xpose.msra.mxu0 %v282
  %286 = vmatprep.subr.bf16.mxu0 0
  %287 = vmatpush1.bf16.xpose.msra.mxu0 0
  %288 = vmatprep.subr.bf16.mxu0 0
  %289 = vmatpush1.bf16.xpose.msra.mxu0 0
  %290 = vmatprep.subr.bf16.mxu0 0
  %291 = vmatpush1.bf16.xpose.msra.mxu0 0
  %292 = vmatprep.subr.bf16.mxu0 0
  %293 = vmatpush1.bf16.xpose.msra.mxu0 0
  %294 = vmatprep.subr.bf16.mxu0 0
  %295 = vmatpush1.bf16.xpose.msra.mxu0 0
  %296 = vmatprep.subr.bf16.mxu0 0
  %297 = vmatpush1.bf16.xpose.msra.mxu0 0
  %298 = vmatprep.subr.bf16.mxu0 0
  %299 = vmatpush1.bf16.xpose.msra.mxu0 0
  %300 = vmatprep.subr.bf16.mxu0 0
  %301 = vmatpush1.bf16.xpose.msra.mxu0 0
  %302 = vmatprep.subr.bf16.mxu0 0
  %303 = vmatpush1.bf16.xpose.msra.mxu0 0
  %304 = vmatprep.subr.bf16.mxu0 0
  %305 = vmatpush1.bf16.xpose.msra.mxu0 0
  %306 = vmatprep.subr.bf16.mxu0 0
  %307 = vmatpush1.bf16.xpose.msra.mxu0 0
  %308 = vmatprep.subr.bf16.mxu0 0
  %309 = vmatpush1.bf16.xpose.msra.mxu0 0
  %310 = vmatprep.subr.bf16.mxu0 0
  %311 = vmatpush1.bf16.xpose.msra.mxu0 0
  %312 = vmatprep.subr.bf16.mxu0 0
  %313 = vmatpush1.bf16.xpose.msra.mxu0 0
  %314 = vmatprep.subr.bf16.mxu0 0
  %315 = vmatpush1.bf16.xpose.msra.mxu0 0
  %316 = vmatprep.mubr.bf16.mxu0 0
  %317 = vmatmul.mubr.bf16.gmra.mrb[0].mxu0 %v279
  %v318 = vpop.f32.mrb[0].mxu0
  %v319 = vadd.f32 %v70, %v318
  %v320 = vpop.f32.mrb[0].mxu0
  %v321 = vpop.f32.mrb[0].mxu0
  %v322 = vadd.f32 %v71, %v321
  %v323 = vpop.f32.mrb[0].mxu0
  %324 = vdwg.mxu0
  %v325 = vsel %vm202, %v319, -inf
  %326 = vmax.xlane.f32.xlu0 %v325
  %v327 = vpop.xlane.xlu0 %326
  %v328 = vsel %vm202, %v322, -inf
  %329 = vmax.xlane.f32.xlu0 %v328
  %v330 = vpop.xlane.xlu0 %329
  %v331 = vsub.f32 %v319, %v327
  %v332 = vsub.f32 %v322, %v330
  %v333 = vmul.f32 %v331, 1.442695
  %v334 = vpow.pop %v333
  %v335 = vmul.f32 %v332, 1.442695
  %v336 = vpow.pop %v335
  %v337 = vsel %vm202, %v334, 0.0
  %338 = vadd.xlane.f32.xlu0 %v337
  %v339 = vpop.xlane.xlu0 %338
  %v340 = vsel %vm202, %v336, 0.0
  %341 = vadd.xlane.f32.xlu0 %v340
  %v342 = vpop.xlane.xlu0 %341
  %v343 = vrcp.pop %v339
  %v344 = vrcp.pop %v342
  %v345 = vmul.f32 %v334, %v343
  %v346 = vmul.f32 %v336, %v344
  %v347 = vpack.c.bf16 %v346, %v345
  %348 = vrot.lane.b32.xlu0 %v150, 56
  %v349 = vpop.permute.xlu0 %348
  %v352 = vsel %vm202, %v347, 0
  %354 = vmatprep.subr.bf16.mxu0 0
  %355 = vmatpush1.bf16.msra.mxu0 %v349
  %356 = vmatprep.subr.bf16.mxu0 0
  %357 = vmatpush1.bf16.msra.mxu0 0
  %358 = vmatprep.subr.bf16.mxu0 0
  %359 = vmatpush1.bf16.msra.mxu0 0
  %360 = vmatprep.subr.bf16.mxu0 0
  %361 = vmatpush1.bf16.msra.mxu0 0
  %362 = vmatprep.subr.bf16.mxu0 0
  %363 = vmatpush1.bf16.msra.mxu0 0
  %364 = vmatprep.subr.bf16.mxu0 0
  %365 = vmatpush1.bf16.msra.mxu0 0
  %366 = vmatprep.subr.bf16.mxu0 0
  %367 = vmatpush1.bf16.msra.mxu0 0
  %368 = vmatprep.subr.bf16.mxu0 0
  %369 = vmatpush1.bf16.msra.mxu0 0
  %370 = vmatprep.subr.bf16.mxu0 0
  %371 = vmatpush1.bf16.msra.mxu0 0
  %372 = vmatprep.subr.bf16.mxu0 0
  %373 = vmatpush1.bf16.msra.mxu0 0
  %374 = vmatprep.subr.bf16.mxu0 0
  %375 = vmatpush1.bf16.msra.mxu0 0
  %376 = vmatprep.subr.bf16.mxu0 0
  %377 = vmatpush1.bf16.msra.mxu0 0
  %378 = vmatprep.subr.bf16.mxu0 0
  %379 = vmatpush1.bf16.msra.mxu0 0
  %380 = vmatprep.subr.bf16.mxu0 0
  %381 = vmatpush1.bf16.msra.mxu0 0
  %382 = vmatprep.subr.bf16.mxu0 0
  %383 = vmatpush1.bf16.msra.mxu0 0
  %384 = vmatprep.subr.bf16.mxu0 0
  %385 = vmatpush1.bf16.msra.mxu0 0
  %386 = vmatprep.mubr.bf16.mxu0 0
  %387 = vmatmul.mubr.bf16.gmra.mrb[0].mxu0 %v352
  %v388 = vpop.f32.mrb[0].mxu0
  %v389 = vadd.f32 0.0, %v388
  %v390 = vpop.f32.mrb[0].mxu0
  %v391 = vpop.f32.mrb[0].mxu0
  %v392 = vadd.f32 0.0, %v391
  %v393 = vpop.f32.mrb[0].mxu0
  %394 = vdwg.mxu0
  %v395 = vpack.c.bf16 %v392, %v389
  %v397 = vsel %vm154, %v395, 0
  %vm399 = vcmask 1043456
  %v401 = vsel %vm399, %v146, 0
  %403 = vmatprep.subr.bf16.mxu0 0
  %404 = vmatpush1.bf16.msra.mxu0 %v401
  %405 = vmatprep.subr.bf16.mxu0 0
  %406 = vmatpush1.bf16.msra.mxu0 0
  %407 = vmatprep.subr.bf16.mxu0 0
  %408 = vmatpush1.bf16.msra.mxu0 0
  %409 = vmatprep.subr.bf16.mxu0 0
  %410 = vmatpush1.bf16.msra.mxu0 0
  %411 = vmatprep.subr.bf16.mxu0 0
  %412 = vmatpush1.bf16.msra.mxu0 0
  %413 = vmatprep.subr.bf16.mxu0 0
  %414 = vmatpush1.bf16.msra.mxu0 0
  %415 = vmatprep.subr.bf16.mxu0 0
  %416 = vmatpush1.bf16.msra.mxu0 0
  %417 = vmatprep.subr.bf16.mxu0 0
  %418 = vmatpush1.bf16.msra.mxu0 0
  %419 = vmatprep.subr.bf16.mxu0 0
  %420 = vmatpush1.bf16.msra.mxu0 0
  %421 = vmatprep.subr.bf16.mxu0 0
  %422 = vmatpush1.bf16.msra.mxu0 0
  %423 = vmatprep.subr.bf16.mxu0 0
  %424 = vmatpush1.bf16.msra.mxu0 0
  %425 = vmatprep.subr.bf16.mxu0 0
  %426 = vmatpush1.bf16.msra.mxu0 0
  %427 = vmatprep.subr.bf16.mxu0 0
  %428 = vmatpush1.bf16.msra.mxu0 0
  %429 = vmatprep.subr.bf16.mxu0 0
  %430 = vmatpush1.bf16.msra.mxu0 0
  %431 = vmatprep.subr.bf16.mxu0 0
  %432 = vmatpush1.bf16.msra.mxu0 0
  %433 = vmatprep.subr.bf16.mxu0 0
  %434 = vmatpush1.bf16.msra.mxu0 0
  %435 = vmatprep.mubr.bf16.mxu0 0
  %436 = vmatmul.mubr.bf16.gmra.mrb[0].mxu0 %v397
  %v437 = vpop.f32.mrb[0].mxu0
  %v438 = vadd.f32 0.0, %v437
  %v439 = vpop.f32.mrb[0].mxu0
  %v440 = vpop.f32.mrb[0].mxu0
  %v441 = vadd.f32 0.0, %v440
  %v442 = vpop.f32.mrb[0].mxu0
  %443 = vdwg.mxu0
  %v445 = vsel %vm154, %v273, 0
  %v448 = vsel %vm399, %v145, 0
  %450 = vmatprep.subr.bf16.mxu0 0
  %451 = vmatpush1.bf16.msra.mxu0 %v448
  %452 = vmatprep.subr.bf16.mxu0 0
  %453 = vmatpush1.bf16.msra.mxu0 0
  %454 = vmatprep.subr.bf16.mxu0 0
  %455 = vmatpush1.bf16.msra.mxu0 0
  %456 = vmatprep.subr.bf16.mxu0 0
  %457 = vmatpush1.bf16.msra.mxu0 0
  %458 = vmatprep.subr.bf16.mxu0 0
  %459 = vmatpush1.bf16.msra.mxu0 0
  %460 = vmatprep.subr.bf16.mxu0 0
  %461 = vmatpush1.bf16.msra.mxu0 0
  %462 = vmatprep.subr.bf16.mxu0 0
  %463 = vmatpush1.bf16.msra.mxu0 0
  %464 = vmatprep.subr.bf16.mxu0 0
  %465 = vmatpush1.bf16.msra.mxu0 0
  %466 = vmatprep.subr.bf16.mxu0 0
  %467 = vmatpush1.bf16.msra.mxu0 0
  %468 = vmatprep.subr.bf16.mxu0 0
  %469 = vmatpush1.bf16.msra.mxu0 0
  %470 = vmatprep.subr.bf16.mxu0 0
  %471 = vmatpush1.bf16.msra.mxu0 0
  %472 = vmatprep.subr.bf16.mxu0 0
  %473 = vmatpush1.bf16.msra.mxu0 0
  %474 = vmatprep.subr.bf16.mxu0 0
  %475 = vmatpush1.bf16.msra.mxu0 0
  %476 = vmatprep.subr.bf16.mxu0 0
  %477 = vmatpush1.bf16.msra.mxu0 0
  %478 = vmatprep.subr.bf16.mxu0 0
  %479 = vmatpush1.bf16.msra.mxu0 0
  %480 = vmatprep.subr.bf16.mxu0 0
  %481 = vmatpush1.bf16.msra.mxu0 0
  %482 = vmatprep.mubr.bf16.mxu0 0
  %483 = vmatmul.mubr.bf16.gmra.mrb[0].mxu0 %v445
  %v484 = vpop.f32.mrb[0].mxu0
  %v485 = vadd.f32 %v438, %v484
  %v486 = vpop.f32.mrb[0].mxu0
  %v487 = vpop.f32.mrb[0].mxu0
  %v488 = vadd.f32 %v441, %v487
  %v489 = vpop.f32.mrb[0].mxu0
  %490 = vdwg.mxu0
  %491 = vrot.lane.b32.xlu0 %v150, 112
  %v492 = vpop.permute.xlu0 %491
  %493 = vrot.lane.b32.xlu0 %v150, 80
  %v494 = vpop.permute.xlu0 %493
  %v496 = vsel %vm154, %v492, 0
  %v499 = vsel %vm154, %v494, 0
  %501 = vmatprep.subr.bf16.mxu0 0
  %502 = vmatpush1.bf16.xpose.msra.mxu0 %v499
  %503 = vmatprep.subr.bf16.mxu0 0
  %504 = vmatpush1.bf16.xpose.msra.mxu0 0
  %505 = vmatprep.subr.bf16.mxu0 0
  %506 = vmatpush1.bf16.xpose.msra.mxu0 0
  %507 = vmatprep.subr.bf16.mxu0 0
  %508 = vmatpush1.bf16.xpose.msra.mxu0 0
  %509 = vmatprep.subr.bf16.mxu0 0
  %510 = vmatpush1.bf16.xpose.msra.mxu0 0
  %511 = vmatprep.subr.bf16.mxu0 0
  %512 = vmatpush1.bf16.xpose.msra.mxu0 0
  %513 = vmatprep.subr.bf16.mxu0 0
  %514 = vmatpush1.bf16.xpose.msra.mxu0 0
  %515 = vmatprep.subr.bf16.mxu0 0
  %516 = vmatpush1.bf16.xpose.msra.mxu0 0
  %517 = vmatprep.subr.bf16.mxu0 0
  %518 = vmatpush1.bf16.xpose.msra.mxu0 0
  %519 = vmatprep.subr.bf16.mxu0 0
  %520 = vmatpush1.bf16.xpose.msra.mxu0 0
  %521 = vmatprep.subr.bf16.mxu0 0
  %522 = vmatpush1.bf16.xpose.msra.mxu0 0
  %523 = vmatprep.subr.bf16.mxu0 0
  %524 = vmatpush1.bf16.xpose.msra.mxu0 0
  %525 = vmatprep.subr.bf16.mxu0 0
  %526 = vmatpush1.bf16.xpose.msra.mxu0 0
  %527 = vmatprep.subr.bf16.mxu0 0
  %528 = vmatpush1.bf16.xpose.msra.mxu0 0
  %529 = vmatprep.subr.bf16.mxu0 0
  %530 = vmatpush1.bf16.xpose.msra.mxu0 0
  %531 = vmatprep.subr.bf16.mxu0 0
  %532 = vmatpush1.bf16.xpose.msra.mxu0 0
  %533 = vmatprep.mubr.bf16.mxu0 0
  %534 = vmatmul.mubr.bf16.gmra.mrb[0].mxu0 %v496
  %v535 = vpop.f32.mrb[0].mxu0
  %v536 = vadd.f32 %v70, %v535
  %v537 = vpop.f32.mrb[0].mxu0
  %v538 = vpop.f32.mrb[0].mxu0
  %v539 = vadd.f32 %v71, %v538
  %v540 = vpop.f32.mrb[0].mxu0
  %541 = vdwg.mxu0
  %v542 = vsel %vm202, %v536, -inf
  %543 = vmax.xlane.f32.xlu0 %v542
  %v544 = vpop.xlane.xlu0 %543
  %v545 = vsel %vm202, %v539, -inf
  %546 = vmax.xlane.f32.xlu0 %v545
  %v547 = vpop.xlane.xlu0 %546
  %v548 = vsub.f32 %v536, %v544
  %v549 = vsub.f32 %v539, %v547
  %v550 = vmul.f32 %v548, 1.442695
  %v551 = vpow.pop %v550
  %v552 = vmul.f32 %v549, 1.442695
  %v553 = vpow.pop %v552
  %v554 = vsel %vm202, %v551, 0.0
  %555 = vadd.xlane.f32.xlu0 %v554
  %v556 = vpop.xlane.xlu0 %555
  %v557 = vsel %vm202, %v553, 0.0
  %558 = vadd.xlane.f32.xlu0 %v557
  %v559 = vpop.xlane.xlu0 %558
  %v560 = vrcp.pop %v556
  %v561 = vrcp.pop %v559
  %v562 = vmul.f32 %v551, %v560
  %v563 = vmul.f32 %v553, %v561
  %v564 = vpack.c.bf16 %v563, %v562
  %565 = vrot.lane.b32.xlu0 %v150, 48
  %v566 = vpop.permute.xlu0 %565
  %v569 = vsel %vm202, %v564, 0
  %571 = vmatprep.subr.bf16.mxu0 0
  %572 = vmatpush1.bf16.msra.mxu0 %v566
  %573 = vmatprep.subr.bf16.mxu0 0
  %574 = vmatpush1.bf16.msra.mxu0 0
  %575 = vmatprep.subr.bf16.mxu0 0
  %576 = vmatpush1.bf16.msra.mxu0 0
  %577 = vmatprep.subr.bf16.mxu0 0
  %578 = vmatpush1.bf16.msra.mxu0 0
  %579 = vmatprep.subr.bf16.mxu0 0
  %580 = vmatpush1.bf16.msra.mxu0 0
  %581 = vmatprep.subr.bf16.mxu0 0
  %582 = vmatpush1.bf16.msra.mxu0 0
  %583 = vmatprep.subr.bf16.mxu0 0
  %584 = vmatpush1.bf16.msra.mxu0 0
  %585 = vmatprep.subr.bf16.mxu0 0
  %586 = vmatpush1.bf16.msra.mxu0 0
  %587 = vmatprep.subr.bf16.mxu0 0
  %588 = vmatpush1.bf16.msra.mxu0 0
  %589 = vmatprep.subr.bf16.mxu0 0
  %590 = vmatpush1.bf16.msra.mxu0 0
  %591 = vmatprep.subr.bf16.mxu0 0
  %592 = vmatpush1.bf16.msra.mxu0 0
  %593 = vmatprep.subr.bf16.mxu0 0
  %594 = vmatpush1.bf16.msra.mxu0 0
  %595 = vmatprep.subr.bf16.mxu0 0
  %596 = vmatpush1.bf16.msra.mxu0 0
  %597 = vmatprep.subr.bf16.mxu0 0
  %598 = vmatpush1.bf16.msra.mxu0 0
  %599 = vmatprep.subr.bf16.mxu0 0
  %600 = vmatpush1.bf16.msra.mxu0 0
  %601 = vmatprep.subr.bf16.mxu0 0
  %602 = vmatpush1.bf16.msra.mxu0 0
  %603 = vmatprep.mubr.bf16.mxu0 0
  %604 = vmatmul.mubr.bf16.gmra.mrb[0].mxu0 %v569
  %v605 = vpop.f32.mrb[0].mxu0
  %v606 = vadd.f32 0.0, %v605
  %v607 = vpop.f32.mrb[0].mxu0
  %v608 = vpop.f32.mrb[0].mxu0
  %v609 = vadd.f32 0.0, %v608
  %v610 = vpop.f32.mrb[0].mxu0
  %611 = vdwg.mxu0
  %v612 = vpack.c.bf16 %v609, %v606
  %v614 = vsel %vm154, %v612, 0
  %v617 = vsel %vm399, %v147, 0
  %619 = vmatprep.subr.bf16.mxu0 0
  %620 = vmatpush1.bf16.msra.mxu0 %v617
  %621 = vmatprep.subr.bf16.mxu0 0
  %622 = vmatpush1.bf16.msra.mxu0 0
  %623 = vmatprep.subr.bf16.mxu0 0
  %624 = vmatpush1.bf16.msra.mxu0 0
  %625 = vmatprep.subr.bf16.mxu0 0
  %626 = vmatpush1.bf16.msra.mxu0 0
  %627 = vmatprep.subr.bf16.mxu0 0
  %628 = vmatpush1.bf16.msra.mxu0 0
  %629 = vmatprep.subr.bf16.mxu0 0
  %630 = vmatpush1.bf16.msra.mxu0 0
  %631 = vmatprep.subr.bf16.mxu0 0
  %632 = vmatpush1.bf16.msra.mxu0 0
  %633 = vmatprep.subr.bf16.mxu0 0
  %634 = vmatpush1.bf16.msra.mxu0 0
  %635 = vmatprep.subr.bf16.mxu0 0
  %636 = vmatpush1.bf16.msra.mxu0 0
  %637 = vmatprep.subr.bf16.mxu0 0
  %638 = vmatpush1.bf16.msra.mxu0 0
  %639 = vmatprep.subr.bf16.mxu0 0
  %640 = vmatpush1.bf16.msra.mxu0 0
  %641 = vmatprep.subr.bf16.mxu0 0
  %642 = vmatpush1.bf16.msra.mxu0 0
  %643 = vmatprep.subr.bf16.mxu0 0
  %644 = vmatpush1.bf16.msra.mxu0 0
  %645 = vmatprep.subr.bf16.mxu0 0
  %646 = vmatpush1.bf16.msra.mxu0 0
  %647 = vmatprep.subr.bf16.mxu0 0
  %648 = vmatpush1.bf16.msra.mxu0 0
  %649 = vmatprep.subr.bf16.mxu0 0
  %650 = vmatpush1.bf16.msra.mxu0 0
  %651 = vmatprep.mubr.bf16.mxu0 0
  %652 = vmatmul.mubr.bf16.gmra.mrb[0].mxu0 %v614
  %v653 = vpop.f32.mrb[0].mxu0
  %v654 = vadd.f32 0.0, %v653
  %v655 = vpop.f32.mrb[0].mxu0
  %v656 = vpop.f32.mrb[0].mxu0
  %v657 = vadd.f32 0.0, %v656
  %v658 = vpop.f32.mrb[0].mxu0
  %659 = vdwg.mxu0
  %v660 = vadd.f32 %v485, %v654
  %v661 = vadd.f32 %v488, %v657
  %662 = vrot.lane.b32.xlu0 %v150, 104
  %v663 = vpop.permute.xlu0 %662
  %664 = vrot.lane.b32.xlu0 %v150, 72
  %v665 = vpop.permute.xlu0 %664
  %v667 = vsel %vm154, %v663, 0
  %v670 = vsel %vm154, %v665, 0
  %672 = vmatprep.subr.bf16.mxu0 0
  %673 = vmatpush1.bf16.xpose.msra.mxu0 %v670
  %674 = vmatprep.subr.bf16.mxu0 0
  %675 = vmatpush1.bf16.xpose.msra.mxu0 0
  %676 = vmatprep.subr.bf16.mxu0 0
  %677 = vmatpush1.bf16.xpose.msra.mxu0 0
  %678 = vmatprep.subr.bf16.mxu0 0
  %679 = vmatpush1.bf16.xpose.msra.mxu0 0
  %680 = vmatprep.subr.bf16.mxu0 0
  %681 = vmatpush1.bf16.xpose.msra.mxu0 0
  %682 = vmatprep.subr.bf16.mxu0 0
  %683 = vmatpush1.bf16.xpose.msra.mxu0 0
  %684 = vmatprep.subr.bf16.mxu0 0
  %685 = vmatpush1.bf16.xpose.msra.mxu0 0
  %686 = vmatprep.subr.bf16.mxu0 0
  %687 = vmatpush1.bf16.xpose.msra.mxu0 0
  %688 = vmatprep.subr.bf16.mxu0 0
  %689 = vmatpush1.bf16.xpose.msra.mxu0 0
  %690 = vmatprep.subr.bf16.mxu0 0
  %691 = vmatpush1.bf16.xpose.msra.mxu0 0
  %692 = vmatprep.subr.bf16.mxu0 0
  %693 = vmatpush1.bf16.xpose.msra.mxu0 0
  %694 = vmatprep.subr.bf16.mxu0 0
  %695 = vmatpush1.bf16.xpose.msra.mxu0 0
  %696 = vmatprep.subr.bf16.mxu0 0
  %697 = vmatpush1.bf16.xpose.msra.mxu0 0
  %698 = vmatprep.subr.bf16.mxu0 0
  %699 = vmatpush1.bf16.xpose.msra.mxu0 0
  %700 = vmatprep.subr.bf16.mxu0 0
  %701 = vmatpush1.bf16.xpose.msra.mxu0 0
  %702 = vmatprep.subr.bf16.mxu0 0
  %703 = vmatpush1.bf16.xpose.msra.mxu0 0
  %704 = vmatprep.mubr.bf16.mxu0 0
  %705 = vmatmul.mubr.bf16.gmra.mrb[0].mxu0 %v667
  %v706 = vpop.f32.mrb[0].mxu0
  %v707 = vadd.f32 %v70, %v706
  %v708 = vpop.f32.mrb[0].mxu0
  %v709 = vpop.f32.mrb[0].mxu0
  %v710 = vadd.f32 %v71, %v709
  %v711 = vpop.f32.mrb[0].mxu0
  %712 = vdwg.mxu0
  %v713 = vsel %vm202, %v707, -inf
  %714 = vmax.xlane.f32.xlu0 %v713
  %v715 = vpop.xlane.xlu0 %714
  %v716 = vsel %vm202, %v710, -inf
  %717 = vmax.xlane.f32.xlu0 %v716
  %v718 = vpop.xlane.xlu0 %717
  %v719 = vsub.f32 %v707, %v715
  %v720 = vsub.f32 %v710, %v718
  %v721 = vmul.f32 %v719, 1.442695
  %v722 = vpow.pop %v721
  %v723 = vmul.f32 %v720, 1.442695
  %v724 = vpow.pop %v723
  %v725 = vsel %vm202, %v722, 0.0
  %726 = vadd.xlane.f32.xlu0 %v725
  %v727 = vpop.xlane.xlu0 %726
  %v728 = vsel %vm202, %v724, 0.0
  %729 = vadd.xlane.f32.xlu0 %v728
  %v730 = vpop.xlane.xlu0 %729
  %v731 = vrcp.pop %v727
  %v732 = vrcp.pop %v730
  %v733 = vmul.f32 %v722, %v731
  %v734 = vmul.f32 %v724, %v732
  %v735 = vpack.c.bf16 %v734, %v733
  %736 = vrot.lane.b32.xlu0 %v150, 40
  %v737 = vpop.permute.xlu0 %736
  %v740 = vsel %vm202, %v735, 0
  %742 = vmatprep.subr.bf16.mxu0 0
  %743 = vmatpush1.bf16.msra.mxu0 %v737
  %744 = vmatprep.subr.bf16.mxu0 0
  %745 = vmatpush1.bf16.msra.mxu0 0
  %746 = vmatprep.subr.bf16.mxu0 0
  %747 = vmatpush1.bf16.msra.mxu0 0
  %748 = vmatprep.subr.bf16.mxu0 0
  %749 = vmatpush1.bf16.msra.mxu0 0
  %750 = vmatprep.subr.bf16.mxu0 0
  %751 = vmatpush1.bf16.msra.mxu0 0
  %752 = vmatprep.subr.bf16.mxu0 0
  %753 = vmatpush1.bf16.msra.mxu0 0
  %754 = vmatprep.subr.bf16.mxu0 0
  %755 = vmatpush1.bf16.msra.mxu0 0
  %756 = vmatprep.subr.bf16.mxu0 0
  %757 = vmatpush1.bf16.msra.mxu0 0
  %758 = vmatprep.subr.bf16.mxu0 0
  %759 = vmatpush1.bf16.msra.mxu0 0
  %760 = vmatprep.subr.bf16.mxu0 0
  %761 = vmatpush1.bf16.msra.mxu0 0
  %762 = vmatprep.subr.bf16.mxu0 0
  %763 = vmatpush1.bf16.msra.mxu0 0
  %764 = vmatprep.subr.bf16.mxu0 0
  %765 = vmatpush1.bf16.msra.mxu0 0
  %766 = vmatprep.subr.bf16.mxu0 0
  %767 = vmatpush1.bf16.msra.mxu0 0
  %768 = vmatprep.subr.bf16.mxu0 0
  %769 = vmatpush1.bf16.msra.mxu0 0
  %770 = vmatprep.subr.bf16.mxu0 0
  %771 = vmatpush1.bf16.msra.mxu0 0
  %772 = vmatprep.subr.bf16.mxu0 0
  %773 = vmatpush1.bf16.msra.mxu0 0
  %774 = vmatprep.mubr.bf16.mxu0 0
  %775 = vmatmul.mubr.bf16.gmra.mrb[0].mxu0 %v740
  %v776 = vpop.f32.mrb[0].mxu0
  %v777 = vadd.f32 0.0, %v776
  %v778 = vpop.f32.mrb[0].mxu0
  %v779 = vpop.f32.mrb[0].mxu0
  %v780 = vadd.f32 0.0, %v779
  %v781 = vpop.f32.mrb[0].mxu0
  %782 = vdwg.mxu0
  %v783 = vpack.c.bf16 %v780, %v777
  %v785 = vsel %vm154, %v783, 0
  %v788 = vsel %vm399, %v148, 0
  %790 = vmatprep.subr.bf16.mxu0 0
  %791 = vmatpush1.bf16.msra.mxu0 %v788
  %792 = vmatprep.subr.bf16.mxu0 0
  %793 = vmatpush1.bf16.msra.mxu0 0
  %794 = vmatprep.subr.bf16.mxu0 0
  %795 = vmatpush1.bf16.msra.mxu0 0
  %796 = vmatprep.subr.bf16.mxu0 0
  %797 = vmatpush1.bf16.msra.mxu0 0
  %798 = vmatprep.subr.bf16.mxu0 0
  %799 = vmatpush1.bf16.msra.mxu0 0
  %800 = vmatprep.subr.bf16.mxu0 0
  %801 = vmatpush1.bf16.msra.mxu0 0
  %802 = vmatprep.subr.bf16.mxu0 0
  %803 = vmatpush1.bf16.msra.mxu0 0
  %804 = vmatprep.subr.bf16.mxu0 0
  %805 = vmatpush1.bf16.msra.mxu0 0
  %806 = vmatprep.subr.bf16.mxu0 0
  %807 = vmatpush1.bf16.msra.mxu0 0
  %808 = vmatprep.subr.bf16.mxu0 0
  %809 = vmatpush1.bf16.msra.mxu0 0
  %810 = vmatprep.subr.bf16.mxu0 0
  %811 = vmatpush1.bf16.msra.mxu0 0
  %812 = vmatprep.subr.bf16.mxu0 0
  %813 = vmatpush1.bf16.msra.mxu0 0
  %814 = vmatprep.subr.bf16.mxu0 0
  %815 = vmatpush1.bf16.msra.mxu0 0
  %816 = vmatprep.subr.bf16.mxu0 0
  %817 = vmatpush1.bf16.msra.mxu0 0
  %818 = vmatprep.subr.bf16.mxu0 0
  %819 = vmatpush1.bf16.msra.mxu0 0
  %820 = vmatprep.subr.bf16.mxu0 0
  %821 = vmatpush1.bf16.msra.mxu0 0
  %822 = vmatprep.mubr.bf16.mxu0 0
  %823 = vmatmul.mubr.bf16.gmra.mrb[0].mxu0 %v785
  %v824 = vpop.f32.mrb[0].mxu0
  %v825 = vadd.f32 0.0, %v824
  %v826 = vpop.f32.mrb[0].mxu0
  %v827 = vpop.f32.mrb[0].mxu0
  %v828 = vadd.f32 0.0, %v827
  %v829 = vpop.f32.mrb[0].mxu0
  %830 = vdwg.mxu0
  %v831 = vadd.f32 %v660, %v825
  %v832 = vadd.f32 %v661, %v828
  %v834 = vlaneseq
  %v835 = vshrl.u32 %v834, 7
  %v836 = vsub.s32 0, %v835
  %v837 = vrot.slane %v149, %v836
  %v839 = vadd.f32 %v831, %v837
  %v840 = vadd.f32 %v832, %v837
  %v841 = vadd.f32 %v68, %v839
  %v842 = vadd.f32 %v69, %v840
  %v843 = vsel %vm100, %v841, 0.0
  %844 = vadd.xlane.f32.xlu0 %v843
  %v845 = vpop.xlane.xlu0 %844
  %v846 = vsel %vm100, %v842, 0.0
  %847 = vadd.xlane.f32.xlu0 %v846
  %v848 = vpop.xlane.xlu0 %847
  %v849 = vrcp.pop 32.0
  %v850 = vmul.f32 %v845, %v849
  %v851 = vmul.f32 %v848, %v849
  %v852 = vsub.f32 %v841, %v850
  %v853 = vsub.f32 %v842, %v851
  %v854 = vmul.f32 %v852, %v852
  %v855 = vmul.f32 %v853, %v853
  %v856 = vsel %vm100, %v854, 0.0
  %857 = vadd.xlane.f32.xlu0 %v856
  %v858 = vpop.xlane.xlu0 %857
  %v859 = vsel %vm100, %v855, 0.0
  %860 = vadd.xlane.f32.xlu0 %v859
  %v861 = vpop.xlane.xlu0 %860
  %v862 = vmul.f32 %v858, %v849
  %v863 = vmul.f32 %v861, %v849
  %v864 = vadd.f32 %v862, 1e-05
  %v865 = vadd.f32 %v863, 1e-05
  %v866 = vrsqrt.pop %v864
  %v867 = vrsqrt.pop %v865
  %v868 = vmul.f32 %v852, %v866
  %v869 = vmul.f32 %v853, %v867
  %v870 = vlaneseq
  %v871 = vshrl.u32 %v870, 7
  %v872 = vsub.s32 0, %v871
  %v873 = vrot.slane %v74, %v872
  %v874 = vmul.f32 %v868, %v873
  %v875 = vmul.f32 %v869, %v873
  %v876 = vlaneseq
  %v877 = vshrl.u32 %v876, 7
  %v878 = vsub.s32 0, %v877
  %v879 = vrot.slane %v75, %v878
  %v880 = vadd.f32 %v874, %v879
  %v881 = vadd.f32 %v875, %v879
  %v882 = vld [vmem:[%s8] sm:$0xf]
  %v883 = vld [vmem:[%s8 + $0x4] sm:$0xf]
  %v884 = vld [vmem:[%s8 + $0x8] sm:$0xf]
  %v885 = vld [vmem:[%s8 + $0xc] sm:$0xf]
  %v886 = vld [vmem:[%s9] sm:$0x1]
  %v887 = vpack.c.bf16 %v881, %v880
  %v889 = vlaneseq
  %v890 = vshrl.u32 %v889, 7
  %v891 = vsub.s32 0, %v890
  %v892 = vrot.slane %v886, %v891
  %v898 = vunpack.c.l.b16 %v882
  %v899 = vunpack.c.l.b16 %v883
  %v900 = vunpack.c.l.b16 %v884
  %v901 = vunpack.c.l.b16 %v885
  %v902 = vpack.c.b16 %v899, %v898
  %v903 = vpack.c.b16 %v901, %v900
  %v907 = vsel %vm100, %v887, 0
  %909 = vmatprep.subr.bf16.mxu0 0
  %910 = vmatpush1.bf16.msra.mxu0 %v902
  %911 = vmatprep.subr.bf16.mxu0 0
  %912 = vmatpush1.bf16.msra.mxu0 %v903
  %913 = vmatprep.subr.bf16.mxu0 0
  %914 = vmatpush1.bf16.msra.mxu0 0
  %915 = vmatprep.subr.bf16.mxu0 0
  %916 = vmatpush1.bf16.msra.mxu0 0
  %917 = vmatprep.subr.bf16.mxu0 0
  %918 = vmatpush1.bf16.msra.mxu0 0
  %919 = vmatprep.subr.bf16.mxu0 0
  %920 = vmatpush1.bf16.msra.mxu0 0
  %921 = vmatprep.subr.bf16.mxu0 0
  %922 = vmatpush1.bf16.msra.mxu0 0
  %923 = vmatprep.subr.bf16.mxu0 0
  %924 = vmatpush1.bf16.msra.mxu0 0
  %925 = vmatprep.subr.bf16.mxu0 0
  %926 = vmatpush1.bf16.msra.mxu0 0
  %927 = vmatprep.subr.bf16.mxu0 0
  %928 = vmatpush1.bf16.msra.mxu0 0
  %929 = vmatprep.subr.bf16.mxu0 0
  %930 = vmatpush1.bf16.msra.mxu0 0
  %931 = vmatprep.subr.bf16.mxu0 0
  %932 = vmatpush1.bf16.msra.mxu0 0
  %933 = vmatprep.subr.bf16.mxu0 0
  %934 = vmatpush1.bf16.msra.mxu0 0
  %935 = vmatprep.subr.bf16.mxu0 0
  %936 = vmatpush1.bf16.msra.mxu0 0
  %937 = vmatprep.subr.bf16.mxu0 0
  %938 = vmatpush1.bf16.msra.mxu0 0
  %939 = vmatprep.subr.bf16.mxu0 0
  %940 = vmatpush1.bf16.msra.mxu0 0
  %941 = vmatprep.mubr.bf16.mxu0 0
  %942 = vmatmul.mubr.bf16.gmra.mrb[0].mxu0 %v907
  %v943 = vpop.f32.mrb[0].mxu0
  %v944 = vadd.f32 %v892, %v943
  %v945 = vpop.f32.mrb[0].mxu0
  %v946 = vpop.f32.mrb[0].mxu0
  %v947 = vadd.f32 %v892, %v946
  %v948 = vpop.f32.mrb[0].mxu0
  %949 = vdwg.mxu0
  %v950 = vld [vmem:[%s10] sm:$0xf]
  %v951 = vld [vmem:[%s10 + $0x4] sm:$0xf]
  %v952 = vld [vmem:[%s10 + $0x8] sm:$0xf]
  %v953 = vld [vmem:[%s10 + $0xc] sm:$0xf]
  %v954 = vld [vmem:[%s11] sm:$0x1]
  %v955 = vpack.c.bf16 %v67, %v66
  %v957 = vlaneseq
  %v958 = vshrl.u32 %v957, 7
  %v959 = vsub.s32 0, %v958
  %v960 = vrot.slane %v954, %v959
  %v966 = vunpack.c.l.b16 %v950
  %v967 = vunpack.c.l.b16 %v951
  %v968 = vunpack.c.l.b16 %v952
  %v969 = vunpack.c.l.b16 %v953
  %v970 = vpack.c.b16 %v967, %v966
  %v971 = vpack.c.b16 %v969, %v968
  %v975 = vsel %vm100, %v955, 0
  %977 = vmatprep.subr.bf16.mxu0 0
  %978 = vmatpush1.bf16.msra.mxu0 %v970
  %979 = vmatprep.subr.bf16.mxu0 0
  %980 = vmatpush1.bf16.msra.mxu0 %v971
  %981 = vmatprep.subr.bf16.mxu0 0
  %982 = vmatpush1.bf16.msra.mxu0 0
  %983 = vmatprep.subr.bf16.mxu0 0
  %984 = vmatpush1.bf16.msra.mxu0 0
  %985 = vmatprep.subr.bf16.mxu0 0
  %986 = vmatpush1.bf16.msra.mxu0 0
  %987 = vmatprep.subr.bf16.mxu0 0
  %988 = vmatpush1.bf16.msra.mxu0 0
  %989 = vmatprep.subr.bf16.mxu0 0
  %990 = vmatpush1.bf16.msra.mxu0 0
  %991 = vmatprep.subr.bf16.mxu0 0
  %992 = vmatpush1.bf16.msra.mxu0 0
  %993 = vmatprep.subr.bf16.mxu0 0
  %994 = vmatpush1.bf16.msra.mxu0 0
  %995 = vmatprep.subr.bf16.mxu0 0
  %996 = vmatpush1.bf16.msra.mxu0 0
  %997 = vmatprep.subr.bf16.mxu0 0
  %998 = vmatpush1.bf16.msra.mxu0 0
  %999 = vmatprep.subr.bf16.mxu0 0
  %1000 = vmatpush1.bf16.msra.mxu0 0
  %1001 = vmatprep.subr.bf16.mxu0 0
  %1002 = vmatpush1.bf16.msra.mxu0 0
  %1003 = vmatprep.subr.bf16.mxu0 0
  %1004 = vmatpush1.bf16.msra.mxu0 0
  %1005 = vmatprep.subr.bf16.mxu0 0
  %1006 = vmatpush1.bf16.msra.mxu0 0
  %1007 = vmatprep.subr.bf16.mxu0 0
  %1008 = vmatpush1.bf16.msra.mxu0 0
  %1009 = vmatprep.mubr.bf16.mxu0 0
  %1010 = vmatmul.mubr.bf16.gmra.mrb[0].mxu0 %v975
  %v1011 = vpop.f32.mrb[0].mxu0
  %v1012 = vadd.f32 %v960, %v1011
  %v1013 = vpop.f32.mrb[0].mxu0
  %v1014 = vpop.f32.mrb[0].mxu0
  %v1015 = vadd.f32 %v960, %v1014
  %v1016 = vpop.f32.mrb[0].mxu0
  %1017 = vdwg.mxu0
  %v1018 = vld [vmem:[%s12] sm:$0xf]
  %v1019 = vld [vmem:[%s12 + $0x4] sm:$0xf]
  %v1020 = vld [vmem:[%s12 + $0x8] sm:$0xf]
  %v1021 = vld [vmem:[%s12 + $0xc] sm:$0xf]
  %v1022 = vld [vmem:[%s13] sm:$0x1]
  %v1023 = vpack.c.bf16 %v947, %v944
  %v1024 = vpack.c.bf16 %v1015, %v1012
  %v1026 = vsel %vm154, %v1023, 0
  %v1029 = vsel %vm154, %v1024, 0
  %1031 = vmatprep.subr.bf16.mxu0 0
  %1032 = vmatpush1.bf16.xpose.msra.mxu0 %v1029
  %1033 = vmatprep.subr.bf16.mxu0 0
  %1034 = vmatpush1.bf16.xpose.msra.mxu0 0
  %1035 = vmatprep.subr.bf16.mxu0 0
  %1036 = vmatpush1.bf16.xpose.msra.mxu0 0
  %1037 = vmatprep.subr.bf16.mxu0 0
  %1038 = vmatpush1.bf16.xpose.msra.mxu0 0
  %1039 = vmatprep.subr.bf16.mxu0 0
  %1040 = vmatpush1.bf16.xpose.msra.mxu0 0
  %1041 = vmatprep.subr.bf16.mxu0 0
  %1042 = vmatpush1.bf16.xpose.msra.mxu0 0
  %1043 = vmatprep.subr.bf16.mxu0 0
  %1044 = vmatpush1.bf16.xpose.msra.mxu0 0
  %1045 = vmatprep.subr.bf16.mxu0 0
  %1046 = vmatpush1.bf16.xpose.msra.mxu0 0
  %1047 = vmatprep.subr.bf16.mxu0 0
  %1048 = vmatpush1.bf16.xpose.msra.mxu0 0
  %1049 = vmatprep.subr.bf16.mxu0 0
  %1050 = vmatpush1.bf16.xpose.msra.mxu0 0
  %1051 = vmatprep.subr.bf16.mxu0 0
  %1052 = vmatpush1.bf16.xpose.msra.mxu0 0
  %1053 = vmatprep.subr.bf16.mxu0 0
  %1054 = vmatpush1.bf16.xpose.msra.mxu0 0
  %1055 = vmatprep.subr.bf16.mxu0 0
  %1056 = vmatpush1.bf16.xpose.msra.mxu0 0
  %1057 = vmatprep.subr.bf16.mxu0 0
  %1058 = vmatpush1.bf16.xpose.msra.mxu0 0
  %1059 = vmatprep.subr.bf16.mxu0 0
  %1060 = vmatpush1.bf16.xpose.msra.mxu0 0
  %1061 = vmatprep.subr.bf16.mxu0 0
  %1062 = vmatpush1.bf16.xpose.msra.mxu0 0
  %1063 = vmatprep.mubr.bf16.mxu0 0
  %1064 = vmatmul.mubr.bf16.gmra.mrb[0].mxu0 %v1026
  %v1065 = vpop.f32.mrb[0].mxu0
  %v1066 = vadd.f32 %v72, %v1065
  %v1067 = vpop.f32.mrb[0].mxu0
  %v1068 = vpop.f32.mrb[0].mxu0
  %v1069 = vadd.f32 %v73, %v1068
  %v1070 = vpop.f32.mrb[0].mxu0
  %1071 = vdwg.mxu0
  %v1072 = vsel %vm202, %v1066, -inf
  %1073 = vmax.xlane.f32.xlu0 %v1072
  %v1074 = vpop.xlane.xlu0 %1073
  %v1075 = vsel %vm202, %v1069, -inf
  %1076 = vmax.xlane.f32.xlu0 %v1075
  %v1077 = vpop.xlane.xlu0 %1076
  %v1078 = vsub.f32 %v1066, %v1074
  %v1079 = vsub.f32 %v1069, %v1077
  %v1080 = vmul.f32 %v1078, 1.442695
  %v1081 = vpow.pop %v1080
  %v1082 = vmul.f32 %v1079, 1.442695
  %v1083 = vpow.pop %v1082
  %v1084 = vsel %vm202, %v1081, 0.0
  %1085 = vadd.xlane.f32.xlu0 %v1084
  %v1086 = vpop.xlane.xlu0 %1085
  %v1087 = vsel %vm202, %v1083, 0.0
  %1088 = vadd.xlane.f32.xlu0 %v1087
  %v1089 = vpop.xlane.xlu0 %1088
  %v1090 = vrcp.pop %v1086
  %v1091 = vrcp.pop %v1089
  %v1092 = vmul.f32 %v1081, %v1090
  %v1093 = vmul.f32 %v1083, %v1091
  %v1094 = vpack.c.bf16 %v1093, %v1092
  %1096 = vrot.lane.b32.xlu0 %v1024, 96
  %v1097 = vpop.permute.xlu0 %1096
  %v1100 = vsel %vm202, %v1094, 0
  %1102 = vmatprep.subr.bf16.mxu0 0
  %1103 = vmatpush1.bf16.msra.mxu0 %v1097
  %1104 = vmatprep.subr.bf16.mxu0 0
  %1105 = vmatpush1.bf16.msra.mxu0 0
  %1106 = vmatprep.subr.bf16.mxu0 0
  %1107 = vmatpush1.bf16.msra.mxu0 0
  %1108 = vmatprep.subr.bf16.mxu0 0
  %1109 = vmatpush1.bf16.msra.mxu0 0
  %1110 = vmatprep.subr.bf16.mxu0 0
  %1111 = vmatpush1.bf16.msra.mxu0 0
  %1112 = vmatprep.subr.bf16.mxu0 0
  %1113 = vmatpush1.bf16.msra.mxu0 0
  %1114 = vmatprep.subr.bf16.mxu0 0
  %1115 = vmatpush1.bf16.msra.mxu0 0
  %1116 = vmatprep.subr.bf16.mxu0 0
  %1117 = vmatpush1.bf16.msra.mxu0 0
  %1118 = vmatprep.subr.bf16.mxu0 0
  %1119 = vmatpush1.bf16.msra.mxu0 0
  %1120 = vmatprep.subr.bf16.mxu0 0
  %1121 = vmatpush1.bf16.msra.mxu0 0
  %1122 = vmatprep.subr.bf16.mxu0 0
  %1123 = vmatpush1.bf16.msra.mxu0 0
  %1124 = vmatprep.subr.bf16.mxu0 0
  %1125 = vmatpush1.bf16.msra.mxu0 0
  %1126 = vmatprep.subr.bf16.mxu0 0
  %1127 = vmatpush1.bf16.msra.mxu0 0
  %1128 = vmatprep.subr.bf16.mxu0 0
  %1129 = vmatpush1.bf16.msra.mxu0 0
  %1130 = vmatprep.subr.bf16.mxu0 0
  %1131 = vmatpush1.bf16.msra.mxu0 0
  %1132 = vmatprep.subr.bf16.mxu0 0
  %1133 = vmatpush1.bf16.msra.mxu0 0
  %1134 = vmatprep.mubr.bf16.mxu0 0
  %1135 = vmatmul.mubr.bf16.gmra.mrb[0].mxu0 %v1100
  %v1136 = vpop.f32.mrb[0].mxu0
  %v1137 = vadd.f32 0.0, %v1136
  %v1138 = vpop.f32.mrb[0].mxu0
  %v1139 = vpop.f32.mrb[0].mxu0
  %v1140 = vadd.f32 0.0, %v1139
  %v1141 = vpop.f32.mrb[0].mxu0
  %1142 = vdwg.mxu0
  %v1143 = vpack.c.bf16 %v1140, %v1137
  %1145 = vrot.lane.b32.xlu0 %v1023, 120
  %v1146 = vpop.permute.xlu0 %1145
  %1147 = vrot.lane.b32.xlu0 %v1024, 120
  %v1148 = vpop.permute.xlu0 %1147
  %v1150 = vsel %vm154, %v1146, 0
  %v1153 = vsel %vm154, %v1148, 0
  %1155 = vmatprep.subr.bf16.mxu0 0
  %1156 = vmatpush1.bf16.xpose.msra.mxu0 %v1153
  %1157 = vmatprep.subr.bf16.mxu0 0
  %1158 = vmatpush1.bf16.xpose.msra.mxu0 0
  %1159 = vmatprep.subr.bf16.mxu0 0
  %1160 = vmatpush1.bf16.xpose.msra.mxu0 0
  %1161 = vmatprep.subr.bf16.mxu0 0
  %1162 = vmatpush1.bf16.xpose.msra.mxu0 0
  %1163 = vmatprep.subr.bf16.mxu0 0
  %1164 = vmatpush1.bf16.xpose.msra.mxu0 0
  %1165 = vmatprep.subr.bf16.mxu0 0
  %1166 = vmatpush1.bf16.xpose.msra.mxu0 0
  %1167 = vmatprep.subr.bf16.mxu0 0
  %1168 = vmatpush1.bf16.xpose.msra.mxu0 0
  %1169 = vmatprep.subr.bf16.mxu0 0
  %1170 = vmatpush1.bf16.xpose.msra.mxu0 0
  %1171 = vmatprep.subr.bf16.mxu0 0
  %1172 = vmatpush1.bf16.xpose.msra.mxu0 0
  %1173 = vmatprep.subr.bf16.mxu0 0
  %1174 = vmatpush1.bf16.xpose.msra.mxu0 0
  %1175 = vmatprep.subr.bf16.mxu0 0
  %1176 = vmatpush1.bf16.xpose.msra.mxu0 0
  %1177 = vmatprep.subr.bf16.mxu0 0
  %1178 = vmatpush1.bf16.xpose.msra.mxu0 0
  %1179 = vmatprep.subr.bf16.mxu0 0
  %1180 = vmatpush1.bf16.xpose.msra.mxu0 0
  %1181 = vmatprep.subr.bf16.mxu0 0
  %1182 = vmatpush1.bf16.xpose.msra.mxu0 0
  %1183 = vmatprep.subr.bf16.mxu0 0
  %1184 = vmatpush1.bf16.xpose.msra.mxu0 0
  %1185 = vmatprep.subr.bf16.mxu0 0
  %1186 = vmatpush1.bf16.xpose.msra.mxu0 0
  %1187 = vmatprep.mubr.bf16.mxu0 0
  %1188 = vmatmul.mubr.bf16.gmra.mrb[0].mxu0 %v1150
  %v1189 = vpop.f32.mrb[0].mxu0
  %v1190 = vadd.f32 %v72, %v1189
  %v1191 = vpop.f32.mrb[0].mxu0
  %v1192 = vpop.f32.mrb[0].mxu0
  %v1193 = vadd.f32 %v73, %v1192
  %v1194 = vpop.f32.mrb[0].mxu0
  %1195 = vdwg.mxu0
  %v1196 = vsel %vm202, %v1190, -inf
  %1197 = vmax.xlane.f32.xlu0 %v1196
  %v1198 = vpop.xlane.xlu0 %1197
  %v1199 = vsel %vm202, %v1193, -inf
  %1200 = vmax.xlane.f32.xlu0 %v1199
  %v1201 = vpop.xlane.xlu0 %1200
  %v1202 = vsub.f32 %v1190, %v1198
  %v1203 = vsub.f32 %v1193, %v1201
  %v1204 = vmul.f32 %v1202, 1.442695
  %v1205 = vpow.pop %v1204
  %v1206 = vmul.f32 %v1203, 1.442695
  %v1207 = vpow.pop %v1206
  %v1208 = vsel %vm202, %v1205, 0.0
  %1209 = vadd.xlane.f32.xlu0 %v1208
  %v1210 = vpop.xlane.xlu0 %1209
  %v1211 = vsel %vm202, %v1207, 0.0
  %1212 = vadd.xlane.f32.xlu0 %v1211
  %v1213 = vpop.xlane.xlu0 %1212
  %v1214 = vrcp.pop %v1210
  %v1215 = vrcp.pop %v1213
  %v1216 = vmul.f32 %v1205, %v1214
  %v1217 = vmul.f32 %v1207, %v1215
  %v1218 = vpack.c.bf16 %v1217, %v1216
  %1219 = vrot.lane.b32.xlu0 %v1024, 88
  %v1220 = vpop.permute.xlu0 %1219
  %v1223 = vsel %vm202, %v1218, 0
  %1225 = vmatprep.subr.bf16.mxu0 0
  %1226 = vmatpush1.bf16.msra.mxu0 %v1220
  %1227 = vmatprep.subr.bf16.mxu0 0
  %1228 = vmatpush1.bf16.msra.mxu0 0
  %1229 = vmatprep.subr.bf16.mxu0 0
  %1230 = vmatpush1.bf16.msra.mxu0 0
  %1231 = vmatprep.subr.bf16.mxu0 0
  %1232 = vmatpush1.bf16.msra.mxu0 0
  %1233 = vmatprep.subr.bf16.mxu0 0
  %1234 = vmatpush1.bf16.msra.mxu0 0
  %1235 = vmatprep.subr.bf16.mxu0 0
  %1236 = vmatpush1.bf16.msra.mxu0 0
  %1237 = vmatprep.subr.bf16.mxu0 0
  %1238 = vmatpush1.bf16.msra.mxu0 0
  %1239 = vmatprep.subr.bf16.mxu0 0
  %1240 = vmatpush1.bf16.msra.mxu0 0
  %1241 = vmatprep.subr.bf16.mxu0 0
  %1242 = vmatpush1.bf16.msra.mxu0 0
  %1243 = vmatprep.subr.bf16.mxu0 0
  %1244 = vmatpush1.bf16.msra.mxu0 0
  %1245 = vmatprep.subr.bf16.mxu0 0
  %1246 = vmatpush1.bf16.msra.mxu0 0
  %1247 = vmatprep.subr.bf16.mxu0 0
  %1248 = vmatpush1.bf16.msra.mxu0 0
  %1249 = vmatprep.subr.bf16.mxu0 0
  %1250 = vmatpush1.bf16.msra.mxu0 0
  %1251 = vmatprep.subr.bf16.mxu0 0
  %1252 = vmatpush1.bf16.msra.mxu0 0
  %1253 = vmatprep.subr.bf16.mxu0 0
  %1254 = vmatpush1.bf16.msra.mxu0 0
  %1255 = vmatprep.subr.bf16.mxu0 0
  %1256 = vmatpush1.bf16.msra.mxu0 0
  %1257 = vmatprep.mubr.bf16.mxu0 0
  %1258 = vmatmul.mubr.bf16.gmra.mrb[0].mxu0 %v1223
  %v1259 = vpop.f32.mrb[0].mxu0
  %v1260 = vadd.f32 0.0, %v1259
  %v1261 = vpop.f32.mrb[0].mxu0
  %v1262 = vpop.f32.mrb[0].mxu0
  %v1263 = vadd.f32 0.0, %v1262
  %v1264 = vpop.f32.mrb[0].mxu0
  %1265 = vdwg.mxu0
  %v1266 = vpack.c.bf16 %v1263, %v1260
  %v1268 = vsel %vm154, %v1266, 0
  %v1271 = vsel %vm399, %v1019, 0
  %1273 = vmatprep.subr.bf16.mxu0 0
  %1274 = vmatpush1.bf16.msra.mxu0 %v1271
  %1275 = vmatprep.subr.bf16.mxu0 0
  %1276 = vmatpush1.bf16.msra.mxu0 0
  %1277 = vmatprep.subr.bf16.mxu0 0
  %1278 = vmatpush1.bf16.msra.mxu0 0
  %1279 = vmatprep.subr.bf16.mxu0 0
  %1280 = vmatpush1.bf16.msra.mxu0 0
  %1281 = vmatprep.subr.bf16.mxu0 0
  %1282 = vmatpush1.bf16.msra.mxu0 0
  %1283 = vmatprep.subr.bf16.mxu0 0
  %1284 = vmatpush1.bf16.msra.mxu0 0
  %1285 = vmatprep.subr.bf16.mxu0 0
  %1286 = vmatpush1.bf16.msra.mxu0 0
  %1287 = vmatprep.subr.bf16.mxu0 0
  %1288 = vmatpush1.bf16.msra.mxu0 0
  %1289 = vmatprep.subr.bf16.mxu0 0
  %1290 = vmatpush1.bf16.msra.mxu0 0
  %1291 = vmatprep.subr.bf16.mxu0 0
  %1292 = vmatpush1.bf16.msra.mxu0 0
  %1293 = vmatprep.subr.bf16.mxu0 0
  %1294 = vmatpush1.bf16.msra.mxu0 0
  %1295 = vmatprep.subr.bf16.mxu0 0
  %1296 = vmatpush1.bf16.msra.mxu0 0
  %1297 = vmatprep.subr.bf16.mxu0 0
  %1298 = vmatpush1.bf16.msra.mxu0 0
  %1299 = vmatprep.subr.bf16.mxu0 0
  %1300 = vmatpush1.bf16.msra.mxu0 0
  %1301 = vmatprep.subr.bf16.mxu0 0
  %1302 = vmatpush1.bf16.msra.mxu0 0
  %1303 = vmatprep.subr.bf16.mxu0 0
  %1304 = vmatpush1.bf16.msra.mxu0 0
  %1305 = vmatprep.mubr.bf16.mxu0 0
  %1306 = vmatmul.mubr.bf16.gmra.mrb[0].mxu0 %v1268
  %v1307 = vpop.f32.mrb[0].mxu0
  %v1308 = vadd.f32 0.0, %v1307
  %v1309 = vpop.f32.mrb[0].mxu0
  %v1310 = vpop.f32.mrb[0].mxu0
  %v1311 = vadd.f32 0.0, %v1310
  %v1312 = vpop.f32.mrb[0].mxu0
  %1313 = vdwg.mxu0
  %v1315 = vsel %vm154, %v1143, 0
  %v1318 = vsel %vm399, %v1018, 0
  %1320 = vmatprep.subr.bf16.mxu0 0
  %1321 = vmatpush1.bf16.msra.mxu0 %v1318
  %1322 = vmatprep.subr.bf16.mxu0 0
  %1323 = vmatpush1.bf16.msra.mxu0 0
  %1324 = vmatprep.subr.bf16.mxu0 0
  %1325 = vmatpush1.bf16.msra.mxu0 0
  %1326 = vmatprep.subr.bf16.mxu0 0
  %1327 = vmatpush1.bf16.msra.mxu0 0
  %1328 = vmatprep.subr.bf16.mxu0 0
  %1329 = vmatpush1.bf16.msra.mxu0 0
  %1330 = vmatprep.subr.bf16.mxu0 0
  %1331 = vmatpush1.bf16.msra.mxu0 0
  %1332 = vmatprep.subr.bf16.mxu0 0
  %1333 = vmatpush1.bf16.msra.mxu0 0
  %1334 = vmatprep.subr.bf16.mxu0 0
  %1335 = vmatpush1.bf16.msra.mxu0 0
  %1336 = vmatprep.subr.bf16.mxu0 0
  %1337 = vmatpush1.bf16.msra.mxu0 0
  %1338 = vmatprep.subr.bf16.mxu0 0
  %1339 = vmatpush1.bf16.msra.mxu0 0
  %1340 = vmatprep.subr.bf16.mxu0 0
  %1341 = vmatpush1.bf16.msra.mxu0 0
  %1342 = vmatprep.subr.bf16.mxu0 0
  %1343 = vmatpush1.bf16.msra.mxu0 0
  %1344 = vmatprep.subr.bf16.mxu0 0
  %1345 = vmatpush1.bf16.msra.mxu0 0
  %1346 = vmatprep.subr.bf16.mxu0 0
  %1347 = vmatpush1.bf16.msra.mxu0 0
  %1348 = vmatprep.subr.bf16.mxu0 0
  %1349 = vmatpush1.bf16.msra.mxu0 0
  %1350 = vmatprep.subr.bf16.mxu0 0
  %1351 = vmatpush1.bf16.msra.mxu0 0
  %1352 = vmatprep.mubr.bf16.mxu0 0
  %1353 = vmatmul.mubr.bf16.gmra.mrb[0].mxu0 %v1315
  %v1354 = vpop.f32.mrb[0].mxu0
  %v1355 = vadd.f32 %v1308, %v1354
  %v1356 = vpop.f32.mrb[0].mxu0
  %v1357 = vpop.f32.mrb[0].mxu0
  %v1358 = vadd.f32 %v1311, %v1357
  %v1359 = vpop.f32.mrb[0].mxu0
  %1360 = vdwg.mxu0
  %1361 = vrot.lane.b32.xlu0 %v1023, 112
  %v1362 = vpop.permute.xlu0 %1361
  %1363 = vrot.lane.b32.xlu0 %v1024, 112
  %v1364 = vpop.permute.xlu0 %1363
  %v1366 = vsel %vm154, %v1362, 0
  %v1369 = vsel %vm154, %v1364, 0
  %1371 = vmatprep.subr.bf16.mxu0 0
  %1372 = vmatpush1.bf16.xpose.msra.mxu0 %v1369
  %1373 = vmatprep.subr.bf16.mxu0 0
  %1374 = vmatpush1.bf16.xpose.msra.mxu0 0
  %1375 = vmatprep.subr.bf16.mxu0 0
  %1376 = vmatpush1.bf16.xpose.msra.mxu0 0
  %1377 = vmatprep.subr.bf16.mxu0 0
  %1378 = vmatpush1.bf16.xpose.msra.mxu0 0
  %1379 = vmatprep.subr.bf16.mxu0 0
  %1380 = vmatpush1.bf16.xpose.msra.mxu0 0
  %1381 = vmatprep.subr.bf16.mxu0 0
  %1382 = vmatpush1.bf16.xpose.msra.mxu0 0
  %1383 = vmatprep.subr.bf16.mxu0 0
  %1384 = vmatpush1.bf16.xpose.msra.mxu0 0
  %1385 = vmatprep.subr.bf16.mxu0 0
  %1386 = vmatpush1.bf16.xpose.msra.mxu0 0
  %1387 = vmatprep.subr.bf16.mxu0 0
  %1388 = vmatpush1.bf16.xpose.msra.mxu0 0
  %1389 = vmatprep.subr.bf16.mxu0 0
  %1390 = vmatpush1.bf16.xpose.msra.mxu0 0
  %1391 = vmatprep.subr.bf16.mxu0 0
  %1392 = vmatpush1.bf16.xpose.msra.mxu0 0
  %1393 = vmatprep.subr.bf16.mxu0 0
  %1394 = vmatpush1.bf16.xpose.msra.mxu0 0
  %1395 = vmatprep.subr.bf16.mxu0 0
  %1396 = vmatpush1.bf16.xpose.msra.mxu0 0
  %1397 = vmatprep.subr.bf16.mxu0 0
  %1398 = vmatpush1.bf16.xpose.msra.mxu0 0
  %1399 = vmatprep.subr.bf16.mxu0 0
  %1400 = vmatpush1.bf16.xpose.msra.mxu0 0
  %1401 = vmatprep.subr.bf16.mxu0 0
  %1402 = vmatpush1.bf16.xpose.msra.mxu0 0
  %1403 = vmatprep.mubr.bf16.mxu0 0
  %1404 = vmatmul.mubr.bf16.gmra.mrb[0].mxu0 %v1366
  %v1405 = vpop.f32.mrb[0].mxu0
  %v1406 = vadd.f32 %v72, %v1405
  %v1407 = vpop.f32.mrb[0].mxu0
  %v1408 = vpop.f32.mrb[0].mxu0
  %v1409 = vadd.f32 %v73, %v1408
  %v1410 = vpop.f32.mrb[0].mxu0
  %1411 = vdwg.mxu0
  %v1412 = vsel %vm202, %v1406, -inf
  %1413 = vmax.xlane.f32.xlu0 %v1412
  %v1414 = vpop.xlane.xlu0 %1413
  %v1415 = vsel %vm202, %v1409, -inf
  %1416 = vmax.xlane.f32.xlu0 %v1415
  %v1417 = vpop.xlane.xlu0 %1416
  %v1418 = vsub.f32 %v1406, %v1414
  %v1419 = vsub.f32 %v1409, %v1417
  %v1420 = vmul.f32 %v1418, 1.442695
  %v1421 = vpow.pop %v1420
  %v1422 = vmul.f32 %v1419, 1.442695
  %v1423 = vpow.pop %v1422
  %v1424 = vsel %vm202, %v1421, 0.0
  %1425 = vadd.xlane.f32.xlu0 %v1424
  %v1426 = vpop.xlane.xlu0 %1425
  %v1427 = vsel %vm202, %v1423, 0.0
  %1428 = vadd.xlane.f32.xlu0 %v1427
  %v1429 = vpop.xlane.xlu0 %1428
  %v1430 = vrcp.pop %v1426
  %v1431 = vrcp.pop %v1429
  %v1432 = vmul.f32 %v1421, %v1430
  %v1433 = vmul.f32 %v1423, %v1431
  %v1434 = vpack.c.bf16 %v1433, %v1432
  %1435 = vrot.lane.b32.xlu0 %v1024, 80
  %v1436 = vpop.permute.xlu0 %1435
  %v1439 = vsel %vm202, %v1434, 0
  %1441 = vmatprep.subr.bf16.mxu0 0
  %1442 = vmatpush1.bf16.msra.mxu0 %v1436
  %1443 = vmatprep.subr.bf16.mxu0 0
  %1444 = vmatpush1.bf16.msra.mxu0 0
  %1445 = vmatprep.subr.bf16.mxu0 0
  %1446 = vmatpush1.bf16.msra.mxu0 0
  %1447 = vmatprep.subr.bf16.mxu0 0
  %1448 = vmatpush1.bf16.msra.mxu0 0
  %1449 = vmatprep.subr.bf16.mxu0 0
  %1450 = vmatpush1.bf16.msra.mxu0 0
  %1451 = vmatprep.subr.bf16.mxu0 0
  %1452 = vmatpush1.bf16.msra.mxu0 0
  %1453 = vmatprep.subr.bf16.mxu0 0
  %1454 = vmatpush1.bf16.msra.mxu0 0
  %1455 = vmatprep.subr.bf16.mxu0 0
  %1456 = vmatpush1.bf16.msra.mxu0 0
  %1457 = vmatprep.subr.bf16.mxu0 0
  %1458 = vmatpush1.bf16.msra.mxu0 0
  %1459 = vmatprep.subr.bf16.mxu0 0
  %1460 = vmatpush1.bf16.msra.mxu0 0
  %1461 = vmatprep.subr.bf16.mxu0 0
  %1462 = vmatpush1.bf16.msra.mxu0 0
  %1463 = vmatprep.subr.bf16.mxu0 0
  %1464 = vmatpush1.bf16.msra.mxu0 0
  %1465 = vmatprep.subr.bf16.mxu0 0
  %1466 = vmatpush1.bf16.msra.mxu0 0
  %1467 = vmatprep.subr.bf16.mxu0 0
  %1468 = vmatpush1.bf16.msra.mxu0 0
  %1469 = vmatprep.subr.bf16.mxu0 0
  %1470 = vmatpush1.bf16.msra.mxu0 0
  %1471 = vmatprep.subr.bf16.mxu0 0
  %1472 = vmatpush1.bf16.msra.mxu0 0
  %1473 = vmatprep.mubr.bf16.mxu0 0
  %1474 = vmatmul.mubr.bf16.gmra.mrb[0].mxu0 %v1439
  %v1475 = vpop.f32.mrb[0].mxu0
  %v1476 = vadd.f32 0.0, %v1475
  %v1477 = vpop.f32.mrb[0].mxu0
  %v1478 = vpop.f32.mrb[0].mxu0
  %v1479 = vadd.f32 0.0, %v1478
  %v1480 = vpop.f32.mrb[0].mxu0
  %1481 = vdwg.mxu0
  %v1482 = vpack.c.bf16 %v1479, %v1476
  %v1484 = vsel %vm154, %v1482, 0
  %v1487 = vsel %vm399, %v1020, 0
  %1489 = vmatprep.subr.bf16.mxu0 0
  %1490 = vmatpush1.bf16.msra.mxu0 %v1487
  %1491 = vmatprep.subr.bf16.mxu0 0
  %1492 = vmatpush1.bf16.msra.mxu0 0
  %1493 = vmatprep.subr.bf16.mxu0 0
  %1494 = vmatpush1.bf16.msra.mxu0 0
  %1495 = vmatprep.subr.bf16.mxu0 0
  %1496 = vmatpush1.bf16.msra.mxu0 0
  %1497 = vmatprep.subr.bf16.mxu0 0
  %1498 = vmatpush1.bf16.msra.mxu0 0
  %1499 = vmatprep.subr.bf16.mxu0 0
  %1500 = vmatpush1.bf16.msra.mxu0 0
  %1501 = vmatprep.subr.bf16.mxu0 0
  %1502 = vmatpush1.bf16.msra.mxu0 0
  %1503 = vmatprep.subr.bf16.mxu0 0
  %1504 = vmatpush1.bf16.msra.mxu0 0
  %1505 = vmatprep.subr.bf16.mxu0 0
  %1506 = vmatpush1.bf16.msra.mxu0 0
  %1507 = vmatprep.subr.bf16.mxu0 0
  %1508 = vmatpush1.bf16.msra.mxu0 0
  %1509 = vmatprep.subr.bf16.mxu0 0
  %1510 = vmatpush1.bf16.msra.mxu0 0
  %1511 = vmatprep.subr.bf16.mxu0 0
  %1512 = vmatpush1.bf16.msra.mxu0 0
  %1513 = vmatprep.subr.bf16.mxu0 0
  %1514 = vmatpush1.bf16.msra.mxu0 0
  %1515 = vmatprep.subr.bf16.mxu0 0
  %1516 = vmatpush1.bf16.msra.mxu0 0
  %1517 = vmatprep.subr.bf16.mxu0 0
  %1518 = vmatpush1.bf16.msra.mxu0 0
  %1519 = vmatprep.subr.bf16.mxu0 0
  %1520 = vmatpush1.bf16.msra.mxu0 0
  %1521 = vmatprep.mubr.bf16.mxu0 0
  %1522 = vmatmul.mubr.bf16.gmra.mrb[0].mxu0 %v1484
  %v1523 = vpop.f32.mrb[0].mxu0
  %v1524 = vadd.f32 0.0, %v1523
  %v1525 = vpop.f32.mrb[0].mxu0
  %v1526 = vpop.f32.mrb[0].mxu0
  %v1527 = vadd.f32 0.0, %v1526
  %v1528 = vpop.f32.mrb[0].mxu0
  %1529 = vdwg.mxu0
  %v1530 = vadd.f32 %v1355, %v1524
  %v1531 = vadd.f32 %v1358, %v1527
  %1532 = vrot.lane.b32.xlu0 %v1023, 104
  %v1533 = vpop.permute.xlu0 %1532
  %1534 = vrot.lane.b32.xlu0 %v1024, 104
  %v1535 = vpop.permute.xlu0 %1534
  %v1537 = vsel %vm154, %v1533, 0
  %v1540 = vsel %vm154, %v1535, 0
  %1542 = vmatprep.subr.bf16.mxu0 0
  %1543 = vmatpush1.bf16.xpose.msra.mxu0 %v1540
  %1544 = vmatprep.subr.bf16.mxu0 0
  %1545 = vmatpush1.bf16.xpose.msra.mxu0 0
  %1546 = vmatprep.subr.bf16.mxu0 0
  %1547 = vmatpush1.bf16.xpose.msra.mxu0 0
  %1548 = vmatprep.subr.bf16.mxu0 0
  %1549 = vmatpush1.bf16.xpose.msra.mxu0 0
  %1550 = vmatprep.subr.bf16.mxu0 0
  %1551 = vmatpush1.bf16.xpose.msra.mxu0 0
  %1552 = vmatprep.subr.bf16.mxu0 0
  %1553 = vmatpush1.bf16.xpose.msra.mxu0 0
  %1554 = vmatprep.subr.bf16.mxu0 0
  %1555 = vmatpush1.bf16.xpose.msra.mxu0 0
  %1556 = vmatprep.subr.bf16.mxu0 0
  %1557 = vmatpush1.bf16.xpose.msra.mxu0 0
  %1558 = vmatprep.subr.bf16.mxu0 0
  %1559 = vmatpush1.bf16.xpose.msra.mxu0 0
  %1560 = vmatprep.subr.bf16.mxu0 0
  %1561 = vmatpush1.bf16.xpose.msra.mxu0 0
  %1562 = vmatprep.subr.bf16.mxu0 0
  %1563 = vmatpush1.bf16.xpose.msra.mxu0 0
  %1564 = vmatprep.subr.bf16.mxu0 0
  %1565 = vmatpush1.bf16.xpose.msra.mxu0 0
  %1566 = vmatprep.subr.bf16.mxu0 0
  %1567 = vmatpush1.bf16.xpose.msra.mxu0 0
  %1568 = vmatprep.subr.bf16.mxu0 0
  %1569 = vmatpush1.bf16.xpose.msra.mxu0 0
  %1570 = vmatprep.subr.bf16.mxu0 0
  %1571 = vmatpush1.bf16.xpose.msra.mxu0 0
  %1572 = vmatprep.subr.bf16.mxu0 0
  %1573 = vmatpush1.bf16.xpose.msra.mxu0 0
  %1574 = vmatprep.mubr.bf16.mxu0 0
  %1575 = vmatmul.mubr.bf16.gmra.mrb[0].mxu0 %v1537
  %v1576 = vpop.f32.mrb[0].mxu0
  %v1577 = vadd.f32 %v72, %v1576
  %v1578 = vpop.f32.mrb[0].mxu0
  %v1579 = vpop.f32.mrb[0].mxu0
  %v1580 = vadd.f32 %v73, %v1579
  %v1581 = vpop.f32.mrb[0].mxu0
  %1582 = vdwg.mxu0
  %v1583 = vsel %vm202, %v1577, -inf
  %1584 = vmax.xlane.f32.xlu0 %v1583
  %v1585 = vpop.xlane.xlu0 %1584
  %v1586 = vsel %vm202, %v1580, -inf
  %1587 = vmax.xlane.f32.xlu0 %v1586
  %v1588 = vpop.xlane.xlu0 %1587
  %v1589 = vsub.f32 %v1577, %v1585
  %v1590 = vsub.f32 %v1580, %v1588
  %v1591 = vmul.f32 %v1589, 1.442695
  %v1592 = vpow.pop %v1591
  %v1593 = vmul.f32 %v1590, 1.442695
  %v1594 = vpow.pop %v1593
  %v1595 = vsel %vm202, %v1592, 0.0
  %1596 = vadd.xlane.f32.xlu0 %v1595
  %v1597 = vpop.xlane.xlu0 %1596
  %v1598 = vsel %vm202, %v1594, 0.0
  %1599 = vadd.xlane.f32.xlu0 %v1598
  %v1600 = vpop.xlane.xlu0 %1599
  %v1601 = vrcp.pop %v1597
  %v1602 = vrcp.pop %v1600
  %v1603 = vmul.f32 %v1592, %v1601
  %v1604 = vmul.f32 %v1594, %v1602
  %v1605 = vpack.c.bf16 %v1604, %v1603
  %1606 = vrot.lane.b32.xlu0 %v1024, 72
  %v1607 = vpop.permute.xlu0 %1606
  %v1610 = vsel %vm202, %v1605, 0
  %1612 = vmatprep.subr.bf16.mxu0 0
  %1613 = vmatpush1.bf16.msra.mxu0 %v1607
  %1614 = vmatprep.subr.bf16.mxu0 0
  %1615 = vmatpush1.bf16.msra.mxu0 0
  %1616 = vmatprep.subr.bf16.mxu0 0
  %1617 = vmatpush1.bf16.msra.mxu0 0
  %1618 = vmatprep.subr.bf16.mxu0 0
  %1619 = vmatpush1.bf16.msra.mxu0 0
  %1620 = vmatprep.subr.bf16.mxu0 0
  %1621 = vmatpush1.bf16.msra.mxu0 0
  %1622 = vmatprep.subr.bf16.mxu0 0
  %1623 = vmatpush1.bf16.msra.mxu0 0
  %1624 = vmatprep.subr.bf16.mxu0 0
  %1625 = vmatpush1.bf16.msra.mxu0 0
  %1626 = vmatprep.subr.bf16.mxu0 0
  %1627 = vmatpush1.bf16.msra.mxu0 0
  %1628 = vmatprep.subr.bf16.mxu0 0
  %1629 = vmatpush1.bf16.msra.mxu0 0
  %1630 = vmatprep.subr.bf16.mxu0 0
  %1631 = vmatpush1.bf16.msra.mxu0 0
  %1632 = vmatprep.subr.bf16.mxu0 0
  %1633 = vmatpush1.bf16.msra.mxu0 0
  %1634 = vmatprep.subr.bf16.mxu0 0
  %1635 = vmatpush1.bf16.msra.mxu0 0
  %1636 = vmatprep.subr.bf16.mxu0 0
  %1637 = vmatpush1.bf16.msra.mxu0 0
  %1638 = vmatprep.subr.bf16.mxu0 0
  %1639 = vmatpush1.bf16.msra.mxu0 0
  %1640 = vmatprep.subr.bf16.mxu0 0
  %1641 = vmatpush1.bf16.msra.mxu0 0
  %1642 = vmatprep.subr.bf16.mxu0 0
  %1643 = vmatpush1.bf16.msra.mxu0 0
  %1644 = vmatprep.mubr.bf16.mxu0 0
  %1645 = vmatmul.mubr.bf16.gmra.mrb[0].mxu0 %v1610
  %v1646 = vpop.f32.mrb[0].mxu0
  %v1647 = vadd.f32 0.0, %v1646
  %v1648 = vpop.f32.mrb[0].mxu0
  %v1649 = vpop.f32.mrb[0].mxu0
  %v1650 = vadd.f32 0.0, %v1649
  %v1651 = vpop.f32.mrb[0].mxu0
  %1652 = vdwg.mxu0
  %v1653 = vpack.c.bf16 %v1650, %v1647
  %v1655 = vsel %vm154, %v1653, 0
  %v1658 = vsel %vm399, %v1021, 0
  %1660 = vmatprep.subr.bf16.mxu0 0
  %1661 = vmatpush1.bf16.msra.mxu0 %v1658
  %1662 = vmatprep.subr.bf16.mxu0 0
  %1663 = vmatpush1.bf16.msra.mxu0 0
  %1664 = vmatprep.subr.bf16.mxu0 0
  %1665 = vmatpush1.bf16.msra.mxu0 0
  %1666 = vmatprep.subr.bf16.mxu0 0
  %1667 = vmatpush1.bf16.msra.mxu0 0
  %1668 = vmatprep.subr.bf16.mxu0 0
  %1669 = vmatpush1.bf16.msra.mxu0 0
  %1670 = vmatprep.subr.bf16.mxu0 0
  %1671 = vmatpush1.bf16.msra.mxu0 0
  %1672 = vmatprep.subr.bf16.mxu0 0
  %1673 = vmatpush1.bf16.msra.mxu0 0
  %1674 = vmatprep.subr.bf16.mxu0 0
  %1675 = vmatpush1.bf16.msra.mxu0 0
  %1676 = vmatprep.subr.bf16.mxu0 0
  %1677 = vmatpush1.bf16.msra.mxu0 0
  %1678 = vmatprep.subr.bf16.mxu0 0
  %1679 = vmatpush1.bf16.msra.mxu0 0
  %1680 = vmatprep.subr.bf16.mxu0 0
  %1681 = vmatpush1.bf16.msra.mxu0 0
  %1682 = vmatprep.subr.bf16.mxu0 0
  %1683 = vmatpush1.bf16.msra.mxu0 0
  %1684 = vmatprep.subr.bf16.mxu0 0
  %1685 = vmatpush1.bf16.msra.mxu0 0
  %1686 = vmatprep.subr.bf16.mxu0 0
  %1687 = vmatpush1.bf16.msra.mxu0 0
  %1688 = vmatprep.subr.bf16.mxu0 0
  %1689 = vmatpush1.bf16.msra.mxu0 0
  %1690 = vmatprep.subr.bf16.mxu0 0
  %1691 = vmatpush1.bf16.msra.mxu0 0
  %1692 = vmatprep.mubr.bf16.mxu0 0
  %1693 = vmatmul.mubr.bf16.gmra.mrb[0].mxu0 %v1655
  %v1694 = vpop.f32.mrb[0].mxu0
  %v1695 = vadd.f32 0.0, %v1694
  %v1696 = vpop.f32.mrb[0].mxu0
  %v1697 = vpop.f32.mrb[0].mxu0
  %v1698 = vadd.f32 0.0, %v1697
  %v1699 = vpop.f32.mrb[0].mxu0
  %1700 = vdwg.mxu0
  %v1701 = vadd.f32 %v1530, %v1695
  %v1702 = vadd.f32 %v1531, %v1698
  %v1704 = vlaneseq
  %v1705 = vshrl.u32 %v1704, 7
  %v1706 = vsub.s32 0, %v1705
  %v1707 = vrot.slane %v1022, %v1706
  %v1709 = vadd.f32 %v1701, %v1707
  %v1710 = vadd.f32 %v1702, %v1707
  %v1711 = vadd.f32 %v880, %v1709
  %v1712 = vadd.f32 %v881, %v1710
  %v1713 = vsel %vm100, %v1711, 0.0
  %1714 = vadd.xlane.f32.xlu0 %v1713
  %v1715 = vpop.xlane.xlu0 %1714
  %v1716 = vsel %vm100, %v1712, 0.0
  %1717 = vadd.xlane.f32.xlu0 %v1716
  %v1718 = vpop.xlane.xlu0 %1717
  %v1719 = vmul.f32 %v1715, %v849
  %v1720 = vmul.f32 %v1718, %v849
  %v1721 = vsub.f32 %v1711, %v1719
  %v1722 = vsub.f32 %v1712, %v1720
  %v1723 = vmul.f32 %v1721, %v1721
  %v1724 = vmul.f32 %v1722, %v1722
  %v1725 = vsel %vm100, %v1723, 0.0
  %1726 = vadd.xlane.f32.xlu0 %v1725
  %v1727 = vpop.xlane.xlu0 %1726
  %v1728 = vsel %vm100, %v1724, 0.0
  %1729 = vadd.xlane.f32.xlu0 %v1728
  %v1730 = vpop.xlane.xlu0 %1729
  %v1731 = vmul.f32 %v1727, %v849
  %v1732 = vmul.f32 %v1730, %v849
  %v1733 = vadd.f32 %v1731, 1e-05
  %v1734 = vadd.f32 %v1732, 1e-05
  %v1735 = vrsqrt.pop %v1733
  %v1736 = vrsqrt.pop %v1734
  %v1737 = vmul.f32 %v1721, %v1735
  %v1738 = vmul.f32 %v1722, %v1736
  %v1739 = vlaneseq
  %v1740 = vshrl.u32 %v1739, 7
  %v1741 = vsub.s32 1, %v1740
  %v1742 = vrot.slane %v74, %v1741
  %v1743 = vmul.f32 %v1737, %v1742
  %v1744 = vmul.f32 %v1738, %v1742
  %v1745 = vlaneseq
  %v1746 = vshrl.u32 %v1745, 7
  %v1747 = vsub.s32 1, %v1746
  %v1748 = vrot.slane %v75, %v1747
  %v1749 = vadd.f32 %v1743, %v1748
  %v1750 = vadd.f32 %v1744, %v1748
  %v1751 = vld [vmem:[%s14] sm:$0xf]
  %v1752 = vld [vmem:[%s14 + $0x4] sm:$0xf]
  %v1753 = vld [vmem:[%s14 + $0x8] sm:$0xf]
  %v1754 = vld [vmem:[%s14 + $0xc] sm:$0xf]
  %v1755 = vld [vmem:[%s15] sm:$0x1]
  %v1756 = vpack.c.bf16 %v1750, %v1749
  %v1758 = vlaneseq
  %v1759 = vshrl.u32 %v1758, 7
  %v1760 = vsub.s32 0, %v1759
  %v1761 = vrot.slane %v1755, %v1760
  %v1767 = vunpack.c.l.b16 %v1751
  %v1768 = vunpack.c.l.b16 %v1752
  %v1769 = vunpack.c.l.b16 %v1753
  %v1770 = vunpack.c.l.b16 %v1754
  %v1771 = vpack.c.b16 %v1768, %v1767
  %v1772 = vpack.c.b16 %v1770, %v1769
  %v1776 = vsel %vm100, %v1756, 0
  %1778 = vmatprep.subr.bf16.mxu0 0
  %1779 = vmatpush1.bf16.msra.mxu0 %v1771
  %1780 = vmatprep.subr.bf16.mxu0 0
  %1781 = vmatpush1.bf16.msra.mxu0 %v1772
  %1782 = vmatprep.subr.bf16.mxu0 0
  %1783 = vmatpush1.bf16.msra.mxu0 0
  %1784 = vmatprep.subr.bf16.mxu0 0
  %1785 = vmatpush1.bf16.msra.mxu0 0
  %1786 = vmatprep.subr.bf16.mxu0 0
  %1787 = vmatpush1.bf16.msra.mxu0 0
  %1788 = vmatprep.subr.bf16.mxu0 0
  %1789 = vmatpush1.bf16.msra.mxu0 0
  %1790 = vmatprep.subr.bf16.mxu0 0
  %1791 = vmatpush1.bf16.msra.mxu0 0
  %1792 = vmatprep.subr.bf16.mxu0 0
  %1793 = vmatpush1.bf16.msra.mxu0 0
  %1794 = vmatprep.subr.bf16.mxu0 0
  %1795 = vmatpush1.bf16.msra.mxu0 0
  %1796 = vmatprep.subr.bf16.mxu0 0
  %1797 = vmatpush1.bf16.msra.mxu0 0
  %1798 = vmatprep.subr.bf16.mxu0 0
  %1799 = vmatpush1.bf16.msra.mxu0 0
  %1800 = vmatprep.subr.bf16.mxu0 0
  %1801 = vmatpush1.bf16.msra.mxu0 0
  %1802 = vmatprep.subr.bf16.mxu0 0
  %1803 = vmatpush1.bf16.msra.mxu0 0
  %1804 = vmatprep.subr.bf16.mxu0 0
  %1805 = vmatpush1.bf16.msra.mxu0 0
  %1806 = vmatprep.subr.bf16.mxu0 0
  %1807 = vmatpush1.bf16.msra.mxu0 0
  %1808 = vmatprep.subr.bf16.mxu0 0
  %1809 = vmatpush1.bf16.msra.mxu0 0
  %1810 = vmatprep.mubr.bf16.mxu0 0
  %1811 = vmatmul.mubr.bf16.gmra.mrb[0].mxu0 %v1776
  %v1812 = vpop.f32.mrb[0].mxu0
  %v1813 = vadd.f32 %v1761, %v1812
  %v1814 = vpop.f32.mrb[0].mxu0
  %v1815 = vpop.f32.mrb[0].mxu0
  %v1816 = vadd.f32 %v1761, %v1815
  %v1817 = vpop.f32.mrb[0].mxu0
  %1818 = vdwg.mxu0
  %v1819 = vmax.f32 %v1813, 0.0
  %v1820 = vmax.f32 %v1816, 0.0
  %v1821 = vld [vmem:[%s16] sm:$0xf]
  %v1822 = vld [vmem:[%s16 + $0x4] sm:$0xf]
  %v1823 = vld [vmem:[%s16 + $0x8] sm:$0xf]
  %v1824 = vld [vmem:[%s16 + $0xc] sm:$0xf]
  %v1825 = vld [vmem:[%s16 + $0x10] sm:$0xf]
  %v1826 = vld [vmem:[%s16 + $0x14] sm:$0xf]
  %v1827 = vld [vmem:[%s16 + $0x18] sm:$0xf]
  %v1828 = vld [vmem:[%s16 + $0x1c] sm:$0xf]
  %v1829 = vld [vmem:[%s17] sm:$0x1]
  %v1830 = vpack.c.bf16 %v1820, %v1819
  %v1832 = vlaneseq
  %v1833 = vshrl.u32 %v1832, 7
  %v1834 = vsub.s32 0, %v1833
  %v1835 = vrot.slane %v1829, %v1834
  %v1845 = vunpack.c.l.b16 %v1821
  %v1846 = vunpack.c.l.b16 %v1822
  %v1847 = vunpack.c.l.b16 %v1823
  %v1848 = vunpack.c.l.b16 %v1824
  %v1849 = vunpack.c.l.b16 %v1825
  %v1850 = vunpack.c.l.b16 %v1826
  %v1851 = vunpack.c.l.b16 %v1827
  %v1852 = vunpack.c.l.b16 %v1828
  %v1853 = vpack.c.b16 %v1846, %v1845
  %v1854 = vpack.c.b16 %v1848, %v1847
  %v1855 = vpack.c.b16 %v1850, %v1849
  %v1856 = vpack.c.b16 %v1852, %v1851
  %vm1861 = vcmask 523264
  %v1863 = vsel %vm1861, %v1830, 0
  %1865 = vmatprep.subr.bf16.mxu0 0
  %1866 = vmatpush1.bf16.msra.mxu0 %v1853
  %1867 = vmatprep.subr.bf16.mxu0 0
  %1868 = vmatpush1.bf16.msra.mxu0 %v1854
  %1869 = vmatprep.subr.bf16.mxu0 0
  %1870 = vmatpush1.bf16.msra.mxu0 %v1855
  %1871 = vmatprep.subr.bf16.mxu0 0
  %1872 = vmatpush1.bf16.msra.mxu0 %v1856
  %1873 = vmatprep.subr.bf16.mxu0 0
  %1874 = vmatpush1.bf16.msra.mxu0 0
  %1875 = vmatprep.subr.bf16.mxu0 0
  %1876 = vmatpush1.bf16.msra.mxu0 0
  %1877 = vmatprep.subr.bf16.mxu0 0
  %1878 = vmatpush1.bf16.msra.mxu0 0
  %1879 = vmatprep.subr.bf16.mxu0 0
  %1880 = vmatpush1.bf16.msra.mxu0 0
  %1881 = vmatprep.subr.bf16.mxu0 0
  %1882 = vmatpush1.bf16.msra.mxu0 0
  %1883 = vmatprep.subr.bf16.mxu0 0
  %1884 = vmatpush1.bf16.msra.mxu0 0
  %1885 = vmatprep.subr.bf16.mxu0 0
  %1886 = vmatpush1.bf16.msra.mxu0 0
  %1887 = vmatprep.subr.bf16.mxu0 0
  %1888 = vmatpush1.bf16.msra.mxu0 0
  %1889 = vmatprep.subr.bf16.mxu0 0
  %1890 = vmatpush1.bf16.msra.mxu0 0
  %1891 = vmatprep.subr.bf16.mxu0 0
  %1892 = vmatpush1.bf16.msra.mxu0 0
  %1893 = vmatprep.subr.bf16.mxu0 0
  %1894 = vmatpush1.bf16.msra.mxu0 0
  %1895 = vmatprep.subr.bf16.mxu0 0
  %1896 = vmatpush1.bf16.msra.mxu0 0
  %1897 = vmatprep.mubr.bf16.mxu0 0
  %1898 = vmatmul.mubr.bf16.gmra.mrb[0].mxu0 %v1863
  %v1899 = vpop.f32.mrb[0].mxu0
  %v1900 = vadd.f32 %v1835, %v1899
  %v1901 = vpop.f32.mrb[0].mxu0
  %v1902 = vpop.f32.mrb[0].mxu0
  %v1903 = vadd.f32 %v1835, %v1902
  %v1904 = vpop.f32.mrb[0].mxu0
  %1905 = vdwg.mxu0
  %v1906 = vadd.f32 %v1749, %v1900
  %v1907 = vadd.f32 %v1750, %v1903
  %v1908 = vsel %vm100, %v1906, 0.0
  %1909 = vadd.xlane.f32.xlu0 %v1908
  %v1910 = vpop.xlane.xlu0 %1909
  %v1911 = vsel %vm100, %v1907, 0.0
  %1912 = vadd.xlane.f32.xlu0 %v1911
  %v1913 = vpop.xlane.xlu0 %1912
  %v1914 = vmul.f32 %v1910, %v849
  %v1915 = vmul.f32 %v1913, %v849
  %v1916 = vsub.f32 %v1906, %v1914
  %v1917 = vsub.f32 %v1907, %v1915
  %v1918 = vmul.f32 %v1916, %v1916
  %v1919 = vmul.f32 %v1917, %v1917
  %v1920 = vsel %vm100, %v1918, 0.0
  %1921 = vadd.xlane.f32.xlu0 %v1920
  %v1922 = vpop.xlane.xlu0 %1921
  %v1923 = vsel %vm100, %v1919, 0.0
  %1924 = vadd.xlane.f32.xlu0 %v1923
  %v1925 = vpop.xlane.xlu0 %1924
  %v1926 = vmul.f32 %v1922, %v849
  %v1927 = vmul.f32 %v1925, %v849
  %v1928 = vadd.f32 %v1926, 1e-05
  %v1929 = vadd.f32 %v1927, 1e-05
  %v1930 = vrsqrt.pop %v1928
  %v1931 = vrsqrt.pop %v1929
  %v1932 = vmul.f32 %v1916, %v1930
  %v1933 = vmul.f32 %v1917, %v1931
  %v1934 = vlaneseq
  %v1935 = vshrl.u32 %v1934, 7
  %v1936 = vsub.s32 2, %v1935
  %v1937 = vrot.slane %v74, %v1936
  %v1938 = vmul.f32 %v1932, %v1937
  %v1939 = vmul.f32 %v1933, %v1937
  %v1940 = vlaneseq
  %v1941 = vshrl.u32 %v1940, 7
  %v1942 = vsub.s32 2, %v1941
  %v1943 = vrot.slane %v75, %v1942
  %v1944 = vadd.f32 %v1938, %v1943
  %v1945 = vadd.f32 %v1939, %v1943
  %s1946 = scalar_lea.vmem %s18, 4
  %v1947 = vld [vmem:[%s1946] sm:$0x7]
  %s1948 = scalar_lea.vmem %s19, 4
  %v1949 = vld [vmem:[%s1948] sm:$0x7]
  %s1950 = scalar_lea.vmem %s4, 16
  %v1951 = vld [vmem:[%s1950] sm:$0xf]
  %v1952 = vld [vmem:[%s1950 + $0x4] sm:$0xf]
  %v1953 = vld [vmem:[%s1950 + $0x8] sm:$0xf]
  %v1954 = vld [vmem:[%s1950 + $0xc] sm:$0xf]
  %s1955 = scalar_lea.vmem %s5, 1
  %v1956 = vld [vmem:[%s1955] sm:$0x1]
  %v1957 = vpack.c.bf16 %v1945, %v1944
  %v1959 = vlaneseq
  %v1960 = vshrl.u32 %v1959, 7
  %v1961 = vsub.s32 0, %v1960
  %v1962 = vrot.slane %v1956, %v1961
  %v1968 = vunpack.c.l.b16 %v1951
  %v1969 = vunpack.c.l.b16 %v1952
  %v1970 = vunpack.c.l.b16 %v1953
  %v1971 = vunpack.c.l.b16 %v1954
  %v1972 = vpack.c.b16 %v1969, %v1968
  %v1973 = vpack.c.b16 %v1971, %v1970
  %v1977 = vsel %vm100, %v1957, 0
  %1979 = vmatprep.subr.bf16.mxu0 0
  %1980 = vmatpush1.bf16.msra.mxu0 %v1972
  %1981 = vmatprep.subr.bf16.mxu0 0
  %1982 = vmatpush1.bf16.msra.mxu0 %v1973
  %1983 = vmatprep.subr.bf16.mxu0 0
  %1984 = vmatpush1.bf16.msra.mxu0 0
  %1985 = vmatprep.subr.bf16.mxu0 0
  %1986 = vmatpush1.bf16.msra.mxu0 0
  %1987 = vmatprep.subr.bf16.mxu0 0
  %1988 = vmatpush1.bf16.msra.mxu0 0
  %1989 = vmatprep.subr.bf16.mxu0 0
  %1990 = vmatpush1.bf16.msra.mxu0 0
  %1991 = vmatprep.subr.bf16.mxu0 0
  %1992 = vmatpush1.bf16.msra.mxu0 0
  %1993 = vmatprep.subr.bf16.mxu0 0
  %1994 = vmatpush1.bf16.msra.mxu0 0
  %1995 = vmatprep.subr.bf16.mxu0 0
  %1996 = vmatpush1.bf16.msra.mxu0 0
  %1997 = vmatprep.subr.bf16.mxu0 0
  %1998 = vmatpush1.bf16.msra.mxu0 0
  %1999 = vmatprep.subr.bf16.mxu0 0
  %2000 = vmatpush1.bf16.msra.mxu0 0
  %2001 = vmatprep.subr.bf16.mxu0 0
  %2002 = vmatpush1.bf16.msra.mxu0 0
  %2003 = vmatprep.subr.bf16.mxu0 0
  %2004 = vmatpush1.bf16.msra.mxu0 0
  %2005 = vmatprep.subr.bf16.mxu0 0
  %2006 = vmatpush1.bf16.msra.mxu0 0
  %2007 = vmatprep.subr.bf16.mxu0 0
  %2008 = vmatpush1.bf16.msra.mxu0 0
  %2009 = vmatprep.subr.bf16.mxu0 0
  %2010 = vmatpush1.bf16.msra.mxu0 0
  %2011 = vmatprep.mubr.bf16.mxu0 0
  %2012 = vmatmul.mubr.bf16.gmra.mrb[0].mxu0 %v1977
  %v2013 = vpop.f32.mrb[0].mxu0
  %v2014 = vadd.f32 %v1962, %v2013
  %v2015 = vpop.f32.mrb[0].mxu0
  %v2016 = vpop.f32.mrb[0].mxu0
  %v2017 = vadd.f32 %v1962, %v2016
  %v2018 = vpop.f32.mrb[0].mxu0
  %2019 = vdwg.mxu0
  %s2020 = scalar_lea.vmem %s6, 16
  %v2021 = vld [vmem:[%s2020] sm:$0xf]
  %v2022 = vld [vmem:[%s2020 + $0x4] sm:$0xf]
  %v2023 = vld [vmem:[%s2020 + $0x8] sm:$0xf]
  %v2024 = vld [vmem:[%s2020 + $0xc] sm:$0xf]
  %s2025 = scalar_lea.vmem %s7, 1
  %v2026 = vld [vmem:[%s2025] sm:$0x1]
  %v2027 = vpack.c.bf16 %v2017, %v2014
  %2029 = vrot.lane.b32.xlu0 %v2027, 96
  %v2030 = vpop.permute.xlu0 %2029
  %v2032 = vsel %vm154, %v2027, 0
  %v2035 = vsel %vm154, %v2030, 0
  %2037 = vmatprep.subr.bf16.mxu0 0
  %2038 = vmatpush1.bf16.xpose.msra.mxu0 %v2035
  %2039 = vmatprep.subr.bf16.mxu0 0
  %2040 = vmatpush1.bf16.xpose.msra.mxu0 0
  %2041 = vmatprep.subr.bf16.mxu0 0
  %2042 = vmatpush1.bf16.xpose.msra.mxu0 0
  %2043 = vmatprep.subr.bf16.mxu0 0
  %2044 = vmatpush1.bf16.xpose.msra.mxu0 0
  %2045 = vmatprep.subr.bf16.mxu0 0
  %2046 = vmatpush1.bf16.xpose.msra.mxu0 0
  %2047 = vmatprep.subr.bf16.mxu0 0
  %2048 = vmatpush1.bf16.xpose.msra.mxu0 0
  %2049 = vmatprep.subr.bf16.mxu0 0
  %2050 = vmatpush1.bf16.xpose.msra.mxu0 0
  %2051 = vmatprep.subr.bf16.mxu0 0
  %2052 = vmatpush1.bf16.xpose.msra.mxu0 0
  %2053 = vmatprep.subr.bf16.mxu0 0
  %2054 = vmatpush1.bf16.xpose.msra.mxu0 0
  %2055 = vmatprep.subr.bf16.mxu0 0
  %2056 = vmatpush1.bf16.xpose.msra.mxu0 0
  %2057 = vmatprep.subr.bf16.mxu0 0
  %2058 = vmatpush1.bf16.xpose.msra.mxu0 0
  %2059 = vmatprep.subr.bf16.mxu0 0
  %2060 = vmatpush1.bf16.xpose.msra.mxu0 0
  %2061 = vmatprep.subr.bf16.mxu0 0
  %2062 = vmatpush1.bf16.xpose.msra.mxu0 0
  %2063 = vmatprep.subr.bf16.mxu0 0
  %2064 = vmatpush1.bf16.xpose.msra.mxu0 0
  %2065 = vmatprep.subr.bf16.mxu0 0
  %2066 = vmatpush1.bf16.xpose.msra.mxu0 0
  %2067 = vmatprep.subr.bf16.mxu0 0
  %2068 = vmatpush1.bf16.xpose.msra.mxu0 0
  %2069 = vmatprep.mubr.bf16.mxu0 0
  %2070 = vmatmul.mubr.bf16.gmra.mrb[0].mxu0 %v2032
  %v2071 = vpop.f32.mrb[0].mxu0
  %v2072 = vadd.f32 %v70, %v2071
  %v2073 = vpop.f32.mrb[0].mxu0
  %v2074 = vpop.f32.mrb[0].mxu0
  %v2075 = vadd.f32 %v71, %v2074
  %v2076 = vpop.f32.mrb[0].mxu0
  %2077 = vdwg.mxu0
  %v2078 = vsel %vm202, %v2072, -inf
  %2079 = vmax.xlane.f32.xlu0 %v2078
  %v2080 = vpop.xlane.xlu0 %2079
  %v2081 = vsel %vm202, %v2075, -inf
  %2082 = vmax.xlane.f32.xlu0 %v2081
  %v2083 = vpop.xlane.xlu0 %2082
  %v2084 = vsub.f32 %v2072, %v2080
  %v2085 = vsub.f32 %v2075, %v2083
  %v2086 = vmul.f32 %v2084, 1.442695
  %v2087 = vpow.pop %v2086
  %v2088 = vmul.f32 %v2085, 1.442695
  %v2089 = vpow.pop %v2088
  %v2090 = vsel %vm202, %v2087, 0.0
  %2091 = vadd.xlane.f32.xlu0 %v2090
  %v2092 = vpop.xlane.xlu0 %2091
  %v2093 = vsel %vm202, %v2089, 0.0
  %2094 = vadd.xlane.f32.xlu0 %v2093
  %v2095 = vpop.xlane.xlu0 %2094
  %v2096 = vrcp.pop %v2092
  %v2097 = vrcp.pop %v2095
  %v2098 = vmul.f32 %v2087, %v2096
  %v2099 = vmul.f32 %v2089, %v2097
  %v2100 = vpack.c.bf16 %v2099, %v2098
  %2101 = vrot.lane.b32.xlu0 %v2027, 64
  %v2102 = vpop.permute.xlu0 %2101
  %v2105 = vsel %vm202, %v2100, 0
  %2107 = vmatprep.subr.bf16.mxu0 0
  %2108 = vmatpush1.bf16.msra.mxu0 %v2102
  %2109 = vmatprep.subr.bf16.mxu0 0
  %2110 = vmatpush1.bf16.msra.mxu0 0
  %2111 = vmatprep.subr.bf16.mxu0 0
  %2112 = vmatpush1.bf16.msra.mxu0 0
  %2113 = vmatprep.subr.bf16.mxu0 0
  %2114 = vmatpush1.bf16.msra.mxu0 0
  %2115 = vmatprep.subr.bf16.mxu0 0
  %2116 = vmatpush1.bf16.msra.mxu0 0
  %2117 = vmatprep.subr.bf16.mxu0 0
  %2118 = vmatpush1.bf16.msra.mxu0 0
  %2119 = vmatprep.subr.bf16.mxu0 0
  %2120 = vmatpush1.bf16.msra.mxu0 0
  %2121 = vmatprep.subr.bf16.mxu0 0
  %2122 = vmatpush1.bf16.msra.mxu0 0
  %2123 = vmatprep.subr.bf16.mxu0 0
  %2124 = vmatpush1.bf16.msra.mxu0 0
  %2125 = vmatprep.subr.bf16.mxu0 0
  %2126 = vmatpush1.bf16.msra.mxu0 0
  %2127 = vmatprep.subr.bf16.mxu0 0
  %2128 = vmatpush1.bf16.msra.mxu0 0
  %2129 = vmatprep.subr.bf16.mxu0 0
  %2130 = vmatpush1.bf16.msra.mxu0 0
  %2131 = vmatprep.subr.bf16.mxu0 0
  %2132 = vmatpush1.bf16.msra.mxu0 0
  %2133 = vmatprep.subr.bf16.mxu0 0
  %2134 = vmatpush1.bf16.msra.mxu0 0
  %2135 = vmatprep.subr.bf16.mxu0 0
  %2136 = vmatpush1.bf16.msra.mxu0 0
  %2137 = vmatprep.subr.bf16.mxu0 0
  %2138 = vmatpush1.bf16.msra.mxu0 0
  %2139 = vmatprep.mubr.bf16.mxu0 0
  %2140 = vmatmul.mubr.bf16.gmra.mrb[0].mxu0 %v2105
  %v2141 = vpop.f32.mrb[0].mxu0
  %v2142 = vadd.f32 0.0, %v2141
  %v2143 = vpop.f32.mrb[0].mxu0
  %v2144 = vpop.f32.mrb[0].mxu0
  %v2145 = vadd.f32 0.0, %v2144
  %v2146 = vpop.f32.mrb[0].mxu0
  %2147 = vdwg.mxu0
  %v2148 = vpack.c.bf16 %v2145, %v2142
  %2149 = vrot.lane.b32.xlu0 %v2027, 120
  %v2150 = vpop.permute.xlu0 %2149
  %2151 = vrot.lane.b32.xlu0 %v2027, 88
  %v2152 = vpop.permute.xlu0 %2151
  %v2154 = vsel %vm154, %v2150, 0
  %v2157 = vsel %vm154, %v2152, 0
  %2159 = vmatprep.subr.bf16.mxu0 0
  %2160 = vmatpush1.bf16.xpose.msra.mxu0 %v2157
  %2161 = vmatprep.subr.bf16.mxu0 0
  %2162 = vmatpush1.bf16.xpose.msra.mxu0 0
  %2163 = vmatprep.subr.bf16.mxu0 0
  %2164 = vmatpush1.bf16.xpose.msra.mxu0 0
  %2165 = vmatprep.subr.bf16.mxu0 0
  %2166 = vmatpush1.bf16.xpose.msra.mxu0 0
  %2167 = vmatprep.subr.bf16.mxu0 0
  %2168 = vmatpush1.bf16.xpose.msra.mxu0 0
  %2169 = vmatprep.subr.bf16.mxu0 0
  %2170 = vmatpush1.bf16.xpose.msra.mxu0 0
  %2171 = vmatprep.subr.bf16.mxu0 0
  %2172 = vmatpush1.bf16.xpose.msra.mxu0 0
  %2173 = vmatprep.subr.bf16.mxu0 0
  %2174 = vmatpush1.bf16.xpose.msra.mxu0 0
  %2175 = vmatprep.subr.bf16.mxu0 0
  %2176 = vmatpush1.bf16.xpose.msra.mxu0 0
  %2177 = vmatprep.subr.bf16.mxu0 0
  %2178 = vmatpush1.bf16.xpose.msra.mxu0 0
  %2179 = vmatprep.subr.bf16.mxu0 0
  %2180 = vmatpush1.bf16.xpose.msra.mxu0 0
  %2181 = vmatprep.subr.bf16.mxu0 0
  %2182 = vmatpush1.bf16.xpose.msra.mxu0 0
  %2183 = vmatprep.subr.bf16.mxu0 0
  %2184 = vmatpush1.bf16.xpose.msra.mxu0 0
  %2185 = vmatprep.subr.bf16.mxu0 0
  %2186 = vmatpush1.bf16.xpose.msra.mxu0 0
  %2187 = vmatprep.subr.bf16.mxu0 0
  %2188 = vmatpush1.bf16.xpose.msra.mxu0 0
  %2189 = vmatprep.subr.bf16.mxu0 0
  %2190 = vmatpush1.bf16.xpose.msra.mxu0 0
  %2191 = vmatprep.mubr.bf16.mxu0 0
  %2192 = vmatmul.mubr.bf16.gmra.mrb[0].mxu0 %v2154
  %v2193 = vpop.f32.mrb[0].mxu0
  %v2194 = vadd.f32 %v70, %v2193
  %v2195 = vpop.f32.mrb[0].mxu0
  %v2196 = vpop.f32.mrb[0].mxu0
  %v2197 = vadd.f32 %v71, %v2196
  %v2198 = vpop.f32.mrb[0].mxu0
  %2199 = vdwg.mxu0
  %v2200 = vsel %vm202, %v2194, -inf
  %2201 = vmax.xlane.f32.xlu0 %v2200
  %v2202 = vpop.xlane.xlu0 %2201
  %v2203 = vsel %vm202, %v2197, -inf
  %2204 = vmax.xlane.f32.xlu0 %v2203
  %v2205 = vpop.xlane.xlu0 %2204
  %v2206 = vsub.f32 %v2194, %v2202
  %v2207 = vsub.f32 %v2197, %v2205
  %v2208 = vmul.f32 %v2206, 1.442695
  %v2209 = vpow.pop %v2208
  %v2210 = vmul.f32 %v2207, 1.442695
  %v2211 = vpow.pop %v2210
  %v2212 = vsel %vm202, %v2209, 0.0
  %2213 = vadd.xlane.f32.xlu0 %v2212
  %v2214 = vpop.xlane.xlu0 %2213
  %v2215 = vsel %vm202, %v2211, 0.0
  %2216 = vadd.xlane.f32.xlu0 %v2215
  %v2217 = vpop.xlane.xlu0 %2216
  %v2218 = vrcp.pop %v2214
  %v2219 = vrcp.pop %v2217
  %v2220 = vmul.f32 %v2209, %v2218
  %v2221 = vmul.f32 %v2211, %v2219
  %v2222 = vpack.c.bf16 %v2221, %v2220
  %2223 = vrot.lane.b32.xlu0 %v2027, 56
  %v2224 = vpop.permute.xlu0 %2223
  %v2227 = vsel %vm202, %v2222, 0
  %2229 = vmatprep.subr.bf16.mxu0 0
  %2230 = vmatpush1.bf16.msra.mxu0 %v2224
  %2231 = vmatprep.subr.bf16.mxu0 0
  %2232 = vmatpush1.bf16.msra.mxu0 0
  %2233 = vmatprep.subr.bf16.mxu0 0
  %2234 = vmatpush1.bf16.msra.mxu0 0
  %2235 = vmatprep.subr.bf16.mxu0 0
  %2236 = vmatpush1.bf16.msra.mxu0 0
  %2237 = vmatprep.subr.bf16.mxu0 0
  %2238 = vmatpush1.bf16.msra.mxu0 0
  %2239 = vmatprep.subr.bf16.mxu0 0
  %2240 = vmatpush1.bf16.msra.mxu0 0
  %2241 = vmatprep.subr.bf16.mxu0 0
  %2242 = vmatpush1.bf16.msra.mxu0 0
  %2243 = vmatprep.subr.bf16.mxu0 0
  %2244 = vmatpush1.bf16.msra.mxu0 0
  %2245 = vmatprep.subr.bf16.mxu0 0
  %2246 = vmatpush1.bf16.msra.mxu0 0
  %2247 = vmatprep.subr.bf16.mxu0 0
  %2248 = vmatpush1.bf16.msra.mxu0 0
  %2249 = vmatprep.subr.bf16.mxu0 0
  %2250 = vmatpush1.bf16.msra.mxu0 0
  %2251 = vmatprep.subr.bf16.mxu0 0
  %2252 = vmatpush1.bf16.msra.mxu0 0
  %2253 = vmatprep.subr.bf16.mxu0 0
  %2254 = vmatpush1.bf16.msra.mxu0 0
  %2255 = vmatprep.subr.bf16.mxu0 0
  %2256 = vmatpush1.bf16.msra.mxu0 0
  %2257 = vmatprep.subr.bf16.mxu0 0
  %2258 = vmatpush1.bf16.msra.mxu0 0
  %2259 = vmatprep.subr.bf16.mxu0 0
  %2260 = vmatpush1.bf16.msra.mxu0 0
  %2261 = vmatprep.mubr.bf16.mxu0 0
  %2262 = vmatmul.mubr.bf16.gmra.mrb[0].mxu0 %v2227
  %v2263 = vpop.f32.mrb[0].mxu0
  %v2264 = vadd.f32 0.0, %v2263
  %v2265 = vpop.f32.mrb[0].mxu0
  %v2266 = vpop.f32.mrb[0].mxu0
  %v2267 = vadd.f32 0.0, %v2266
  %v2268 = vpop.f32.mrb[0].mxu0
  %2269 = vdwg.mxu0
  %v2270 = vpack.c.bf16 %v2267, %v2264
  %v2272 = vsel %vm154, %v2270, 0
  %v2275 = vsel %vm399, %v2022, 0
  %2277 = vmatprep.subr.bf16.mxu0 0
  %2278 = vmatpush1.bf16.msra.mxu0 %v2275
  %2279 = vmatprep.subr.bf16.mxu0 0
  %2280 = vmatpush1.bf16.msra.mxu0 0
  %2281 = vmatprep.subr.bf16.mxu0 0
  %2282 = vmatpush1.bf16.msra.mxu0 0
  %2283 = vmatprep.subr.bf16.mxu0 0
  %2284 = vmatpush1.bf16.msra.mxu0 0
  %2285 = vmatprep.subr.bf16.mxu0 0
  %2286 = vmatpush1.bf16.msra.mxu0 0
  %2287 = vmatprep.subr.bf16.mxu0 0
  %2288 = vmatpush1.bf16.msra.mxu0 0
  %2289 = vmatprep.subr.bf16.mxu0 0
  %2290 = vmatpush1.bf16.msra.mxu0 0
  %2291 = vmatprep.subr.bf16.mxu0 0
  %2292 = vmatpush1.bf16.msra.mxu0 0
  %2293 = vmatprep.subr.bf16.mxu0 0
  %2294 = vmatpush1.bf16.msra.mxu0 0
  %2295 = vmatprep.subr.bf16.mxu0 0
  %2296 = vmatpush1.bf16.msra.mxu0 0
  %2297 = vmatprep.subr.bf16.mxu0 0
  %2298 = vmatpush1.bf16.msra.mxu0 0
  %2299 = vmatprep.subr.bf16.mxu0 0
  %2300 = vmatpush1.bf16.msra.mxu0 0
  %2301 = vmatprep.subr.bf16.mxu0 0
  %2302 = vmatpush1.bf16.msra.mxu0 0
  %2303 = vmatprep.subr.bf16.mxu0 0
  %2304 = vmatpush1.bf16.msra.mxu0 0
  %2305 = vmatprep.subr.bf16.mxu0 0
  %2306 = vmatpush1.bf16.msra.mxu0 0
  %2307 = vmatprep.subr.bf16.mxu0 0
  %2308 = vmatpush1.bf16.msra.mxu0 0
  %2309 = vmatprep.mubr.bf16.mxu0 0
  %2310 = vmatmul.mubr.bf16.gmra.mrb[0].mxu0 %v2272
  %v2311 = vpop.f32.mrb[0].mxu0
  %v2312 = vadd.f32 0.0, %v2311
  %v2313 = vpop.f32.mrb[0].mxu0
  %v2314 = vpop.f32.mrb[0].mxu0
  %v2315 = vadd.f32 0.0, %v2314
  %v2316 = vpop.f32.mrb[0].mxu0
  %2317 = vdwg.mxu0
  %v2319 = vsel %vm154, %v2148, 0
  %v2322 = vsel %vm399, %v2021, 0
  %2324 = vmatprep.subr.bf16.mxu0 0
  %2325 = vmatpush1.bf16.msra.mxu0 %v2322
  %2326 = vmatprep.subr.bf16.mxu0 0
  %2327 = vmatpush1.bf16.msra.mxu0 0
  %2328 = vmatprep.subr.bf16.mxu0 0
  %2329 = vmatpush1.bf16.msra.mxu0 0
  %2330 = vmatprep.subr.bf16.mxu0 0
  %2331 = vmatpush1.bf16.msra.mxu0 0
  %2332 = vmatprep.subr.bf16.mxu0 0
  %2333 = vmatpush1.bf16.msra.mxu0 0
  %2334 = vmatprep.subr.bf16.mxu0 0
  %2335 = vmatpush1.bf16.msra.mxu0 0
  %2336 = vmatprep.subr.bf16.mxu0 0
  %2337 = vmatpush1.bf16.msra.mxu0 0
  %2338 = vmatprep.subr.bf16.mxu0 0
  %2339 = vmatpush1.bf16.msra.mxu0 0
  %2340 = vmatprep.subr.bf16.mxu0 0
  %2341 = vmatpush1.bf16.msra.mxu0 0
  %2342 = vmatprep.subr.bf16.mxu0 0
  %2343 = vmatpush1.bf16.msra.mxu0 0
  %2344 = vmatprep.subr.bf16.mxu0 0
  %2345 = vmatpush1.bf16.msra.mxu0 0
  %2346 = vmatprep.subr.bf16.mxu0 0
  %2347 = vmatpush1.bf16.msra.mxu0 0
  %2348 = vmatprep.subr.bf16.mxu0 0
  %2349 = vmatpush1.bf16.msra.mxu0 0
  %2350 = vmatprep.subr.bf16.mxu0 0
  %2351 = vmatpush1.bf16.msra.mxu0 0
  %2352 = vmatprep.subr.bf16.mxu0 0
  %2353 = vmatpush1.bf16.msra.mxu0 0
  %2354 = vmatprep.subr.bf16.mxu0 0
  %2355 = vmatpush1.bf16.msra.mxu0 0
  %2356 = vmatprep.mubr.bf16.mxu0 0
  %2357 = vmatmul.mubr.bf16.gmra.mrb[0].mxu0 %v2319
  %v2358 = vpop.f32.mrb[0].mxu0
  %v2359 = vadd.f32 %v2312, %v2358
  %v2360 = vpop.f32.mrb[0].mxu0
  %v2361 = vpop.f32.mrb[0].mxu0
  %v2362 = vadd.f32 %v2315, %v2361
  %v2363 = vpop.f32.mrb[0].mxu0
  %2364 = vdwg.mxu0
  %2365 = vrot.lane.b32.xlu0 %v2027, 112
  %v2366 = vpop.permute.xlu0 %2365
  %2367 = vrot.lane.b32.xlu0 %v2027, 80
  %v2368 = vpop.permute.xlu0 %2367
  %v2370 = vsel %vm154, %v2366, 0
  %v2373 = vsel %vm154, %v2368, 0
  %2375 = vmatprep.subr.bf16.mxu0 0
  %2376 = vmatpush1.bf16.xpose.msra.mxu0 %v2373
  %2377 = vmatprep.subr.bf16.mxu0 0
  %2378 = vmatpush1.bf16.xpose.msra.mxu0 0
  %2379 = vmatprep.subr.bf16.mxu0 0
  %2380 = vmatpush1.bf16.xpose.msra.mxu0 0
  %2381 = vmatprep.subr.bf16.mxu0 0
  %2382 = vmatpush1.bf16.xpose.msra.mxu0 0
  %2383 = vmatprep.subr.bf16.mxu0 0
  %2384 = vmatpush1.bf16.xpose.msra.mxu0 0
  %2385 = vmatprep.subr.bf16.mxu0 0
  %2386 = vmatpush1.bf16.xpose.msra.mxu0 0
  %2387 = vmatprep.subr.bf16.mxu0 0
  %2388 = vmatpush1.bf16.xpose.msra.mxu0 0
  %2389 = vmatprep.subr.bf16.mxu0 0
  %2390 = vmatpush1.bf16.xpose.msra.mxu0 0
  %2391 = vmatprep.subr.bf16.mxu0 0
  %2392 = vmatpush1.bf16.xpose.msra.mxu0 0
  %2393 = vmatprep.subr.bf16.mxu0 0
  %2394 = vmatpush1.bf16.xpose.msra.mxu0 0
  %2395 = vmatprep.subr.bf16.mxu0 0
  %2396 = vmatpush1.bf16.xpose.msra.mxu0 0
  %2397 = vmatprep.subr.bf16.mxu0 0
  %2398 = vmatpush1.bf16.xpose.msra.mxu0 0
  %2399 = vmatprep.subr.bf16.mxu0 0
  %2400 = vmatpush1.bf16.xpose.msra.mxu0 0
  %2401 = vmatprep.subr.bf16.mxu0 0
  %2402 = vmatpush1.bf16.xpose.msra.mxu0 0
  %2403 = vmatprep.subr.bf16.mxu0 0
  %2404 = vmatpush1.bf16.xpose.msra.mxu0 0
  %2405 = vmatprep.subr.bf16.mxu0 0
  %2406 = vmatpush1.bf16.xpose.msra.mxu0 0
  %2407 = vmatprep.mubr.bf16.mxu0 0
  %2408 = vmatmul.mubr.bf16.gmra.mrb[0].mxu0 %v2370
  %v2409 = vpop.f32.mrb[0].mxu0
  %v2410 = vadd.f32 %v70, %v2409
  %v2411 = vpop.f32.mrb[0].mxu0
  %v2412 = vpop.f32.mrb[0].mxu0
  %v2413 = vadd.f32 %v71, %v2412
  %v2414 = vpop.f32.mrb[0].mxu0
  %2415 = vdwg.mxu0
  %v2416 = vsel %vm202, %v2410, -inf
  %2417 = vmax.xlane.f32.xlu0 %v2416
  %v2418 = vpop.xlane.xlu0 %2417
  %v2419 = vsel %vm202, %v2413, -inf
  %2420 = vmax.xlane.f32.xlu0 %v2419
  %v2421 = vpop.xlane.xlu0 %2420
  %v2422 = vsub.f32 %v2410, %v2418
  %v2423 = vsub.f32 %v2413, %v2421
  %v2424 = vmul.f32 %v2422, 1.442695
  %v2425 = vpow.pop %v2424
  %v2426 = vmul.f32 %v2423, 1.442695
  %v2427 = vpow.pop %v2426
  %v2428 = vsel %vm202, %v2425, 0.0
  %2429 = vadd.xlane.f32.xlu0 %v2428
  %v2430 = vpop.xlane.xlu0 %2429
  %v2431 = vsel %vm202, %v2427, 0.0
  %2432 = vadd.xlane.f32.xlu0 %v2431
  %v2433 = vpop.xlane.xlu0 %2432
  %v2434 = vrcp.pop %v2430
  %v2435 = vrcp.pop %v2433
  %v2436 = vmul.f32 %v2425, %v2434
  %v2437 = vmul.f32 %v2427, %v2435
  %v2438 = vpack.c.bf16 %v2437, %v2436
  %2439 = vrot.lane.b32.xlu0 %v2027, 48
  %v2440 = vpop.permute.xlu0 %2439
  %v2443 = vsel %vm202, %v2438, 0
  %2445 = vmatprep.subr.bf16.mxu0 0
  %2446 = vmatpush1.bf16.msra.mxu0 %v2440
  %2447 = vmatprep.subr.bf16.mxu0 0
  %2448 = vmatpush1.bf16.msra.mxu0 0
  %2449 = vmatprep.subr.bf16.mxu0 0
  %2450 = vmatpush1.bf16.msra.mxu0 0
  %2451 = vmatprep.subr.bf16.mxu0 0
  %2452 = vmatpush1.bf16.msra.mxu0 0
  %2453 = vmatprep.subr.bf16.mxu0 0
  %2454 = vmatpush1.bf16.msra.mxu0 0
  %2455 = vmatprep.subr.bf16.mxu0 0
  %2456 = vmatpush1.bf16.msra.mxu0 0
  %2457 = vmatprep.subr.bf16.mxu0 0
  %2458 = vmatpush1.bf16.msra.mxu0 0
  %2459 = vmatprep.subr.bf16.mxu0 0
  %2460 = vmatpush1.bf16.msra.mxu0 0
  %2461 = vmatprep.subr.bf16.mxu0 0
  %2462 = vmatpush1.bf16.msra.mxu0 0
  %2463 = vmatprep.subr.bf16.mxu0 0
  %2464 = vmatpush1.bf16.msra.mxu0 0
  %2465 = vmatprep.subr.bf16.mxu0 0
  %2466 = vmatpush1.bf16.msra.mxu0 0
  %2467 = vmatprep.subr.bf16.mxu0 0
  %2468 = vmatpush1.bf16.msra.mxu0 0
  %2469 = vmatprep.subr.bf16.mxu0 0
  %2470 = vmatpush1.bf16.msra.mxu0 0
  %2471 = vmatprep.subr.bf16.mxu0 0
  %2472 = vmatpush1.bf16.msra.mxu0 0
  %2473 = vmatprep.subr.bf16.mxu0 0
  %2474 = vmatpush1.bf16.msra.mxu0 0
  %2475 = vmatprep.subr.bf16.mxu0 0
  %2476 = vmatpush1.bf16.msra.mxu0 0
  %2477 = vmatprep.mubr.bf16.mxu0 0
  %2478 = vmatmul.mubr.bf16.gmra.mrb[0].mxu0 %v2443
  %v2479 = vpop.f32.mrb[0].mxu0
  %v2480 = vadd.f32 0.0, %v2479
  %v2481 = vpop.f32.mrb[0].mxu0
  %v2482 = vpop.f32.mrb[0].mxu0
  %v2483 = vadd.f32 0.0, %v2482
  %v2484 = vpop.f32.mrb[0].mxu0
  %2485 = vdwg.mxu0
  %v2486 = vpack.c.bf16 %v2483, %v2480
  %v2488 = vsel %vm154, %v2486, 0
  %v2491 = vsel %vm399, %v2023, 0
  %2493 = vmatprep.subr.bf16.mxu0 0
  %2494 = vmatpush1.bf16.msra.mxu0 %v2491
  %2495 = vmatprep.subr.bf16.mxu0 0
  %2496 = vmatpush1.bf16.msra.mxu0 0
  %2497 = vmatprep.subr.bf16.mxu0 0
  %2498 = vmatpush1.bf16.msra.mxu0 0
  %2499 = vmatprep.subr.bf16.mxu0 0
  %2500 = vmatpush1.bf16.msra.mxu0 0
  %2501 = vmatprep.subr.bf16.mxu0 0
  %2502 = vmatpush1.bf16.msra.mxu0 0
  %2503 = vmatprep.subr.bf16.mxu0 0
  %2504 = vmatpush1.bf16.msra.mxu0 0
  %2505 = vmatprep.subr.bf16.mxu0 0
  %2506 = vmatpush1.bf16.msra.mxu0 0
  %2507 = vmatprep.subr.bf16.mxu0 0
  %2508 = vmatpush1.bf16.msra.mxu0 0
  %2509 = vmatprep.subr.bf16.mxu0 0
  %2510 = vmatpush1.bf16.msra.mxu0 0
  %2511 = vmatprep.subr.bf16.mxu0 0
  %2512 = vmatpush1.bf16.msra.mxu0 0
  %2513 = vmatprep.subr.bf16.mxu0 0
  %2514 = vmatpush1.bf16.msra.mxu0 0
  %2515 = vmatprep.subr.bf16.mxu0 0
  %2516 = vmatpush1.bf16.msra.mxu0 0
  %2517 = vmatprep.subr.bf16.mxu0 0
  %2518 = vmatpush1.bf16.msra.mxu0 0
  %2519 = vmatprep.subr.bf16.mxu0 0
  %2520 = vmatpush1.bf16.msra.mxu0 0
  %2521 = vmatprep.subr.bf16.mxu0 0
  %2522 = vmatpush1.bf16.msra.mxu0 0
  %2523 = vmatprep.subr.bf16.mxu0 0
  %2524 = vmatpush1.bf16.msra.mxu0 0
  %2525 = vmatprep.mubr.bf16.mxu0 0
  %2526 = vmatmul.mubr.bf16.gmra.mrb[0].mxu0 %v2488
  %v2527 = vpop.f32.mrb[0].mxu0
  %v2528 = vadd.f32 0.0, %v2527
  %v2529 = vpop.f32.mrb[0].mxu0
  %v2530 = vpop.f32.mrb[0].mxu0
  %v2531 = vadd.f32 0.0, %v2530
  %v2532 = vpop.f32.mrb[0].mxu0
  %2533 = vdwg.mxu0
  %v2534 = vadd.f32 %v2359, %v2528
  %v2535 = vadd.f32 %v2362, %v2531
  %2536 = vrot.lane.b32.xlu0 %v2027, 104
  %v2537 = vpop.permute.xlu0 %2536
  %2538 = vrot.lane.b32.xlu0 %v2027, 72
  %v2539 = vpop.permute.xlu0 %2538
  %v2541 = vsel %vm154, %v2537, 0
  %v2544 = vsel %vm154, %v2539, 0
  %2546 = vmatprep.subr.bf16.mxu0 0
  %2547 = vmatpush1.bf16.xpose.msra.mxu0 %v2544
  %2548 = vmatprep.subr.bf16.mxu0 0
  %2549 = vmatpush1.bf16.xpose.msra.mxu0 0
  %2550 = vmatprep.subr.bf16.mxu0 0
  %2551 = vmatpush1.bf16.xpose.msra.mxu0 0
  %2552 = vmatprep.subr.bf16.mxu0 0
  %2553 = vmatpush1.bf16.xpose.msra.mxu0 0
  %2554 = vmatprep.subr.bf16.mxu0 0
  %2555 = vmatpush1.bf16.xpose.msra.mxu0 0
  %2556 = vmatprep.subr.bf16.mxu0 0
  %2557 = vmatpush1.bf16.xpose.msra.mxu0 0
  %2558 = vmatprep.subr.bf16.mxu0 0
  %2559 = vmatpush1.bf16.xpose.msra.mxu0 0
  %2560 = vmatprep.subr.bf16.mxu0 0
  %2561 = vmatpush1.bf16.xpose.msra.mxu0 0
  %2562 = vmatprep.subr.bf16.mxu0 0
  %2563 = vmatpush1.bf16.xpose.msra.mxu0 0
  %2564 = vmatprep.subr.bf16.mxu0 0
  %2565 = vmatpush1.bf16.xpose.msra.mxu0 0
  %2566 = vmatprep.subr.bf16.mxu0 0
  %2567 = vmatpush1.bf16.xpose.msra.mxu0 0
  %2568 = vmatprep.subr.bf16.mxu0 0
  %2569 = vmatpush1.bf16.xpose.msra.mxu0 0
  %2570 = vmatprep.subr.bf16.mxu0 0
  %2571 = vmatpush1.bf16.xpose.msra.mxu0 0
  %2572 = vmatprep.subr.bf16.mxu0 0
  %2573 = vmatpush1.bf16.xpose.msra.mxu0 0
  %2574 = vmatprep.subr.bf16.mxu0 0
  %2575 = vmatpush1.bf16.xpose.msra.mxu0 0
  %2576 = vmatprep.subr.bf16.mxu0 0
  %2577 = vmatpush1.bf16.xpose.msra.mxu0 0
  %2578 = vmatprep.mubr.bf16.mxu0 0
  %2579 = vmatmul.mubr.bf16.gmra.mrb[0].mxu0 %v2541
  %v2580 = vpop.f32.mrb[0].mxu0
  %v2581 = vadd.f32 %v70, %v2580
  %v2582 = vpop.f32.mrb[0].mxu0
  %v2583 = vpop.f32.mrb[0].mxu0
  %v2584 = vadd.f32 %v71, %v2583
  %v2585 = vpop.f32.mrb[0].mxu0
  %2586 = vdwg.mxu0
  %v2587 = vsel %vm202, %v2581, -inf
  %2588 = vmax.xlane.f32.xlu0 %v2587
  %v2589 = vpop.xlane.xlu0 %2588
  %v2590 = vsel %vm202, %v2584, -inf
  %2591 = vmax.xlane.f32.xlu0 %v2590
  %v2592 = vpop.xlane.xlu0 %2591
  %v2593 = vsub.f32 %v2581, %v2589
  %v2594 = vsub.f32 %v2584, %v2592
  %v2595 = vmul.f32 %v2593, 1.442695
  %v2596 = vpow.pop %v2595
  %v2597 = vmul.f32 %v2594, 1.442695
  %v2598 = vpow.pop %v2597
  %v2599 = vsel %vm202, %v2596, 0.0
  %2600 = vadd.xlane.f32.xlu0 %v2599
  %v2601 = vpop.xlane.xlu0 %2600
  %v2602 = vsel %vm202, %v2598, 0.0
  %2603 = vadd.xlane.f32.xlu0 %v2602
  %v2604 = vpop.xlane.xlu0 %2603
  %v2605 = vrcp.pop %v2601
  %v2606 = vrcp.pop %v2604
  %v2607 = vmul.f32 %v2596, %v2605
  %v2608 = vmul.f32 %v2598, %v2606
  %v2609 = vpack.c.bf16 %v2608, %v2607
  %2610 = vrot.lane.b32.xlu0 %v2027, 40
  %v2611 = vpop.permute.xlu0 %2610
  %v2614 = vsel %vm202, %v2609, 0
  %2616 = vmatprep.subr.bf16.mxu0 0
  %2617 = vmatpush1.bf16.msra.mxu0 %v2611
  %2618 = vmatprep.subr.bf16.mxu0 0
  %2619 = vmatpush1.bf16.msra.mxu0 0
  %2620 = vmatprep.subr.bf16.mxu0 0
  %2621 = vmatpush1.bf16.msra.mxu0 0
  %2622 = vmatprep.subr.bf16.mxu0 0
  %2623 = vmatpush1.bf16.msra.mxu0 0
  %2624 = vmatprep.subr.bf16.mxu0 0
  %2625 = vmatpush1.bf16.msra.mxu0 0
  %2626 = vmatprep.subr.bf16.mxu0 0
  %2627 = vmatpush1.bf16.msra.mxu0 0
  %2628 = vmatprep.subr.bf16.mxu0 0
  %2629 = vmatpush1.bf16.msra.mxu0 0
  %2630 = vmatprep.subr.bf16.mxu0 0
  %2631 = vmatpush1.bf16.msra.mxu0 0
  %2632 = vmatprep.subr.bf16.mxu0 0
  %2633 = vmatpush1.bf16.msra.mxu0 0
  %2634 = vmatprep.subr.bf16.mxu0 0
  %2635 = vmatpush1.bf16.msra.mxu0 0
  %2636 = vmatprep.subr.bf16.mxu0 0
  %2637 = vmatpush1.bf16.msra.mxu0 0
  %2638 = vmatprep.subr.bf16.mxu0 0
  %2639 = vmatpush1.bf16.msra.mxu0 0
  %2640 = vmatprep.subr.bf16.mxu0 0
  %2641 = vmatpush1.bf16.msra.mxu0 0
  %2642 = vmatprep.subr.bf16.mxu0 0
  %2643 = vmatpush1.bf16.msra.mxu0 0
  %2644 = vmatprep.subr.bf16.mxu0 0
  %2645 = vmatpush1.bf16.msra.mxu0 0
  %2646 = vmatprep.subr.bf16.mxu0 0
  %2647 = vmatpush1.bf16.msra.mxu0 0
  %2648 = vmatprep.mubr.bf16.mxu0 0
  %2649 = vmatmul.mubr.bf16.gmra.mrb[0].mxu0 %v2614
  %v2650 = vpop.f32.mrb[0].mxu0
  %v2651 = vadd.f32 0.0, %v2650
  %v2652 = vpop.f32.mrb[0].mxu0
  %v2653 = vpop.f32.mrb[0].mxu0
  %v2654 = vadd.f32 0.0, %v2653
  %v2655 = vpop.f32.mrb[0].mxu0
  %2656 = vdwg.mxu0
  %v2657 = vpack.c.bf16 %v2654, %v2651
  %v2659 = vsel %vm154, %v2657, 0
  %v2662 = vsel %vm399, %v2024, 0
  %2664 = vmatprep.subr.bf16.mxu0 0
  %2665 = vmatpush1.bf16.msra.mxu0 %v2662
  %2666 = vmatprep.subr.bf16.mxu0 0
  %2667 = vmatpush1.bf16.msra.mxu0 0
  %2668 = vmatprep.subr.bf16.mxu0 0
  %2669 = vmatpush1.bf16.msra.mxu0 0
  %2670 = vmatprep.subr.bf16.mxu0 0
  %2671 = vmatpush1.bf16.msra.mxu0 0
  %2672 = vmatprep.subr.bf16.mxu0 0
  %2673 = vmatpush1.bf16.msra.mxu0 0
  %2674 = vmatprep.subr.bf16.mxu0 0
  %2675 = vmatpush1.bf16.msra.mxu0 0
  %2676 = vmatprep.subr.bf16.mxu0 0
  %2677 = vmatpush1.bf16.msra.mxu0 0
  %2678 = vmatprep.subr.bf16.mxu0 0
  %2679 = vmatpush1.bf16.msra.mxu0 0
  %2680 = vmatprep.subr.bf16.mxu0 0
  %2681 = vmatpush1.bf16.msra.mxu0 0
  %2682 = vmatprep.subr.bf16.mxu0 0
  %2683 = vmatpush1.bf16.msra.mxu0 0
  %2684 = vmatprep.subr.bf16.mxu0 0
  %2685 = vmatpush1.bf16.msra.mxu0 0
  %2686 = vmatprep.subr.bf16.mxu0 0
  %2687 = vmatpush1.bf16.msra.mxu0 0
  %2688 = vmatprep.subr.bf16.mxu0 0
  %2689 = vmatpush1.bf16.msra.mxu0 0
  %2690 = vmatprep.subr.bf16.mxu0 0
  %2691 = vmatpush1.bf16.msra.mxu0 0
  %2692 = vmatprep.subr.bf16.mxu0 0
  %2693 = vmatpush1.bf16.msra.mxu0 0
  %2694 = vmatprep.subr.bf16.mxu0 0
  %2695 = vmatpush1.bf16.msra.mxu0 0
  %2696 = vmatprep.mubr.bf16.mxu0 0
  %2697 = vmatmul.mubr.bf16.gmra.mrb[0].mxu0 %v2659
  %v2698 = vpop.f32.mrb[0].mxu0
  %v2699 = vadd.f32 0.0, %v2698
  %v2700 = vpop.f32.mrb[0].mxu0
  %v2701 = vpop.f32.mrb[0].mxu0
  %v2702 = vadd.f32 0.0, %v2701
  %v2703 = vpop.f32.mrb[0].mxu0
  %2704 = vdwg.mxu0
  %v2705 = vadd.f32 %v2534, %v2699
  %v2706 = vadd.f32 %v2535, %v2702
  %v2708 = vlaneseq
  %v2709 = vshrl.u32 %v2708, 7
  %v2710 = vsub.s32 0, %v2709
  %v2711 = vrot.slane %v2026, %v2710
  %v2713 = vadd.f32 %v2705, %v2711
  %v2714 = vadd.f32 %v2706, %v2711
  %v2715 = vadd.f32 %v1944, %v2713
  %v2716 = vadd.f32 %v1945, %v2714
  %v2717 = vsel %vm100, %v2715, 0.0
  %2718 = vadd.xlane.f32.xlu0 %v2717
  %v2719 = vpop.xlane.xlu0 %2718
  %v2720 = vsel %vm100, %v2716, 0.0
  %2721 = vadd.xlane.f32.xlu0 %v2720
  %v2722 = vpop.xlane.xlu0 %2721
  %v2723 = vmul.f32 %v2719, %v849
  %v2724 = vmul.f32 %v2722, %v849
  %v2725 = vsub.f32 %v2715, %v2723
  %v2726 = vsub.f32 %v2716, %v2724
  %v2727 = vmul.f32 %v2725, %v2725
  %v2728 = vmul.f32 %v2726, %v2726
  %v2729 = vsel %vm100, %v2727, 0.0
  %2730 = vadd.xlane.f32.xlu0 %v2729
  %v2731 = vpop.xlane.xlu0 %2730
  %v2732 = vsel %vm100, %v2728, 0.0
  %2733 = vadd.xlane.f32.xlu0 %v2732
  %v2734 = vpop.xlane.xlu0 %2733
  %v2735 = vmul.f32 %v2731, %v849
  %v2736 = vmul.f32 %v2734, %v849
  %v2737 = vadd.f32 %v2735, 1e-05
  %v2738 = vadd.f32 %v2736, 1e-05
  %v2739 = vrsqrt.pop %v2737
  %v2740 = vrsqrt.pop %v2738
  %v2741 = vmul.f32 %v2725, %v2739
  %v2742 = vmul.f32 %v2726, %v2740
  %v2743 = vlaneseq
  %v2744 = vshrl.u32 %v2743, 7
  %v2745 = vsub.s32 0, %v2744
  %v2746 = vrot.slane %v1947, %v2745
  %v2747 = vmul.f32 %v2741, %v2746
  %v2748 = vmul.f32 %v2742, %v2746
  %v2749 = vlaneseq
  %v2750 = vshrl.u32 %v2749, 7
  %v2751 = vsub.s32 0, %v2750
  %v2752 = vrot.slane %v1949, %v2751
  %v2753 = vadd.f32 %v2747, %v2752
  %v2754 = vadd.f32 %v2748, %v2752
  %s2755 = scalar_lea.vmem %s8, 16
  %v2756 = vld [vmem:[%s2755] sm:$0xf]
  %v2757 = vld [vmem:[%s2755 + $0x4] sm:$0xf]
  %v2758 = vld [vmem:[%s2755 + $0x8] sm:$0xf]
  %v2759 = vld [vmem:[%s2755 + $0xc] sm:$0xf]
  %s2760 = scalar_lea.vmem %s9, 1
  %v2761 = vld [vmem:[%s2760] sm:$0x1]
  %v2762 = vpack.c.bf16 %v2754, %v2753
  %v2764 = vlaneseq
  %v2765 = vshrl.u32 %v2764, 7
  %v2766 = vsub.s32 0, %v2765
  %v2767 = vrot.slane %v2761, %v2766
  %v2773 = vunpack.c.l.b16 %v2756
  %v2774 = vunpack.c.l.b16 %v2757
  %v2775 = vunpack.c.l.b16 %v2758
  %v2776 = vunpack.c.l.b16 %v2759
  %v2777 = vpack.c.b16 %v2774, %v2773
  %v2778 = vpack.c.b16 %v2776, %v2775
  %v2782 = vsel %vm100, %v2762, 0
  %2784 = vmatprep.subr.bf16.mxu0 0
  %2785 = vmatpush1.bf16.msra.mxu0 %v2777
  %2786 = vmatprep.subr.bf16.mxu0 0
  %2787 = vmatpush1.bf16.msra.mxu0 %v2778
  %2788 = vmatprep.subr.bf16.mxu0 0
  %2789 = vmatpush1.bf16.msra.mxu0 0
  %2790 = vmatprep.subr.bf16.mxu0 0
  %2791 = vmatpush1.bf16.msra.mxu0 0
  %2792 = vmatprep.subr.bf16.mxu0 0
  %2793 = vmatpush1.bf16.msra.mxu0 0
  %2794 = vmatprep.subr.bf16.mxu0 0
  %2795 = vmatpush1.bf16.msra.mxu0 0
  %2796 = vmatprep.subr.bf16.mxu0 0
  %2797 = vmatpush1.bf16.msra.mxu0 0
  %2798 = vmatprep.subr.bf16.mxu0 0
  %2799 = vmatpush1.bf16.msra.mxu0 0
  %2800 = vmatprep.subr.bf16.mxu0 0
  %2801 = vmatpush1.bf16.msra.mxu0 0
  %2802 = vmatprep.subr.bf16.mxu0 0
  %2803 = vmatpush1.bf16.msra.mxu0 0
  %2804 = vmatprep.subr.bf16.mxu0 0
  %2805 = vmatpush1.bf16.msra.mxu0 0
  %2806 = vmatprep.subr.bf16.mxu0 0
  %2807 = vmatpush1.bf16.msra.mxu0 0
  %2808 = vmatprep.subr.bf16.mxu0 0
  %2809 = vmatpush1.bf16.msra.mxu0 0
  %2810 = vmatprep.subr.bf16.mxu0 0
  %2811 = vmatpush1.bf16.msra.mxu0 0
  %2812 = vmatprep.subr.bf16.mxu0 0
  %2813 = vmatpush1.bf16.msra.mxu0 0
  %2814 = vmatprep.subr.bf16.mxu0 0
  %2815 = vmatpush1.bf16.msra.mxu0 0
  %2816 = vmatprep.mubr.bf16.mxu0 0
  %2817 = vmatmul.mubr.bf16.gmra.mrb[0].mxu0 %v2782
  %v2818 = vpop.f32.mrb[0].mxu0
  %v2819 = vadd.f32 %v2767, %v2818
  %v2820 = vpop.f32.mrb[0].mxu0
  %v2821 = vpop.f32.mrb[0].mxu0
  %v2822 = vadd.f32 %v2767, %v2821
  %v2823 = vpop.f32.mrb[0].mxu0
  %2824 = vdwg.mxu0
  %s2825 = scalar_lea.vmem %s10, 16
  %v2826 = vld [vmem:[%s2825] sm:$0xf]
  %v2827 = vld [vmem:[%s2825 + $0x4] sm:$0xf]
  %v2828 = vld [vmem:[%s2825 + $0x8] sm:$0xf]
  %v2829 = vld [vmem:[%s2825 + $0xc] sm:$0xf]
  %s2830 = scalar_lea.vmem %s11, 1
  %v2831 = vld [vmem:[%s2830] sm:$0x1]
  %v2833 = vlaneseq
  %v2834 = vshrl.u32 %v2833, 7
  %v2835 = vsub.s32 0, %v2834
  %v2836 = vrot.slane %v2831, %v2835
  %v2842 = vunpack.c.l.b16 %v2826
  %v2843 = vunpack.c.l.b16 %v2827
  %v2844 = vunpack.c.l.b16 %v2828
  %v2845 = vunpack.c.l.b16 %v2829
  %v2846 = vpack.c.b16 %v2843, %v2842
  %v2847 = vpack.c.b16 %v2845, %v2844
  %2850 = vmatprep.subr.bf16.mxu0 0
  %2851 = vmatpush1.bf16.msra.mxu0 %v2846
  %2852 = vmatprep.subr.bf16.mxu0 0
  %2853 = vmatpush1.bf16.msra.mxu0 %v2847
  %2854 = vmatprep.subr.bf16.mxu0 0
  %2855 = vmatpush1.bf16.msra.mxu0 0
  %2856 = vmatprep.subr.bf16.mxu0 0
  %2857 = vmatpush1.bf16.msra.mxu0 0
  %2858 = vmatprep.subr.bf16.mxu0 0
  %2859 = vmatpush1.bf16.msra.mxu0 0
  %2860 = vmatprep.subr.bf16.mxu0 0
  %2861 = vmatpush1.bf16.msra.mxu0 0
  %2862 = vmatprep.subr.bf16.mxu0 0
  %2863 = vmatpush1.bf16.msra.mxu0 0
  %2864 = vmatprep.subr.bf16.mxu0 0
  %2865 = vmatpush1.bf16.msra.mxu0 0
  %2866 = vmatprep.subr.bf16.mxu0 0
  %2867 = vmatpush1.bf16.msra.mxu0 0
  %2868 = vmatprep.subr.bf16.mxu0 0
  %2869 = vmatpush1.bf16.msra.mxu0 0
  %2870 = vmatprep.subr.bf16.mxu0 0
  %2871 = vmatpush1.bf16.msra.mxu0 0
  %2872 = vmatprep.subr.bf16.mxu0 0
  %2873 = vmatpush1.bf16.msra.mxu0 0
  %2874 = vmatprep.subr.bf16.mxu0 0
  %2875 = vmatpush1.bf16.msra.mxu0 0
  %2876 = vmatprep.subr.bf16.mxu0 0
  %2877 = vmatpush1.bf16.msra.mxu0 0
  %2878 = vmatprep.subr.bf16.mxu0 0
  %2879 = vmatpush1.bf16.msra.mxu0 0
  %2880 = vmatprep.subr.bf16.mxu0 0
  %2881 = vmatpush1.bf16.msra.mxu0 0
  %2882 = vmatprep.mubr.bf16.mxu0 0
  %2883 = vmatmul.mubr.bf16.gmra.mrb[0].mxu0 %v975
  %v2884 = vpop.f32.mrb[0].mxu0
  %v2885 = vadd.f32 %v2836, %v2884
  %v2886 = vpop.f32.mrb[0].mxu0
  %v2887 = vpop.f32.mrb[0].mxu0
  %v2888 = vadd.f32 %v2836, %v2887
  %v2889 = vpop.f32.mrb[0].mxu0
  %2890 = vdwg.mxu0
  %s2891 = scalar_lea.vmem %s12, 16
  %v2892 = vld [vmem:[%s2891] sm:$0xf]
  %v2893 = vld [vmem:[%s2891 + $0x4] sm:$0xf]
  %v2894 = vld [vmem:[%s2891 + $0x8] sm:$0xf]
  %v2895 = vld [vmem:[%s2891 + $0xc] sm:$0xf]
  %s2896 = scalar_lea.vmem %s13, 1
  %v2897 = vld [vmem:[%s2896] sm:$0x1]
  %v2898 = vpack.c.bf16 %v2822, %v2819
  %v2899 = vpack.c.bf16 %v2888, %v2885
  %v2901 = vsel %vm154, %v2898, 0
  %v2904 = vsel %vm154, %v2899, 0
  %2906 = vmatprep.subr.bf16.mxu0 0
  %2907 = vmatpush1.bf16.xpose.msra.mxu0 %v2904
  %2908 = vmatprep.subr.bf16.mxu0 0
  %2909 = vmatpush1.bf16.xpose.msra.mxu0 0
  %2910 = vmatprep.subr.bf16.mxu0 0
  %2911 = vmatpush1.bf16.xpose.msra.mxu0 0
  %2912 = vmatprep.subr.bf16.mxu0 0
  %2913 = vmatpush1.bf16.xpose.msra.mxu0 0
  %2914 = vmatprep.subr.bf16.mxu0 0
  %2915 = vmatpush1.bf16.xpose.msra.mxu0 0
  %2916 = vmatprep.subr.bf16.mxu0 0
  %2917 = vmatpush1.bf16.xpose.msra.mxu0 0
  %2918 = vmatprep.subr.bf16.mxu0 0
  %2919 = vmatpush1.bf16.xpose.msra.mxu0 0
  %2920 = vmatprep.subr.bf16.mxu0 0
  %2921 = vmatpush1.bf16.xpose.msra.mxu0 0
  %2922 = vmatprep.subr.bf16.mxu0 0
  %2923 = vmatpush1.bf16.xpose.msra.mxu0 0
  %2924 = vmatprep.subr.bf16.mxu0 0
  %2925 = vmatpush1.bf16.xpose.msra.mxu0 0
  %2926 = vmatprep.subr.bf16.mxu0 0
  %2927 = vmatpush1.bf16.xpose.msra.mxu0 0
  %2928 = vmatprep.subr.bf16.mxu0 0
  %2929 = vmatpush1.bf16.xpose.msra.mxu0 0
  %2930 = vmatprep.subr.bf16.mxu0 0
  %2931 = vmatpush1.bf16.xpose.msra.mxu0 0
  %2932 = vmatprep.subr.bf16.mxu0 0
  %2933 = vmatpush1.bf16.xpose.msra.mxu0 0
  %2934 = vmatprep.subr.bf16.mxu0 0
  %2935 = vmatpush1.bf16.xpose.msra.mxu0 0
  %2936 = vmatprep.subr.bf16.mxu0 0
  %2937 = vmatpush1.bf16.xpose.msra.mxu0 0
  %2938 = vmatprep.mubr.bf16.mxu0 0
  %2939 = vmatmul.mubr.bf16.gmra.mrb[0].mxu0 %v2901
  %v2940 = vpop.f32.mrb[0].mxu0
  %v2941 = vadd.f32 %v72, %v2940
  %v2942 = vpop.f32.mrb[0].mxu0
  %v2943 = vpop.f32.mrb[0].mxu0
  %v2944 = vadd.f32 %v73, %v2943
  %v2945 = vpop.f32.mrb[0].mxu0
  %2946 = vdwg.mxu0
  %v2947 = vsel %vm202, %v2941, -inf
  %2948 = vmax.xlane.f32.xlu0 %v2947
  %v2949 = vpop.xlane.xlu0 %2948
  %v2950 = vsel %vm202, %v2944, -inf
  %2951 = vmax.xlane.f32.xlu0 %v2950
  %v2952 = vpop.xlane.xlu0 %2951
  %v2953 = vsub.f32 %v2941, %v2949
  %v2954 = vsub.f32 %v2944, %v2952
  %v2955 = vmul.f32 %v2953, 1.442695
  %v2956 = vpow.pop %v2955
  %v2957 = vmul.f32 %v2954, 1.442695
  %v2958 = vpow.pop %v2957
  %v2959 = vsel %vm202, %v2956, 0.0
  %2960 = vadd.xlane.f32.xlu0 %v2959
  %v2961 = vpop.xlane.xlu0 %2960
  %v2962 = vsel %vm202, %v2958, 0.0
  %2963 = vadd.xlane.f32.xlu0 %v2962
  %v2964 = vpop.xlane.xlu0 %2963
  %v2965 = vrcp.pop %v2961
  %v2966 = vrcp.pop %v2964
  %v2967 = vmul.f32 %v2956, %v2965
  %v2968 = vmul.f32 %v2958, %v2966
  %v2969 = vpack.c.bf16 %v2968, %v2967
  %2971 = vrot.lane.b32.xlu0 %v2899, 96
  %v2972 = vpop.permute.xlu0 %2971
  %v2975 = vsel %vm202, %v2969, 0
  %2977 = vmatprep.subr.bf16.mxu0 0
  %2978 = vmatpush1.bf16.msra.mxu0 %v2972
  %2979 = vmatprep.subr.bf16.mxu0 0
  %2980 = vmatpush1.bf16.msra.mxu0 0
  %2981 = vmatprep.subr.bf16.mxu0 0
  %2982 = vmatpush1.bf16.msra.mxu0 0
  %2983 = vmatprep.subr.bf16.mxu0 0
  %2984 = vmatpush1.bf16.msra.mxu0 0
  %2985 = vmatprep.subr.bf16.mxu0 0
  %2986 = vmatpush1.bf16.msra.mxu0 0
  %2987 = vmatprep.subr.bf16.mxu0 0
  %2988 = vmatpush1.bf16.msra.mxu0 0
  %2989 = vmatprep.subr.bf16.mxu0 0
  %2990 = vmatpush1.bf16.msra.mxu0 0
  %2991 = vmatprep.subr.bf16.mxu0 0
  %2992 = vmatpush1.bf16.msra.mxu0 0
  %2993 = vmatprep.subr.bf16.mxu0 0
  %2994 = vmatpush1.bf16.msra.mxu0 0
  %2995 = vmatprep.subr.bf16.mxu0 0
  %2996 = vmatpush1.bf16.msra.mxu0 0
  %2997 = vmatprep.subr.bf16.mxu0 0
  %2998 = vmatpush1.bf16.msra.mxu0 0
  %2999 = vmatprep.subr.bf16.mxu0 0
  %3000 = vmatpush1.bf16.msra.mxu0 0
  %3001 = vmatprep.subr.bf16.mxu0 0
  %3002 = vmatpush1.bf16.msra.mxu0 0
  %3003 = vmatprep.subr.bf16.mxu0 0
  %3004 = vmatpush1.bf16.msra.mxu0 0
  %3005 = vmatprep.subr.bf16.mxu0 0
  %3006 = vmatpush1.bf16.msra.mxu0 0
  %3007 = vmatprep.subr.bf16.mxu0 0
  %3008 = vmatpush1.bf16.msra.mxu0 0
  %3009 = vmatprep.mubr.bf16.mxu0 0
  %3010 = vmatmul.mubr.bf16.gmra.mrb[0].mxu0 %v2975
  %v3011 = vpop.f32.mrb[0].mxu0
  %v3012 = vadd.f32 0.0, %v3011
  %v3013 = vpop.f32.mrb[0].mxu0
  %v3014 = vpop.f32.mrb[0].mxu0
  %v3015 = vadd.f32 0.0, %v3014
  %v3016 = vpop.f32.mrb[0].mxu0
  %3017 = vdwg.mxu0
  %v3018 = vpack.c.bf16 %v3015, %v3012
  %3020 = vrot.lane.b32.xlu0 %v2898, 120
  %v3021 = vpop.permute.xlu0 %3020
  %3022 = vrot.lane.b32.xlu0 %v2899, 120
  %v3023 = vpop.permute.xlu0 %3022
  %v3025 = vsel %vm154, %v3021, 0
  %v3028 = vsel %vm154, %v3023, 0
  %3030 = vmatprep.subr.bf16.mxu0 0
  %3031 = vmatpush1.bf16.xpose.msra.mxu0 %v3028
  %3032 = vmatprep.subr.bf16.mxu0 0
  %3033 = vmatpush1.bf16.xpose.msra.mxu0 0
  %3034 = vmatprep.subr.bf16.mxu0 0
  %3035 = vmatpush1.bf16.xpose.msra.mxu0 0
  %3036 = vmatprep.subr.bf16.mxu0 0
  %3037 = vmatpush1.bf16.xpose.msra.mxu0 0
  %3038 = vmatprep.subr.bf16.mxu0 0
  %3039 = vmatpush1.bf16.xpose.msra.mxu0 0
  %3040 = vmatprep.subr.bf16.mxu0 0
  %3041 = vmatpush1.bf16.xpose.msra.mxu0 0
  %3042 = vmatprep.subr.bf16.mxu0 0
  %3043 = vmatpush1.bf16.xpose.msra.mxu0 0
  %3044 = vmatprep.subr.bf16.mxu0 0
  %3045 = vmatpush1.bf16.xpose.msra.mxu0 0
  %3046 = vmatprep.subr.bf16.mxu0 0
  %3047 = vmatpush1.bf16.xpose.msra.mxu0 0
  %3048 = vmatprep.subr.bf16.mxu0 0
  %3049 = vmatpush1.bf16.xpose.msra.mxu0 0
  %3050 = vmatprep.subr.bf16.mxu0 0
  %3051 = vmatpush1.bf16.xpose.msra.mxu0 0
  %3052 = vmatprep.subr.bf16.mxu0 0
  %3053 = vmatpush1.bf16.xpose.msra.mxu0 0
  %3054 = vmatprep.subr.bf16.mxu0 0
  %3055 = vmatpush1.bf16.xpose.msra.mxu0 0
  %3056 = vmatprep.subr.bf16.mxu0 0
  %3057 = vmatpush1.bf16.xpose.msra.mxu0 0
  %3058 = vmatprep.subr.bf16.mxu0 0
  %3059 = vmatpush1.bf16.xpose.msra.mxu0 0
  %3060 = vmatprep.subr.bf16.mxu0 0
  %3061 = vmatpush1.bf16.xpose.msra.mxu0 0
  %3062 = vmatprep.mubr.bf16.mxu0 0
  %3063 = vmatmul.mubr.bf16.gmra.mrb[0].mxu0 %v3025
  %v3064 = vpop.f32.mrb[0].mxu0
  %v3065 = vadd.f32 %v72, %v3064
  %v3066 = vpop.f32.mrb[0].mxu0
  %v3067 = vpop.f32.mrb[0].mxu0
  %v3068 = vadd.f32 %v73, %v3067
  %v3069 = vpop.f32.mrb[0].mxu0
  %3070 = vdwg.mxu0
  %v3071 = vsel %vm202, %v3065, -inf
  %3072 = vmax.xlane.f32.xlu0 %v3071
  %v3073 = vpop.xlane.xlu0 %3072
  %v3074 = vsel %vm202, %v3068, -inf
  %3075 = vmax.xlane.f32.xlu0 %v3074
  %v3076 = vpop.xlane.xlu0 %3075
  %v3077 = vsub.f32 %v3065, %v3073
  %v3078 = vsub.f32 %v3068, %v3076
  %v3079 = vmul.f32 %v3077, 1.442695
  %v3080 = vpow.pop %v3079
  %v3081 = vmul.f32 %v3078, 1.442695
  %v3082 = vpow.pop %v3081
  %v3083 = vsel %vm202, %v3080, 0.0
  %3084 = vadd.xlane.f32.xlu0 %v3083
  %v3085 = vpop.xlane.xlu0 %3084
  %v3086 = vsel %vm202, %v3082, 0.0
  %3087 = vadd.xlane.f32.xlu0 %v3086
  %v3088 = vpop.xlane.xlu0 %3087
  %v3089 = vrcp.pop %v3085
  %v3090 = vrcp.pop %v3088
  %v3091 = vmul.f32 %v3080, %v3089
  %v3092 = vmul.f32 %v3082, %v3090
  %v3093 = vpack.c.bf16 %v3092, %v3091
  %3094 = vrot.lane.b32.xlu0 %v2899, 88
  %v3095 = vpop.permute.xlu0 %3094
  %v3098 = vsel %vm202, %v3093, 0
  %3100 = vmatprep.subr.bf16.mxu0 0
  %3101 = vmatpush1.bf16.msra.mxu0 %v3095
  %3102 = vmatprep.subr.bf16.mxu0 0
  %3103 = vmatpush1.bf16.msra.mxu0 0
  %3104 = vmatprep.subr.bf16.mxu0 0
  %3105 = vmatpush1.bf16.msra.mxu0 0
  %3106 = vmatprep.subr.bf16.mxu0 0
  %3107 = vmatpush1.bf16.msra.mxu0 0
  %3108 = vmatprep.subr.bf16.mxu0 0
  %3109 = vmatpush1.bf16.msra.mxu0 0
  %3110 = vmatprep.subr.bf16.mxu0 0
  %3111 = vmatpush1.bf16.msra.mxu0 0
  %3112 = vmatprep.subr.bf16.mxu0 0
  %3113 = vmatpush1.bf16.msra.mxu0 0
  %3114 = vmatprep.subr.bf16.mxu0 0
  %3115 = vmatpush1.bf16.msra.mxu0 0
  %3116 = vmatprep.subr.bf16.mxu0 0
  %3117 = vmatpush1.bf16.msra.mxu0 0
  %3118 = vmatprep.subr.bf16.mxu0 0
  %3119 = vmatpush1.bf16.msra.mxu0 0
  %3120 = vmatprep.subr.bf16.mxu0 0
  %3121 = vmatpush1.bf16.msra.mxu0 0
  %3122 = vmatprep.subr.bf16.mxu0 0
  %3123 = vmatpush1.bf16.msra.mxu0 0
  %3124 = vmatprep.subr.bf16.mxu0 0
  %3125 = vmatpush1.bf16.msra.mxu0 0
  %3126 = vmatprep.subr.bf16.mxu0 0
  %3127 = vmatpush1.bf16.msra.mxu0 0
  %3128 = vmatprep.subr.bf16.mxu0 0
  %3129 = vmatpush1.bf16.msra.mxu0 0
  %3130 = vmatprep.subr.bf16.mxu0 0
  %3131 = vmatpush1.bf16.msra.mxu0 0
  %3132 = vmatprep.mubr.bf16.mxu0 0
  %3133 = vmatmul.mubr.bf16.gmra.mrb[0].mxu0 %v3098
  %v3134 = vpop.f32.mrb[0].mxu0
  %v3135 = vadd.f32 0.0, %v3134
  %v3136 = vpop.f32.mrb[0].mxu0
  %v3137 = vpop.f32.mrb[0].mxu0
  %v3138 = vadd.f32 0.0, %v3137
  %v3139 = vpop.f32.mrb[0].mxu0
  %3140 = vdwg.mxu0
  %v3141 = vpack.c.bf16 %v3138, %v3135
  %v3143 = vsel %vm154, %v3141, 0
  %v3146 = vsel %vm399, %v2893, 0
  %3148 = vmatprep.subr.bf16.mxu0 0
  %3149 = vmatpush1.bf16.msra.mxu0 %v3146
  %3150 = vmatprep.subr.bf16.mxu0 0
  %3151 = vmatpush1.bf16.msra.mxu0 0
  %3152 = vmatprep.subr.bf16.mxu0 0
  %3153 = vmatpush1.bf16.msra.mxu0 0
  %3154 = vmatprep.subr.bf16.mxu0 0
  %3155 = vmatpush1.bf16.msra.mxu0 0
  %3156 = vmatprep.subr.bf16.mxu0 0
  %3157 = vmatpush1.bf16.msra.mxu0 0
  %3158 = vmatprep.subr.bf16.mxu0 0
  %3159 = vmatpush1.bf16.msra.mxu0 0
  %3160 = vmatprep.subr.bf16.mxu0 0
  %3161 = vmatpush1.bf16.msra.mxu0 0
  %3162 = vmatprep.subr.bf16.mxu0 0
  %3163 = vmatpush1.bf16.msra.mxu0 0
  %3164 = vmatprep.subr.bf16.mxu0 0
  %3165 = vmatpush1.bf16.msra.mxu0 0
  %3166 = vmatprep.subr.bf16.mxu0 0
  %3167 = vmatpush1.bf16.msra.mxu0 0
  %3168 = vmatprep.subr.bf16.mxu0 0
  %3169 = vmatpush1.bf16.msra.mxu0 0
  %3170 = vmatprep.subr.bf16.mxu0 0
  %3171 = vmatpush1.bf16.msra.mxu0 0
  %3172 = vmatprep.subr.bf16.mxu0 0
  %3173 = vmatpush1.bf16.msra.mxu0 0
  %3174 = vmatprep.subr.bf16.mxu0 0
  %3175 = vmatpush1.bf16.msra.mxu0 0
  %3176 = vmatprep.subr.bf16.mxu0 0
  %3177 = vmatpush1.bf16.msra.mxu0 0
  %3178 = vmatprep.subr.bf16.mxu0 0
  %3179 = vmatpush1.bf16.msra.mxu0 0
  %3180 = vmatprep.mubr.bf16.mxu0 0
  %3181 = vmatmul.mubr.bf16.gmra.mrb[0].mxu0 %v3143
  %v3182 = vpop.f32.mrb[0].mxu0
  %v3183 = vadd.f32 0.0, %v3182
  %v3184 = vpop.f32.mrb[0].mxu0
  %v3185 = vpop.f32.mrb[0].mxu0
  %v3186 = vadd.f32 0.0, %v3185
  %v3187 = vpop.f32.mrb[0].mxu0
  %3188 = vdwg.mxu0
  %v3190 = vsel %vm154, %v3018, 0
  %v3193 = vsel %vm399, %v2892, 0
  %3195 = vmatprep.subr.bf16.mxu0 0
  %3196 = vmatpush1.bf16.msra.mxu0 %v3193
  %3197 = vmatprep.subr.bf16.mxu0 0
  %3198 = vmatpush1.bf16.msra.mxu0 0
  %3199 = vmatprep.subr.bf16.mxu0 0
  %3200 = vmatpush1.bf16.msra.mxu0 0
  %3201 = vmatprep.subr.bf16.mxu0 0
  %3202 = vmatpush1.bf16.msra.mxu0 0
  %3203 = vmatprep.subr.bf16.mxu0 0
  %3204 = vmatpush1.bf16.msra.mxu0 0
  %3205 = vmatprep.subr.bf16.mxu0 0
  %3206 = vmatpush1.bf16.msra.mxu0 0
  %3207 = vmatprep.subr.bf16.mxu0 0
  %3208 = vmatpush1.bf16.msra.mxu0 0
  %3209 = vmatprep.subr.bf16.mxu0 0
  %3210 = vmatpush1.bf16.msra.mxu0 0
  %3211 = vmatprep.subr.bf16.mxu0 0
  %3212 = vmatpush1.bf16.msra.mxu0 0
  %3213 = vmatprep.subr.bf16.mxu0 0
  %3214 = vmatpush1.bf16.msra.mxu0 0
  %3215 = vmatprep.subr.bf16.mxu0 0
  %3216 = vmatpush1.bf16.msra.mxu0 0
  %3217 = vmatprep.subr.bf16.mxu0 0
  %3218 = vmatpush1.bf16.msra.mxu0 0
  %3219 = vmatprep.subr.bf16.mxu0 0
  %3220 = vmatpush1.bf16.msra.mxu0 0
  %3221 = vmatprep.subr.bf16.mxu0 0
  %3222 = vmatpush1.bf16.msra.mxu0 0
  %3223 = vmatprep.subr.bf16.mxu0 0
  %3224 = vmatpush1.bf16.msra.mxu0 0
  %3225 = vmatprep.subr.bf16.mxu0 0
  %3226 = vmatpush1.bf16.msra.mxu0 0
  %3227 = vmatprep.mubr.bf16.mxu0 0
  %3228 = vmatmul.mubr.bf16.gmra.mrb[0].mxu0 %v3190
  %v3229 = vpop.f32.mrb[0].mxu0
  %v3230 = vadd.f32 %v3183, %v3229
  %v3231 = vpop.f32.mrb[0].mxu0
  %v3232 = vpop.f32.mrb[0].mxu0
  %v3233 = vadd.f32 %v3186, %v3232
  %v3234 = vpop.f32.mrb[0].mxu0
  %3235 = vdwg.mxu0
  %3236 = vrot.lane.b32.xlu0 %v2898, 112
  %v3237 = vpop.permute.xlu0 %3236
  %3238 = vrot.lane.b32.xlu0 %v2899, 112
  %v3239 = vpop.permute.xlu0 %3238
  %v3241 = vsel %vm154, %v3237, 0
  %v3244 = vsel %vm154, %v3239, 0
  %3246 = vmatprep.subr.bf16.mxu0 0
  %3247 = vmatpush1.bf16.xpose.msra.mxu0 %v3244
  %3248 = vmatprep.subr.bf16.mxu0 0
  %3249 = vmatpush1.bf16.xpose.msra.mxu0 0
  %3250 = vmatprep.subr.bf16.mxu0 0
  %3251 = vmatpush1.bf16.xpose.msra.mxu0 0
  %3252 = vmatprep.subr.bf16.mxu0 0
  %3253 = vmatpush1.bf16.xpose.msra.mxu0 0
  %3254 = vmatprep.subr.bf16.mxu0 0
  %3255 = vmatpush1.bf16.xpose.msra.mxu0 0
  %3256 = vmatprep.subr.bf16.mxu0 0
  %3257 = vmatpush1.bf16.xpose.msra.mxu0 0
  %3258 = vmatprep.subr.bf16.mxu0 0
  %3259 = vmatpush1.bf16.xpose.msra.mxu0 0
  %3260 = vmatprep.subr.bf16.mxu0 0
  %3261 = vmatpush1.bf16.xpose.msra.mxu0 0
  %3262 = vmatprep.subr.bf16.mxu0 0
  %3263 = vmatpush1.bf16.xpose.msra.mxu0 0
  %3264 = vmatprep.subr.bf16.mxu0 0
  %3265 = vmatpush1.bf16.xpose.msra.mxu0 0
  %3266 = vmatprep.subr.bf16.mxu0 0
  %3267 = vmatpush1.bf16.xpose.msra.mxu0 0
  %3268 = vmatprep.subr.bf16.mxu0 0
  %3269 = vmatpush1.bf16.xpose.msra.mxu0 0
  %3270 = vmatprep.subr.bf16.mxu0 0
  %3271 = vmatpush1.bf16.xpose.msra.mxu0 0
  %3272 = vmatprep.subr.bf16.mxu0 0
  %3273 = vmatpush1.bf16.xpose.msra.mxu0 0
  %3274 = vmatprep.subr.bf16.mxu0 0
  %3275 = vmatpush1.bf16.xpose.msra.mxu0 0
  %3276 = vmatprep.subr.bf16.mxu0 0
  %3277 = vmatpush1.bf16.xpose.msra.mxu0 0
  %3278 = vmatprep.mubr.bf16.mxu0 0
  %3279 = vmatmul.mubr.bf16.gmra.mrb[0].mxu0 %v3241
  %v3280 = vpop.f32.mrb[0].mxu0
  %v3281 = vadd.f32 %v72, %v3280
  %v3282 = vpop.f32.mrb[0].mxu0
  %v3283 = vpop.f32.mrb[0].mxu0
  %v3284 = vadd.f32 %v73, %v3283
  %v3285 = vpop.f32.mrb[0].mxu0
  %3286 = vdwg.mxu0
  %v3287 = vsel %vm202, %v3281, -inf
  %3288 = vmax.xlane.f32.xlu0 %v3287
  %v3289 = vpop.xlane.xlu0 %3288
  %v3290 = vsel %vm202, %v3284, -inf
  %3291 = vmax.xlane.f32.xlu0 %v3290
  %v3292 = vpop.xlane.xlu0 %3291
  %v3293 = vsub.f32 %v3281, %v3289
  %v3294 = vsub.f32 %v3284, %v3292
  %v3295 = vmul.f32 %v3293, 1.442695
  %v3296 = vpow.pop %v3295
  %v3297 = vmul.f32 %v3294, 1.442695
  %v3298 = vpow.pop %v3297
  %v3299 = vsel %vm202, %v3296, 0.0
  %3300 = vadd.xlane.f32.xlu0 %v3299
  %v3301 = vpop.xlane.xlu0 %3300
  %v3302 = vsel %vm202, %v3298, 0.0
  %3303 = vadd.xlane.f32.xlu0 %v3302
  %v3304 = vpop.xlane.xlu0 %3303
  %v3305 = vrcp.pop %v3301
  %v3306 = vrcp.pop %v3304
  %v3307 = vmul.f32 %v3296, %v3305
  %v3308 = vmul.f32 %v3298, %v3306
  %v3309 = vpack.c.bf16 %v3308, %v3307
  %3310 = vrot.lane.b32.xlu0 %v2899, 80
  %v3311 = vpop.permute.xlu0 %3310
  %v3314 = vsel %vm202, %v3309, 0
  %3316 = vmatprep.subr.bf16.mxu0 0
  %3317 = vmatpush1.bf16.msra.mxu0 %v3311
  %3318 = vmatprep.subr.bf16.mxu0 0
  %3319 = vmatpush1.bf16.msra.mxu0 0
  %3320 = vmatprep.subr.bf16.mxu0 0
  %3321 = vmatpush1.bf16.msra.mxu0 0
  %3322 = vmatprep.subr.bf16.mxu0 0
  %3323 = vmatpush1.bf16.msra.mxu0 0
  %3324 = vmatprep.subr.bf16.mxu0 0
  %3325 = vmatpush1.bf16.msra.mxu0 0
  %3326 = vmatprep.subr.bf16.mxu0 0
  %3327 = vmatpush1.bf16.msra.mxu0 0
  %3328 = vmatprep.subr.bf16.mxu0 0
  %3329 = vmatpush1.bf16.msra.mxu0 0
  %3330 = vmatprep.subr.bf16.mxu0 0
  %3331 = vmatpush1.bf16.msra.mxu0 0
  %3332 = vmatprep.subr.bf16.mxu0 0
  %3333 = vmatpush1.bf16.msra.mxu0 0
  %3334 = vmatprep.subr.bf16.mxu0 0
  %3335 = vmatpush1.bf16.msra.mxu0 0
  %3336 = vmatprep.subr.bf16.mxu0 0
  %3337 = vmatpush1.bf16.msra.mxu0 0
  %3338 = vmatprep.subr.bf16.mxu0 0
  %3339 = vmatpush1.bf16.msra.mxu0 0
  %3340 = vmatprep.subr.bf16.mxu0 0
  %3341 = vmatpush1.bf16.msra.mxu0 0
  %3342 = vmatprep.subr.bf16.mxu0 0
  %3343 = vmatpush1.bf16.msra.mxu0 0
  %3344 = vmatprep.subr.bf16.mxu0 0
  %3345 = vmatpush1.bf16.msra.mxu0 0
  %3346 = vmatprep.subr.bf16.mxu0 0
  %3347 = vmatpush1.bf16.msra.mxu0 0
  %3348 = vmatprep.mubr.bf16.mxu0 0
  %3349 = vmatmul.mubr.bf16.gmra.mrb[0].mxu0 %v3314
  %v3350 = vpop.f32.mrb[0].mxu0
  %v3351 = vadd.f32 0.0, %v3350
  %v3352 = vpop.f32.mrb[0].mxu0
  %v3353 = vpop.f32.mrb[0].mxu0
  %v3354 = vadd.f32 0.0, %v3353
  %v3355 = vpop.f32.mrb[0].mxu0
  %3356 = vdwg.mxu0
  %v3357 = vpack.c.bf16 %v3354, %v3351
  %v3359 = vsel %vm154, %v3357, 0
  %v3362 = vsel %vm399, %v2894, 0
  %3364 = vmatprep.subr.bf16.mxu0 0
  %3365 = vmatpush1.bf16.msra.mxu0 %v3362
  %3366 = vmatprep.subr.bf16.mxu0 0
  %3367 = vmatpush1.bf16.msra.mxu0 0
  %3368 = vmatprep.subr.bf16.mxu0 0
  %3369 = vmatpush1.bf16.msra.mxu0 0
  %3370 = vmatprep.subr.bf16.mxu0 0
  %3371 = vmatpush1.bf16.msra.mxu0 0
  %3372 = vmatprep.subr.bf16.mxu0 0
  %3373 = vmatpush1.bf16.msra.mxu0 0
  %3374 = vmatprep.subr.bf16.mxu0 0
  %3375 = vmatpush1.bf16.msra.mxu0 0
  %3376 = vmatprep.subr.bf16.mxu0 0
  %3377 = vmatpush1.bf16.msra.mxu0 0
  %3378 = vmatprep.subr.bf16.mxu0 0
  %3379 = vmatpush1.bf16.msra.mxu0 0
  %3380 = vmatprep.subr.bf16.mxu0 0
  %3381 = vmatpush1.bf16.msra.mxu0 0
  %3382 = vmatprep.subr.bf16.mxu0 0
  %3383 = vmatpush1.bf16.msra.mxu0 0
  %3384 = vmatprep.subr.bf16.mxu0 0
  %3385 = vmatpush1.bf16.msra.mxu0 0
  %3386 = vmatprep.subr.bf16.mxu0 0
  %3387 = vmatpush1.bf16.msra.mxu0 0
  %3388 = vmatprep.subr.bf16.mxu0 0
  %3389 = vmatpush1.bf16.msra.mxu0 0
  %3390 = vmatprep.subr.bf16.mxu0 0
  %3391 = vmatpush1.bf16.msra.mxu0 0
  %3392 = vmatprep.subr.bf16.mxu0 0
  %3393 = vmatpush1.bf16.msra.mxu0 0
  %3394 = vmatprep.subr.bf16.mxu0 0
  %3395 = vmatpush1.bf16.msra.mxu0 0
  %3396 = vmatprep.mubr.bf16.mxu0 0
  %3397 = vmatmul.mubr.bf16.gmra.mrb[0].mxu0 %v3359
  %v3398 = vpop.f32.mrb[0].mxu0
  %v3399 = vadd.f32 0.0, %v3398
  %v3400 = vpop.f32.mrb[0].mxu0
  %v3401 = vpop.f32.mrb[0].mxu0
  %v3402 = vadd.f32 0.0, %v3401
  %v3403 = vpop.f32.mrb[0].mxu0
  %3404 = vdwg.mxu0
  %v3405 = vadd.f32 %v3230, %v3399
  %v3406 = vadd.f32 %v3233, %v3402
  %3407 = vrot.lane.b32.xlu0 %v2898, 104
  %v3408 = vpop.permute.xlu0 %3407
  %3409 = vrot.lane.b32.xlu0 %v2899, 104
  %v3410 = vpop.permute.xlu0 %3409
  %v3412 = vsel %vm154, %v3408, 0
  %v3415 = vsel %vm154, %v3410, 0
  %3417 = vmatprep.subr.bf16.mxu0 0
  %3418 = vmatpush1.bf16.xpose.msra.mxu0 %v3415
  %3419 = vmatprep.subr.bf16.mxu0 0
  %3420 = vmatpush1.bf16.xpose.msra.mxu0 0
  %3421 = vmatprep.subr.bf16.mxu0 0
  %3422 = vmatpush1.bf16.xpose.msra.mxu0 0
  %3423 = vmatprep.subr.bf16.mxu0 0
  %3424 = vmatpush1.bf16.xpose.msra.mxu0 0
  %3425 = vmatprep.subr.bf16.mxu0 0
  %3426 = vmatpush1.bf16.xpose.msra.mxu0 0
  %3427 = vmatprep.subr.bf16.mxu0 0
  %3428 = vmatpush1.bf16.xpose.msra.mxu0 0
  %3429 = vmatprep.subr.bf16.mxu0 0
  %3430 = vmatpush1.bf16.xpose.msra.mxu0 0
  %3431 = vmatprep.subr.bf16.mxu0 0
  %3432 = vmatpush1.bf16.xpose.msra.mxu0 0
  %3433 = vmatprep.subr.bf16.mxu0 0
  %3434 = vmatpush1.bf16.xpose.msra.mxu0 0
  %3435 = vmatprep.subr.bf16.mxu0 0
  %3436 = vmatpush1.bf16.xpose.msra.mxu0 0
  %3437 = vmatprep.subr.bf16.mxu0 0
  %3438 = vmatpush1.bf16.xpose.msra.mxu0 0
  %3439 = vmatprep.subr.bf16.mxu0 0
  %3440 = vmatpush1.bf16.xpose.msra.mxu0 0
  %3441 = vmatprep.subr.bf16.mxu0 0
  %3442 = vmatpush1.bf16.xpose.msra.mxu0 0
  %3443 = vmatprep.subr.bf16.mxu0 0
  %3444 = vmatpush1.bf16.xpose.msra.mxu0 0
  %3445 = vmatprep.subr.bf16.mxu0 0
  %3446 = vmatpush1.bf16.xpose.msra.mxu0 0
  %3447 = vmatprep.subr.bf16.mxu0 0
  %3448 = vmatpush1.bf16.xpose.msra.mxu0 0
  %3449 = vmatprep.mubr.bf16.mxu0 0
  %3450 = vmatmul.mubr.bf16.gmra.mrb[0].mxu0 %v3412
  %v3451 = vpop.f32.mrb[0].mxu0
  %v3452 = vadd.f32 %v72, %v3451
  %v3453 = vpop.f32.mrb[0].mxu0
  %v3454 = vpop.f32.mrb[0].mxu0
  %v3455 = vadd.f32 %v73, %v3454
  %v3456 = vpop.f32.mrb[0].mxu0
  %3457 = vdwg.mxu0
  %v3458 = vsel %vm202, %v3452, -inf
  %3459 = vmax.xlane.f32.xlu0 %v3458
  %v3460 = vpop.xlane.xlu0 %3459
  %v3461 = vsel %vm202, %v3455, -inf
  %3462 = vmax.xlane.f32.xlu0 %v3461
  %v3463 = vpop.xlane.xlu0 %3462
  %v3464 = vsub.f32 %v3452, %v3460
  %v3465 = vsub.f32 %v3455, %v3463
  %v3466 = vmul.f32 %v3464, 1.442695
  %v3467 = vpow.pop %v3466
  %v3468 = vmul.f32 %v3465, 1.442695
  %v3469 = vpow.pop %v3468
  %v3470 = vsel %vm202, %v3467, 0.0
  %3471 = vadd.xlane.f32.xlu0 %v3470
  %v3472 = vpop.xlane.xlu0 %3471
  %v3473 = vsel %vm202, %v3469, 0.0
  %3474 = vadd.xlane.f32.xlu0 %v3473
  %v3475 = vpop.xlane.xlu0 %3474
  %v3476 = vrcp.pop %v3472
  %v3477 = vrcp.pop %v3475
  %v3478 = vmul.f32 %v3467, %v3476
  %v3479 = vmul.f32 %v3469, %v3477
  %v3480 = vpack.c.bf16 %v3479, %v3478
  %3481 = vrot.lane.b32.xlu0 %v2899, 72
  %v3482 = vpop.permute.xlu0 %3481
  %v3485 = vsel %vm202, %v3480, 0
  %3487 = vmatprep.subr.bf16.mxu0 0
  %3488 = vmatpush1.bf16.msra.mxu0 %v3482
  %3489 = vmatprep.subr.bf16.mxu0 0
  %3490 = vmatpush1.bf16.msra.mxu0 0
  %3491 = vmatprep.subr.bf16.mxu0 0
  %3492 = vmatpush1.bf16.msra.mxu0 0
  %3493 = vmatprep.subr.bf16.mxu0 0
  %3494 = vmatpush1.bf16.msra.mxu0 0
  %3495 = vmatprep.subr.bf16.mxu0 0
  %3496 = vmatpush1.bf16.msra.mxu0 0
  %3497 = vmatprep.subr.bf16.mxu0 0
  %3498 = vmatpush1.bf16.msra.mxu0 0
  %3499 = vmatprep.subr.bf16.mxu0 0
  %3500 = vmatpush1.bf16.msra.mxu0 0
  %3501 = vmatprep.subr.bf16.mxu0 0
  %3502 = vmatpush1.bf16.msra.mxu0 0
  %3503 = vmatprep.subr.bf16.mxu0 0
  %3504 = vmatpush1.bf16.msra.mxu0 0
  %3505 = vmatprep.subr.bf16.mxu0 0
  %3506 = vmatpush1.bf16.msra.mxu0 0
  %3507 = vmatprep.subr.bf16.mxu0 0
  %3508 = vmatpush1.bf16.msra.mxu0 0
  %3509 = vmatprep.subr.bf16.mxu0 0
  %3510 = vmatpush1.bf16.msra.mxu0 0
  %3511 = vmatprep.subr.bf16.mxu0 0
  %3512 = vmatpush1.bf16.msra.mxu0 0
  %3513 = vmatprep.subr.bf16.mxu0 0
  %3514 = vmatpush1.bf16.msra.mxu0 0
  %3515 = vmatprep.subr.bf16.mxu0 0
  %3516 = vmatpush1.bf16.msra.mxu0 0
  %3517 = vmatprep.subr.bf16.mxu0 0
  %3518 = vmatpush1.bf16.msra.mxu0 0
  %3519 = vmatprep.mubr.bf16.mxu0 0
  %3520 = vmatmul.mubr.bf16.gmra.mrb[0].mxu0 %v3485
  %v3521 = vpop.f32.mrb[0].mxu0
  %v3522 = vadd.f32 0.0, %v3521
  %v3523 = vpop.f32.mrb[0].mxu0
  %v3524 = vpop.f32.mrb[0].mxu0
  %v3525 = vadd.f32 0.0, %v3524
  %v3526 = vpop.f32.mrb[0].mxu0
  %3527 = vdwg.mxu0
  %v3528 = vpack.c.bf16 %v3525, %v3522
  %v3530 = vsel %vm154, %v3528, 0
  %v3533 = vsel %vm399, %v2895, 0
  %3535 = vmatprep.subr.bf16.mxu0 0
  %3536 = vmatpush1.bf16.msra.mxu0 %v3533
  %3537 = vmatprep.subr.bf16.mxu0 0
  %3538 = vmatpush1.bf16.msra.mxu0 0
  %3539 = vmatprep.subr.bf16.mxu0 0
  %3540 = vmatpush1.bf16.msra.mxu0 0
  %3541 = vmatprep.subr.bf16.mxu0 0
  %3542 = vmatpush1.bf16.msra.mxu0 0
  %3543 = vmatprep.subr.bf16.mxu0 0
  %3544 = vmatpush1.bf16.msra.mxu0 0
  %3545 = vmatprep.subr.bf16.mxu0 0
  %3546 = vmatpush1.bf16.msra.mxu0 0
  %3547 = vmatprep.subr.bf16.mxu0 0
  %3548 = vmatpush1.bf16.msra.mxu0 0
  %3549 = vmatprep.subr.bf16.mxu0 0
  %3550 = vmatpush1.bf16.msra.mxu0 0
  %3551 = vmatprep.subr.bf16.mxu0 0
  %3552 = vmatpush1.bf16.msra.mxu0 0
  %3553 = vmatprep.subr.bf16.mxu0 0
  %3554 = vmatpush1.bf16.msra.mxu0 0
  %3555 = vmatprep.subr.bf16.mxu0 0
  %3556 = vmatpush1.bf16.msra.mxu0 0
  %3557 = vmatprep.subr.bf16.mxu0 0
  %3558 = vmatpush1.bf16.msra.mxu0 0
  %3559 = vmatprep.subr.bf16.mxu0 0
  %3560 = vmatpush1.bf16.msra.mxu0 0
  %3561 = vmatprep.subr.bf16.mxu0 0
  %3562 = vmatpush1.bf16.msra.mxu0 0
  %3563 = vmatprep.subr.bf16.mxu0 0
  %3564 = vmatpush1.bf16.msra.mxu0 0
  %3565 = vmatprep.subr.bf16.mxu0 0
  %3566 = vmatpush1.bf16.msra.mxu0 0
  %3567 = vmatprep.mubr.bf16.mxu0 0
  %3568 = vmatmul.mubr.bf16.gmra.mrb[0].mxu0 %v3530
  %v3569 = vpop.f32.mrb[0].mxu0
  %v3570 = vadd.f32 0.0, %v3569
  %v3571 = vpop.f32.mrb[0].mxu0
  %v3572 = vpop.f32.mrb[0].mxu0
  %v3573 = vadd.f32 0.0, %v3572
  %v3574 = vpop.f32.mrb[0].mxu0
  %3575 = vdwg.mxu0
  %v3576 = vadd.f32 %v3405, %v3570
  %v3577 = vadd.f32 %v3406, %v3573
  %v3579 = vlaneseq
  %v3580 = vshrl.u32 %v3579, 7
  %v3581 = vsub.s32 0, %v3580
  %v3582 = vrot.slane %v2897, %v3581
  %v3584 = vadd.f32 %v3576, %v3582
  %v3585 = vadd.f32 %v3577, %v3582
  %v3586 = vadd.f32 %v2753, %v3584
  %v3587 = vadd.f32 %v2754, %v3585
  %v3588 = vsel %vm100, %v3586, 0.0
  %3589 = vadd.xlane.f32.xlu0 %v3588
  %v3590 = vpop.xlane.xlu0 %3589
  %v3591 = vsel %vm100, %v3587, 0.0
  %3592 = vadd.xlane.f32.xlu0 %v3591
  %v3593 = vpop.xlane.xlu0 %3592
  %v3594 = vmul.f32 %v3590, %v849
  %v3595 = vmul.f32 %v3593, %v849
  %v3596 = vsub.f32 %v3586, %v3594
  %v3597 = vsub.f32 %v3587, %v3595
  %v3598 = vmul.f32 %v3596, %v3596
  %v3599 = vmul.f32 %v3597, %v3597
  %v3600 = vsel %vm100, %v3598, 0.0
  %3601 = vadd.xlane.f32.xlu0 %v3600
  %v3602 = vpop.xlane.xlu0 %3601
  %v3603 = vsel %vm100, %v3599, 0.0
  %3604 = vadd.xlane.f32.xlu0 %v3603
  %v3605 = vpop.xlane.xlu0 %3604
  %v3606 = vmul.f32 %v3602, %v849
  %v3607 = vmul.f32 %v3605, %v849
  %v3608 = vadd.f32 %v3606, 1e-05
  %v3609 = vadd.f32 %v3607, 1e-05
  %v3610 = vrsqrt.pop %v3608
  %v3611 = vrsqrt.pop %v3609
  %v3612 = vmul.f32 %v3596, %v3610
  %v3613 = vmul.f32 %v3597, %v3611
  %v3614 = vlaneseq
  %v3615 = vshrl.u32 %v3614, 7
  %v3616 = vsub.s32 1, %v3615
  %v3617 = vrot.slane %v1947, %v3616
  %v3618 = vmul.f32 %v3612, %v3617
  %v3619 = vmul.f32 %v3613, %v3617
  %v3620 = vlaneseq
  %v3621 = vshrl.u32 %v3620, 7
  %v3622 = vsub.s32 1, %v3621
  %v3623 = vrot.slane %v1949, %v3622
  %v3624 = vadd.f32 %v3618, %v3623
  %v3625 = vadd.f32 %v3619, %v3623
  %s3626 = scalar_lea.vmem %s14, 16
  %v3627 = vld [vmem:[%s3626] sm:$0xf]
  %v3628 = vld [vmem:[%s3626 + $0x4] sm:$0xf]
  %v3629 = vld [vmem:[%s3626 + $0x8] sm:$0xf]
  %v3630 = vld [vmem:[%s3626 + $0xc] sm:$0xf]
  %s3631 = scalar_lea.vmem %s15, 1
  %v3632 = vld [vmem:[%s3631] sm:$0x1]
  %v3633 = vpack.c.bf16 %v3625, %v3624
  %v3635 = vlaneseq
  %v3636 = vshrl.u32 %v3635, 7
  %v3637 = vsub.s32 0, %v3636
  %v3638 = vrot.slane %v3632, %v3637
  %v3644 = vunpack.c.l.b16 %v3627
  %v3645 = vunpack.c.l.b16 %v3628
  %v3646 = vunpack.c.l.b16 %v3629
  %v3647 = vunpack.c.l.b16 %v3630
  %v3648 = vpack.c.b16 %v3645, %v3644
  %v3649 = vpack.c.b16 %v3647, %v3646
  %v3653 = vsel %vm100, %v3633, 0
  %3655 = vmatprep.subr.bf16.mxu0 0
  %3656 = vmatpush1.bf16.msra.mxu0 %v3648
  %3657 = vmatprep.subr.bf16.mxu0 0
  %3658 = vmatpush1.bf16.msra.mxu0 %v3649
  %3659 = vmatprep.subr.bf16.mxu0 0
  %3660 = vmatpush1.bf16.msra.mxu0 0
  %3661 = vmatprep.subr.bf16.mxu0 0
  %3662 = vmatpush1.bf16.msra.mxu0 0
  %3663 = vmatprep.subr.bf16.mxu0 0
  %3664 = vmatpush1.bf16.msra.mxu0 0
  %3665 = vmatprep.subr.bf16.mxu0 0
  %3666 = vmatpush1.bf16.msra.mxu0 0
  %3667 = vmatprep.subr.bf16.mxu0 0
  %3668 = vmatpush1.bf16.msra.mxu0 0
  %3669 = vmatprep.subr.bf16.mxu0 0
  %3670 = vmatpush1.bf16.msra.mxu0 0
  %3671 = vmatprep.subr.bf16.mxu0 0
  %3672 = vmatpush1.bf16.msra.mxu0 0
  %3673 = vmatprep.subr.bf16.mxu0 0
  %3674 = vmatpush1.bf16.msra.mxu0 0
  %3675 = vmatprep.subr.bf16.mxu0 0
  %3676 = vmatpush1.bf16.msra.mxu0 0
  %3677 = vmatprep.subr.bf16.mxu0 0
  %3678 = vmatpush1.bf16.msra.mxu0 0
  %3679 = vmatprep.subr.bf16.mxu0 0
  %3680 = vmatpush1.bf16.msra.mxu0 0
  %3681 = vmatprep.subr.bf16.mxu0 0
  %3682 = vmatpush1.bf16.msra.mxu0 0
  %3683 = vmatprep.subr.bf16.mxu0 0
  %3684 = vmatpush1.bf16.msra.mxu0 0
  %3685 = vmatprep.subr.bf16.mxu0 0
  %3686 = vmatpush1.bf16.msra.mxu0 0
  %3687 = vmatprep.mubr.bf16.mxu0 0
  %3688 = vmatmul.mubr.bf16.gmra.mrb[0].mxu0 %v3653
  %v3689 = vpop.f32.mrb[0].mxu0
  %v3690 = vadd.f32 %v3638, %v3689
  %v3691 = vpop.f32.mrb[0].mxu0
  %v3692 = vpop.f32.mrb[0].mxu0
  %v3693 = vadd.f32 %v3638, %v3692
  %v3694 = vpop.f32.mrb[0].mxu0
  %3695 = vdwg.mxu0
  %v3696 = vmax.f32 %v3690, 0.0
  %v3697 = vmax.f32 %v3693, 0.0
  %s3698 = scalar_lea.vmem %s16, 32
  %v3699 = vld [vmem:[%s3698] sm:$0xf]
  %v3700 = vld [vmem:[%s3698 + $0x4] sm:$0xf]
  %v3701 = vld [vmem:[%s3698 + $0x8] sm:$0xf]
  %v3702 = vld [vmem:[%s3698 + $0xc] sm:$0xf]
  %v3703 = vld [vmem:[%s3698 + $0x10] sm:$0xf]
  %v3704 = vld [vmem:[%s3698 + $0x14] sm:$0xf]
  %v3705 = vld [vmem:[%s3698 + $0x18] sm:$0xf]
  %v3706 = vld [vmem:[%s3698 + $0x1c] sm:$0xf]
  %s3707 = scalar_lea.vmem %s17, 1
  %v3708 = vld [vmem:[%s3707] sm:$0x1]
  %v3709 = vpack.c.bf16 %v3697, %v3696
  %v3711 = vlaneseq
  %v3712 = vshrl.u32 %v3711, 7
  %v3713 = vsub.s32 0, %v3712
  %v3714 = vrot.slane %v3708, %v3713
  %v3724 = vunpack.c.l.b16 %v3699
  %v3725 = vunpack.c.l.b16 %v3700
  %v3726 = vunpack.c.l.b16 %v3701
  %v3727 = vunpack.c.l.b16 %v3702
  %v3728 = vunpack.c.l.b16 %v3703
  %v3729 = vunpack.c.l.b16 %v3704
  %v3730 = vunpack.c.l.b16 %v3705
  %v3731 = vunpack.c.l.b16 %v3706
  %v3732 = vpack.c.b16 %v3725, %v3724
  %v3733 = vpack.c.b16 %v3727, %v3726
  %v3734 = vpack.c.b16 %v3729, %v3728
  %v3735 = vpack.c.b16 %v3731, %v3730
  %v3741 = vsel %vm1861, %v3709, 0
  %3743 = vmatprep.subr.bf16.mxu0 0
  %3744 = vmatpush1.bf16.msra.mxu0 %v3732
  %3745 = vmatprep.subr.bf16.mxu0 0
  %3746 = vmatpush1.bf16.msra.mxu0 %v3733
  %3747 = vmatprep.subr.bf16.mxu0 0
  %3748 = vmatpush1.bf16.msra.mxu0 %v3734
  %3749 = vmatprep.subr.bf16.mxu0 0
  %3750 = vmatpush1.bf16.msra.mxu0 %v3735
  %3751 = vmatprep.subr.bf16.mxu0 0
  %3752 = vmatpush1.bf16.msra.mxu0 0
  %3753 = vmatprep.subr.bf16.mxu0 0
  %3754 = vmatpush1.bf16.msra.mxu0 0
  %3755 = vmatprep.subr.bf16.mxu0 0
  %3756 = vmatpush1.bf16.msra.mxu0 0
  %3757 = vmatprep.subr.bf16.mxu0 0
  %3758 = vmatpush1.bf16.msra.mxu0 0
  %3759 = vmatprep.subr.bf16.mxu0 0
  %3760 = vmatpush1.bf16.msra.mxu0 0
  %3761 = vmatprep.subr.bf16.mxu0 0
  %3762 = vmatpush1.bf16.msra.mxu0 0
  %3763 = vmatprep.subr.bf16.mxu0 0
  %3764 = vmatpush1.bf16.msra.mxu0 0
  %3765 = vmatprep.subr.bf16.mxu0 0
  %3766 = vmatpush1.bf16.msra.mxu0 0
  %3767 = vmatprep.subr.bf16.mxu0 0
  %3768 = vmatpush1.bf16.msra.mxu0 0
  %3769 = vmatprep.subr.bf16.mxu0 0
  %3770 = vmatpush1.bf16.msra.mxu0 0
  %3771 = vmatprep.subr.bf16.mxu0 0
  %3772 = vmatpush1.bf16.msra.mxu0 0
  %3773 = vmatprep.subr.bf16.mxu0 0
  %3774 = vmatpush1.bf16.msra.mxu0 0
  %3775 = vmatprep.mubr.bf16.mxu0 0
  %3776 = vmatmul.mubr.bf16.gmra.mrb[0].mxu0 %v3741
  %v3777 = vpop.f32.mrb[0].mxu0
  %v3778 = vadd.f32 %v3714, %v3777
  %v3779 = vpop.f32.mrb[0].mxu0
  %v3780 = vpop.f32.mrb[0].mxu0
  %v3781 = vadd.f32 %v3714, %v3780
  %v3782 = vpop.f32.mrb[0].mxu0
  %3783 = vdwg.mxu0
  %v3784 = vadd.f32 %v3624, %v3778
  %v3785 = vadd.f32 %v3625, %v3781
  %v3786 = vsel %vm100, %v3784, 0.0
  %3787 = vadd.xlane.f32.xlu0 %v3786
  %v3788 = vpop.xlane.xlu0 %3787
  %v3789 = vsel %vm100, %v3785, 0.0
  %3790 = vadd.xlane.f32.xlu0 %v3789
  %v3791 = vpop.xlane.xlu0 %3790
  %v3792 = vmul.f32 %v3788, %v849
  %v3793 = vmul.f32 %v3791, %v849
  %v3794 = vsub.f32 %v3784, %v3792
  %v3795 = vsub.f32 %v3785, %v3793
  %v3796 = vmul.f32 %v3794, %v3794
  %v3797 = vmul.f32 %v3795, %v3795
  %v3798 = vsel %vm100, %v3796, 0.0
  %3799 = vadd.xlane.f32.xlu0 %v3798
  %v3800 = vpop.xlane.xlu0 %3799
  %v3801 = vsel %vm100, %v3797, 0.0
  %3802 = vadd.xlane.f32.xlu0 %v3801
  %v3803 = vpop.xlane.xlu0 %3802
  %v3804 = vmul.f32 %v3800, %v849
  %v3805 = vmul.f32 %v3803, %v849
  %v3806 = vadd.f32 %v3804, 1e-05
  %v3807 = vadd.f32 %v3805, 1e-05
  %v3808 = vrsqrt.pop %v3806
  %v3809 = vrsqrt.pop %v3807
  %v3810 = vmul.f32 %v3794, %v3808
  %v3811 = vmul.f32 %v3795, %v3809
  %v3812 = vlaneseq
  %v3813 = vshrl.u32 %v3812, 7
  %v3814 = vsub.s32 2, %v3813
  %v3815 = vrot.slane %v1947, %v3814
  %v3816 = vmul.f32 %v3810, %v3815
  %v3817 = vmul.f32 %v3811, %v3815
  %v3818 = vlaneseq
  %v3819 = vshrl.u32 %v3818, 7
  %v3820 = vsub.s32 2, %v3819
  %v3821 = vrot.slane %v1949, %v3820
  %v3822 = vadd.f32 %v3816, %v3821
  %v3823 = vadd.f32 %v3817, %v3821
  %3824 = vst.msk [vmem:[%s20] sm:$0xff] %vm100, %v3822
  %3825 = vst.msk [vmem:[%s20 + $0x8] sm:$0xff] %vm100, %v3823
  // Predicated region
  $region82: #{transformer_decoder.1} parent=0 // pred_check
    _
  $region83: #{transformer_decoder.1} parent=0 // pred_check_branch
    %3827 = sbr.rel (0) target = $region85
  $region84: #{transformer_decoder.1} parent=0 // pred_region
    _
  $region85: #{transformer_decoder.1} parent=0 // pred_fallthru
    _
  // Predicated region
  $region86: #{transformer_decoder.1} parent=0 // pred_check
    _
  $region87: #{transformer_decoder.1} parent=0 // pred_check_branch
    %3829 = sbr.rel (0) target = $region89
  $region88: #{transformer_decoder.1} parent=0 // pred_region
    _
  $region89: #{transformer_decoder.1} parent=0 // pred_fallthru
    _

</llo_original>
